<compile_context>
chip_gen: v7x
topology: tpu7x:2x2x1
jax: 0.10.0
libtpu: 0.0.40
codegen_flags: <defaults>
</compile_context>

<pallas_src>
import jax
import jax.numpy as jnp
import numpy as np
from jax.experimental import pallas as pl
from jax.experimental.pallas import tpu as pltpu


def _round_up(x, m):
    return (x + m - 1) // m * m


# ----------------------------------------------------------------------------
# Pallas kernels
# ----------------------------------------------------------------------------
def _stage1_kernel(p_ref, w_ref, b_ref, o_ref):
    """conv1 (1->32, 3x3, pad 1) + ReLU + 2x2 max-pool for one image.

    p_ref: (1, 256, 16)  4x4 input window (u*4+v) per pooled position (padded 16x16 grid)
    w_ref: (16, 128)     packed weights, lanes = (pool phase a*2+b)*32 + cout
    b_ref: (1, 128)      conv1 bias tiled over the 4 pool phases
    o_ref: (1, 256, 32)  pooled output, row = i*16 + j
    """
    y = jnp.dot(p_ref[0], w_ref[...], preferred_element_type=jnp.float32)  # (256, 128)
    y = jnp.maximum(y + b_ref[...], 0.0)
    # fused 2x2 max-pool = elementwise max over the 4 lane-groups of 32 channels
    o_ref[0] = jnp.maximum(jnp.maximum(y[:, 0:32], y[:, 32:64]),
                           jnp.maximum(y[:, 64:96], y[:, 96:128]))


def _stage2_kernel(s_ref, w_ref, b_ref, o_ref):
    """conv2 (32->64, 3x3, pad 1) + ReLU + 2x2 max-pool for one image.

    s_ref: (1, 9, 9, 128)  space-to-depth padded input, lanes = (pr*2+pc)*32 + cin
    w_ref: (4, 128, 256)   packed weights [shift g, phase*32+cin, (a*2+b)*64 + cout]
    b_ref: (1, 256)        conv2 bias tiled over the 4 pool phases
    o_ref: (1, 64, 64)     pooled output, row = i*8 + j (rows i==7 / j==7 are padding)
    """
    acc = jnp.zeros((64, 256), jnp.float32)
    # in-VMEM im2col: 4 shifted (8,8,128) slices, each a K=128 MXU dot, accumulated f32
    for g, (qr, qc) in enumerate(((0, 0), (0, 1), (1, 0), (1, 1))):
        piece = s_ref[0, qr:qr + 8, qc:qc + 8, :].reshape(64, 128)
        acc = acc + jnp.dot(piece, w_ref[g], preferred_element_type=jnp.float32)
    y = jnp.maximum(acc + b_ref[...], 0.0)
    # fused 2x2 max-pool over the 4 lane-groups of 64 channels
    o_ref[0] = jnp.maximum(jnp.maximum(y[:, 0:64], y[:, 64:128]),
                           jnp.maximum(y[:, 128:192], y[:, 192:256]))


def _fc_kernel(x_ref, w1_ref, b1_ref, w2_ref, b2_ref, o_ref):
    """fc1 + ReLU + fc2 fused; fc2 is zero-padded to 128 output lanes (lane-dense store)."""
    h = jnp.dot(x_ref[...], w1_ref[...], preferred_element_type=jnp.float32)
    h = jnp.maximum(h + b1_ref[...], 0.0)
    o_ref[...] = jnp.dot(h, w2_ref[...], preferred_element_type=jnp.float32) + b2_ref[...]


# ----------------------------------------------------------------------------
# One-time parameter packing (hoisted out of the forward pass)
# ----------------------------------------------------------------------------
def _pack_conv1(w_oihw):
    """(32,1,3,3) OIHW -> (16,128): row = window pos u*4+v, col = (a*2+b)*32 + cout."""
    w = jnp.transpose(w_oihw, (2, 3, 1, 0))[:, :, 0, :]      # (3,3,32) [dy,dx,cout]
    r = jnp.zeros((16, 128), jnp.float32)
    for a in range(2):
        for b in range(2):
            o0 = (a * 2 + b) * 32
            for dy in range(3):
                for dx in range(3):
                    u, v = a + dy, b + dx
                    r = r.at[u * 4 + v, o0:o0 + 32].set(w[dy, dx])
    return r


def _pack_conv2(w_oihw):
    """(64,32,3,3) OIHW -> (4,128,256): [g=qr*2+qc, (pr*2+pc)*32+cin, (a*2+b)*64+cout]."""
    w = jnp.transpose(w_oihw, (2, 3, 1, 0))                  # (3,3,32,64) [dy,dx,cin,cout]
    r = jnp.zeros((4, 128, 256), jnp.float32)
    for a in range(2):
        for b in range(2):
            o0 = (a * 2 + b) * 64
            for dy in range(3):
                for dx in range(3):
                    u, v = a + dy, b + dx                    # window position 0..3
                    g = (u // 2) * 2 + (v // 2)              # space-to-depth shift
                    p0 = ((u % 2) * 2 + (v % 2)) * 32        # phase * cin
                    r = r.at[g, p0:p0 + 32, o0:o0 + 64].set(w[dy, dx])
    return r


def _pack_fc1(fc1_w):
    """(128,3136) acting on torch view(-1,64*7*7) order -> (4096,128) acting on the
    stage-2 flatten order (i*8+j)*64 + c; rows for the padded i==7 / j==7 are zero."""
    w = fc1_w.reshape(128, 64, 7, 7)                         # [out, c, i, j]
    w = jnp.transpose(w, (2, 3, 1, 0))                       # [i, j, c, out]
    w = jnp.pad(w, ((0, 1), (0, 1), (0, 0), (0, 0)))         # (8, 8, 64, 128)
    return w.reshape(64 * 64, 128)


def prepare_params(params):
    """Pack torch-layout parameters once; the forward pass does no weight reshapes."""
    return {
        "c1_w": _pack_conv1(params["conv1_w"]),
        "c1_b": jnp.tile(params["conv1_b"], 4).reshape(1, 128),
        "c2_w": _pack_conv2(params["conv2_w"]),
        "c2_b": jnp.tile(params["conv2_b"], 4).reshape(1, 256),
        "fc1_w": _pack_fc1(params["fc1_w"]),
        "fc1_b": params["fc1_b"].reshape(1, 128),
        "fc2_w": jnp.zeros((128, 128), jnp.float32).at[:, :10].set(params["fc2_w"].T),
        "fc2_b": jnp.zeros((1, 128), jnp.float32).at[0, :10].set(params["fc2_b"]),
    }


# ----------------------------------------------------------------------------
# Forward pass (matches SimpleCNN.forward)
# ----------------------------------------------------------------------------
def simple_cnn_forward(x_nchw, pp):
    N = x_nchw.shape[0]
    x = x_nchw[:, 0, :, :].astype(jnp.float32)                       # (N, 28, 28), Cin=1

    # --- stage 1: conv1 + relu + pool ---------------------------------------
    # build the tiny 4x4-window-per-pooled-pixel tensor (16 KB/image) in XLA
    xp = jnp.pad(x, ((0, 0), (1, 5), (1, 5)))                        # (N, 34, 34)
    win = [xp[:, u:u + 32:2, v:v + 32:2] for u in range(4) for v in range(4)]
    patches1 = jnp.stack(win, axis=-1).reshape(N, 256, 16)
    y1 = pl.pallas_call(
        _stage1_kernel,
        out_shape=jax.ShapeDtypeStruct((N, 256, 32), jnp.float32),
        grid=(N,),
        in_specs=[
            pl.BlockSpec((1, 256, 16), lambda n: (n, 0, 0)),
            pl.BlockSpec((16, 128), lambda n: (0, 0)),
            pl.BlockSpec((1, 128), lambda n: (0, 0)),
        ],
        out_specs=pl.BlockSpec((1, 256, 32), lambda n: (n, 0, 0)),
        compiler_params=pltpu.CompilerParams(dimension_semantics=("parallel",)),
    )(patches1, pp["c1_w"], pp["c1_b"])

    # --- stage 2: conv2 + relu + pool (im2col happens inside the kernel) ----
    # valid 14x14 pooled grid -> pad for conv2 -> 2x2 space-to-depth (128 lanes)
    h1 = y1.reshape(N, 16, 16, 32)[:, :14, :14, :]
    h1 = jnp.pad(h1, ((0, 0), (1, 3), (1, 3), (0, 0)))               # (N, 18, 18, 32)
    s2d = h1.reshape(N, 9, 2, 9, 2, 32).transpose(0, 1, 3, 2, 4, 5).reshape(N, 9, 9, 128)
    y2 = pl.pallas_call(
        _stage2_kernel,
        out_shape=jax.ShapeDtypeStruct((N, 64, 64), jnp.float32),
        grid=(N,),
        in_specs=[
            pl.BlockSpec((1, 9, 9, 128), lambda n: (n, 0, 0, 0)),
            pl.BlockSpec((4, 128, 256), lambda n: (0, 0, 0)),
            pl.BlockSpec((1, 256), lambda n: (0, 0)),
        ],
        out_specs=pl.BlockSpec((1, 64, 64), lambda n: (n, 0, 0)),
        compiler_params=pltpu.CompilerParams(dimension_semantics=("parallel",)),
    )(s2d, pp["c2_w"], pp["c2_b"])

    # --- stage 3: fc1 + relu + fc2 ------------------------------------------
    # the torch view(-1, 64*7*7) permutation is already folded into pp["fc1_w"]
    xf = y2.reshape(N, 64 * 64)
    tm = 256 if N >= 256 else _round_up(N, 8)
    Np = _round_up(N, tm)
    if Np != N:
        xf = jnp.pad(xf, ((0, Np - N), (0, 0)))
    out = pl.pallas_call(
        _fc_kernel,
        out_shape=jax.ShapeDtypeStruct((Np, 128), jnp.float32),
        grid=(Np // tm,),
        in_specs=[
            pl.BlockSpec((tm, 64 * 64), lambda m: (m, 0)),
            pl.BlockSpec((64 * 64, 128), lambda m: (0, 0)),
            pl.BlockSpec((1, 128), lambda m: (0, 0)),
            pl.BlockSpec((128, 128), lambda m: (0, 0)),
            pl.BlockSpec((1, 128), lambda m: (0, 0)),
        ],
        out_specs=pl.BlockSpec((tm, 128), lambda m: (m, 0)),
        compiler_params=pltpu.CompilerParams(dimension_semantics=("parallel",)),
    )(xf, pp["fc1_w"], pp["fc1_b"], pp["fc2_w"], pp["fc2_b"])
    return out[:N, :10]


# ----------------------------------------------------------------------------
# Reference + synthetic params + test harness
# ----------------------------------------------------------------------------
def _pool2_nchw(y):
    n, c, h, w = y.shape
    return y.reshape(n, c, h // 2, 2, w // 2, 2).max(axis=(3, 5))


def reference_forward(x, params):
    dn = ("NCHW", "OIHW", "NCHW")
    y = jax.lax.conv_general_dilated(x, params["conv1_w"], (1, 1), ((1, 1), (1, 1)),
                                     dimension_numbers=dn)
    y = jax.nn.relu(y + params["conv1_b"][None, :, None, None])
    y = _pool2_nchw(y)
    y = jax.lax.conv_general_dilated(y, params["conv2_w"], (1, 1), ((1, 1), (1, 1)),
                                     dimension_numbers=dn)
    y = jax.nn.relu(y + params["conv2_b"][None, :, None, None])
    y = _pool2_nchw(y)
    y = y.reshape(y.shape[0], -1)                      # torch view(-1, 64*7*7) order
    y = jax.nn.relu(y @ params["fc1_w"].T + params["fc1_b"])
    return y @ params["fc2_w"].T + params["fc2_b"]


def init_params(key):
    """Deterministic synthetic parameters with the shapes from SimpleCNN.__init__."""
    ks = jax.random.split(key, 8)

    def u(k, shape, fan_in):
        bound = 1.0 / jnp.sqrt(fan_in)
        return jax.random.uniform(k, shape, jnp.float32, -bound, bound)

    return {
        "conv1_w": u(ks[0], (32, 1, 3, 3), 1 * 3 * 3),
        "conv1_b": u(ks[1], (32,), 1 * 3 * 3),
        "conv2_w": u(ks[2], (64, 32, 3, 3), 32 * 3 * 3),
        "conv2_b": u(ks[3], (64,), 32 * 3 * 3),
        "fc1_w": u(ks[4], (128, 64 * 7 * 7), 64 * 7 * 7),
        "fc1_b": u(ks[5], (128,), 64 * 7 * 7),
        "fc2_w": u(ks[6], (10, 128), 128),
        "fc2_b": u(ks[7], (10,), 128),
    }


if __name__ == "__main__":
    key = jax.random.PRNGKey(0)
    k_x, k_p = jax.random.split(key)
    # batch=2, 1 channel, 28x28 (required by the 64*7*7 fc1 input size)
    x = jax.random.normal(k_x, (2, 1, 28, 28), dtype=jnp.float32)
    params = init_params(k_p)
    packed = prepare_params(params)   # one-time weight packing (not in the hot path)

    out = jax.jit(simple_cnn_forward)(x, packed)
    out = jax.block_until_ready(out)
    assert out.shape == (2, 10), out.shape

    ref = jax.block_until_ready(reference_forward(x, params))
    np.testing.assert_allclose(np.asarray(out), np.asarray(ref), rtol=2e-2, atol=2e-2)
    print("KERNEL_OK")
</pallas_src>

<mosaic_0001>
module attributes {stable_mosaic.version = 11 : i64} {
  func.func @_stage1_kernel(%arg0: i32, %arg1: memref<1x256x16xf32, #tpu.memory_space<vmem>>, %arg2: memref<16x128xf32, #tpu.memory_space<vmem>>, %arg3: memref<1x128xf32, #tpu.memory_space<vmem>>, %arg4: memref<1x256x32xf32, #tpu.memory_space<vmem>>) attributes {dimension_semantics = [#tpu.dimension_semantics<parallel>], iteration_bounds = array<i64: 2>, scalar_prefetch = 0 : i64, scratch_operands = 0 : i64, tpu.core_type = #tpu.core_type<tc>, window_params = [{transform_indices = @transform_0, window_bounds = array<i64: 1, 256, 16>}, {pipeline_mode = #tpu.pipeline_mode<synchronous>, transform_indices = @transform_1, window_bounds = array<i64: 16, 128>}, {pipeline_mode = #tpu.pipeline_mode<synchronous>, transform_indices = @transform_2, window_bounds = array<i64: 1, 128>}, {transform_indices = @transform_3, window_bounds = array<i64: 1, 256, 32>}]} {
    %c0 = arith.constant 0 : index
    %c0_0 = arith.constant 0 : index
    %c0_1 = arith.constant 0 : index
    %0 = vector.load %arg1[%c0, %c0_0, %c0_1] : memref<1x256x16xf32, #tpu.memory_space<vmem>>, vector<1x256x16xf32>
    %1 = vector.shape_cast %0 : vector<1x256x16xf32> to vector<256x16xf32>
    %c0_2 = arith.constant 0 : index
    %c0_3 = arith.constant 0 : index
    %2 = vector.load %arg2[%c0_2, %c0_3] : memref<16x128xf32, #tpu.memory_space<vmem>>, vector<16x128xf32>
    %cst = arith.constant dense<0.000000e+00> : vector<256x128xf32>
    %3 = tpu.matmul %1, %2, %cst {dimension_numbers = #tpu.dot_dimension_numbers<[1], [0], [0], [1], [0, 0, 1, 1], [], []>} : vector<256x16xf32>, vector<16x128xf32>, vector<256x128xf32> -> vector<256x128xf32>
    %c0_4 = arith.constant 0 : index
    %c0_5 = arith.constant 0 : index
    %4 = vector.load %arg3[%c0_4, %c0_5] : memref<1x128xf32, #tpu.memory_space<vmem>>, vector<1x128xf32>
    %5 = vector.broadcast %4 : vector<1x128xf32> to vector<256x128xf32>
    %6 = arith.addf %3, %5 : vector<256x128xf32>
    %cst_6 = arith.constant 0.000000e+00 : f32
    %7 = vector.broadcast %cst_6 : f32 to vector<256x128xf32>
    %8 = arith.maximumf %6, %7 : vector<256x128xf32>
    %9 = vector.extract_strided_slice %8 {offsets = [0, 0], sizes = [256, 32], strides = [1, 1]} : vector<256x128xf32> to vector<256x32xf32>
    %10 = vector.extract_strided_slice %8 {offsets = [0, 32], sizes = [256, 32], strides = [1, 1]} : vector<256x128xf32> to vector<256x32xf32>
    %11 = arith.maximumf %9, %10 : vector<256x32xf32>
    %12 = vector.extract_strided_slice %8 {offsets = [0, 64], sizes = [256, 32], strides = [1, 1]} : vector<256x128xf32> to vector<256x32xf32>
    %13 = vector.extract_strided_slice %8 {offsets = [0, 96], sizes = [256, 32], strides = [1, 1]} : vector<256x128xf32> to vector<256x32xf32>
    %14 = arith.maximumf %12, %13 : vector<256x32xf32>
    %15 = arith.maximumf %11, %14 : vector<256x32xf32>
    %c0_7 = arith.constant 0 : index
    %c0_8 = arith.constant 0 : index
    %c0_9 = arith.constant 0 : index
    %16 = vector.load %arg4[%c0_7, %c0_8, %c0_9] : memref<1x256x32xf32, #tpu.memory_space<vmem>>, vector<1x256x32xf32>
    %17 = vector.shape_cast %16 : vector<1x256x32xf32> to vector<256x32xf32>
    %18 = vector.shape_cast %15 : vector<256x32xf32> to vector<1x256x32xf32>
    tpu.vector_store %arg4[%c0_7, %c0_8, %c0_9], %18 {strides = array<i32>} : memref<1x256x32xf32, #tpu.memory_space<vmem>>, vector<1x256x32xf32>,
    return
  }
  func.func @transform_0(%arg0: i32) -> (i32, i32, i32) {
    %c0_i32 = arith.constant 0 : i32
    %c0_i32_0 = arith.constant 0 : i32
    %c0_i32_1 = arith.constant 0 : i32
    return %arg0, %c0_i32, %c0_i32_0 : i32, i32, i32
  }
  func.func @transform_1(%arg0: i32) -> (i32, i32) {
    %c0_i32 = arith.constant 0 : i32
    %c0_i32_0 = arith.constant 0 : i32
    %c0_i32_1 = arith.constant 0 : i32
    return %c0_i32, %c0_i32_0 : i32, i32
  }
  func.func @transform_2(%arg0: i32) -> (i32, i32) {
    %c0_i32 = arith.constant 0 : i32
    %c0_i32_0 = arith.constant 0 : i32
    %c0_i32_1 = arith.constant 0 : i32
    return %c0_i32, %c0_i32_0 : i32, i32
  }
  func.func @transform_3(%arg0: i32) -> (i32, i32, i32) {
    %c0_i32 = arith.constant 0 : i32
    %c0_i32_0 = arith.constant 0 : i32
    %c0_i32_1 = arith.constant 0 : i32
    return %arg0, %c0_i32, %c0_i32_0 : i32, i32, i32
  }
}

module attributes {stable_mosaic.version = 11 : i64} {
  func.func @_stage2_kernel(%arg0: i32, %arg1: memref<1x9x9x128xf32, #tpu.memory_space<vmem>>, %arg2: memref<4x128x256xf32, #tpu.memory_space<vmem>>, %arg3: memref<1x256xf32, #tpu.memory_space<vmem>>, %arg4: memref<1x64x64xf32, #tpu.memory_space<vmem>>) attributes {dimension_semantics = [#tpu.dimension_semantics<parallel>], iteration_bounds = array<i64: 2>, scalar_prefetch = 0 : i64, scratch_operands = 0 : i64, tpu.core_type = #tpu.core_type<tc>, window_params = [{transform_indices = @transform_0, window_bounds = array<i64: 1, 9, 9, 128>}, {pipeline_mode = #tpu.pipeline_mode<synchronous>, transform_indices = @transform_1, window_bounds = array<i64: 4, 128, 256>}, {pipeline_mode = #tpu.pipeline_mode<synchronous>, transform_indices = @transform_2, window_bounds = array<i64: 1, 256>}, {transform_indices = @transform_3, window_bounds = array<i64: 1, 64, 64>}]} {
    %cst = arith.constant 0.000000e+00 : f32
    %0 = vector.broadcast %cst : f32 to vector<64x256xf32>
    %c0 = arith.constant 0 : index
    %c0_0 = arith.constant 0 : index
    %c0_1 = arith.constant 0 : index
    %c0_2 = arith.constant 0 : index
    %1 = vector.load %arg1[%c0, %c0_0, %c0_1, %c0_2] : memref<1x9x9x128xf32, #tpu.memory_space<vmem>>, vector<1x8x8x128xf32>
    %2 = vector.shape_cast %1 : vector<1x8x8x128xf32> to vector<8x8x128xf32>
    %3 = vector.shape_cast %2 : vector<8x8x128xf32> to vector<64x128xf32>
    %c0_3 = arith.constant 0 : index
    %c0_4 = arith.constant 0 : index
    %c0_5 = arith.constant 0 : index
    %4 = vector.load %arg2[%c0_3, %c0_4, %c0_5] : memref<4x128x256xf32, #tpu.memory_space<vmem>>, vector<1x128x256xf32>
    %5 = vector.shape_cast %4 : vector<1x128x256xf32> to vector<128x256xf32>
    %cst_6 = arith.constant dense<0.000000e+00> : vector<64x256xf32>
    %6 = tpu.matmul %3, %5, %cst_6 {dimension_numbers = #tpu.dot_dimension_numbers<[1], [0], [0], [1], [0, 0, 1, 1], [], []>} : vector<64x128xf32>, vector<128x256xf32>, vector<64x256xf32> -> vector<64x256xf32>
    %7 = arith.addf %0, %6 : vector<64x256xf32>
    %c0_7 = arith.constant 0 : index
    %c0_8 = arith.constant 0 : index
    %c1 = arith.constant 1 : index
    %c0_9 = arith.constant 0 : index
    %8 = vector.load %arg1[%c0_7, %c0_8, %c1, %c0_9] : memref<1x9x9x128xf32, #tpu.memory_space<vmem>>, vector<1x8x8x128xf32>
    %9 = vector.shape_cast %8 : vector<1x8x8x128xf32> to vector<8x8x128xf32>
    %10 = vector.shape_cast %9 : vector<8x8x128xf32> to vector<64x128xf32>
    %c1_10 = arith.constant 1 : index
    %c0_11 = arith.constant 0 : index
    %c0_12 = arith.constant 0 : index
    %11 = vector.load %arg2[%c1_10, %c0_11, %c0_12] : memref<4x128x256xf32, #tpu.memory_space<vmem>>, vector<1x128x256xf32>
    %12 = vector.shape_cast %11 : vector<1x128x256xf32> to vector<128x256xf32>
    %cst_13 = arith.constant dense<0.000000e+00> : vector<64x256xf32>
    %13 = tpu.matmul %10, %12, %cst_13 {dimension_numbers = #tpu.dot_dimension_numbers<[1], [0], [0], [1], [0, 0, 1, 1], [], []>} : vector<64x128xf32>, vector<128x256xf32>, vector<64x256xf32> -> vector<64x256xf32>
    %14 = arith.addf %7, %13 : vector<64x256xf32>
    %c0_14 = arith.constant 0 : index
    %c1_15 = arith.constant 1 : index
    %c0_16 = arith.constant 0 : index
    %c0_17 = arith.constant 0 : index
    %15 = vector.load %arg1[%c0_14, %c1_15, %c0_16, %c0_17] : memref<1x9x9x128xf32, #tpu.memory_space<vmem>>, vector<1x8x8x128xf32>
    %16 = vector.shape_cast %15 : vector<1x8x8x128xf32> to vector<8x8x128xf32>
    %17 = vector.shape_cast %16 : vector<8x8x128xf32> to vector<64x128xf32>
    %c2 = arith.constant 2 : index
    %c0_18 = arith.constant 0 : index
    %c0_19 = arith.constant 0 : index
    %18 = vector.load %arg2[%c2, %c0_18, %c0_19] : memref<4x128x256xf32, #tpu.memory_space<vmem>>, vector<1x128x256xf32>
    %19 = vector.shape_cast %18 : vector<1x128x256xf32> to vector<128x256xf32>
    %cst_20 = arith.constant dense<0.000000e+00> : vector<64x256xf32>
    %20 = tpu.matmul %17, %19, %cst_20 {dimension_numbers = #tpu.dot_dimension_numbers<[1], [0], [0], [1], [0, 0, 1, 1], [], []>} : vector<64x128xf32>, vector<128x256xf32>, vector<64x256xf32> -> vector<64x256xf32>
    %21 = arith.addf %14, %20 : vector<64x256xf32>
    %c0_21 = arith.constant 0 : index
    %c1_22 = arith.constant 1 : index
    %c1_23 = arith.constant 1 : index
    %c0_24 = arith.constant 0 : index
    %22 = vector.load %arg1[%c0_21, %c1_22, %c1_23, %c0_24] : memref<1x9x9x128xf32, #tpu.memory_space<vmem>>, vector<1x8x8x128xf32>
    %23 = vector.shape_cast %22 : vector<1x8x8x128xf32> to vector<8x8x128xf32>
    %24 = vector.shape_cast %23 : vector<8x8x128xf32> to vector<64x128xf32>
    %c3 = arith.constant 3 : index
    %c0_25 = arith.constant 0 : index
    %c0_26 = arith.constant 0 : index
    %25 = vector.load %arg2[%c3, %c0_25, %c0_26] : memref<4x128x256xf32, #tpu.memory_space<vmem>>, vector<1x128x256xf32>
    %26 = vector.shape_cast %25 : vector<1x128x256xf32> to vector<128x256xf32>
    %cst_27 = arith.constant dense<0.000000e+00> : vector<64x256xf32>
    %27 = tpu.matmul %24, %26, %cst_27 {dimension_numbers = #tpu.dot_dimension_numbers<[1], [0], [0], [1], [0, 0, 1, 1], [], []>} : vector<64x128xf32>, vector<128x256xf32>, vector<64x256xf32> -> vector<64x256xf32>
    %28 = arith.addf %21, %27 : vector<64x256xf32>
    %c0_28 = arith.constant 0 : index
    %c0_29 = arith.constant 0 : index
    %29 = vector.load %arg3[%c0_28, %c0_29] : memref<1x256xf32, #tpu.memory_space<vmem>>, vector<1x256xf32>
    %30 = vector.broadcast %29 : vector<1x256xf32> to vector<64x256xf32>
    %31 = arith.addf %28, %30 : vector<64x256xf32>
    %cst_30 = arith.constant 0.000000e+00 : f32
    %32 = vector.broadcast %cst_30 : f32 to vector<64x256xf32>
    %33 = arith.maximumf %31, %32 : vector<64x256xf32>
    %34 = vector.extract_strided_slice %33 {offsets = [0, 0], sizes = [64, 64], strides = [1, 1]} : vector<64x256xf32> to vector<64x64xf32>
    %35 = vector.extract_strided_slice %33 {offsets = [0, 64], sizes = [64, 64], strides = [1, 1]} : vector<64x256xf32> to vector<64x64xf32>
    %36 = arith.maximumf %34, %35 : vector<64x64xf32>
    %37 = vector.extract_strided_slice %33 {offsets = [0, 128], sizes = [64, 64], strides = [1, 1]} : vector<64x256xf32> to vector<64x64xf32>
    %38 = vector.extract_strided_slice %33 {offsets = [0, 192], sizes = [64, 64], strides = [1, 1]} : vector<64x256xf32> to vector<64x64xf32>
    %39 = arith.maximumf %37, %38 : vector<64x64xf32>
    %40 = arith.maximumf %36, %39 : vector<64x64xf32>
    %c0_31 = arith.constant 0 : index
    %c0_32 = arith.constant 0 : index
    %c0_33 = arith.constant 0 : index
    %41 = vector.load %arg4[%c0_31, %c0_32, %c0_33] : memref<1x64x64xf32, #tpu.memory_space<vmem>>, vector<1x64x64xf32>
    %42 = vector.shape_cast %41 : vector<1x64x64xf32> to vector<64x64xf32>
    %43 = vector.shape_cast %40 : vector<64x64xf32> to vector<1x64x64xf32>
    tpu.vector_store %arg4[%c0_31, %c0_32, %c0_33], %43 {strides = array<i32>} : memref<1x64x64xf32, #tpu.memory_space<vmem>>, vector<1x64x64xf32>,
    return
  }
  func.func @transform_0(%arg0: i32) -> (i32, i32, i32, i32) {
    %c0_i32 = arith.constant 0 : i32
    %c0_i32_0 = arith.constant 0 : i32
    %c0_i32_1 = arith.constant 0 : i32
    %c0_i32_2 = arith.constant 0 : i32
    return %arg0, %c0_i32, %c0_i32_0, %c0_i32_1 : i32, i32, i32, i32
  }
  func.func @transform_1(%arg0: i32) -> (i32, i32, i32) {
    %c0_i32 = arith.constant 0 : i32
    %c0_i32_0 = arith.constant 0 : i32
    %c0_i32_1 = arith.constant 0 : i32
    %c0_i32_2 = arith.constant 0 : i32
    return %c0_i32, %c0_i32_0, %c0_i32_1 : i32, i32, i32
  }
  func.func @transform_2(%arg0: i32) -> (i32, i32) {
    %c0_i32 = arith.constant 0 : i32
    %c0_i32_0 = arith.constant 0 : i32
    %c0_i32_1 = arith.constant 0 : i32
    return %c0_i32, %c0_i32_0 : i32, i32
  }
  func.func @transform_3(%arg0: i32) -> (i32, i32, i32) {
    %c0_i32 = arith.constant 0 : i32
    %c0_i32_0 = arith.constant 0 : i32
    %c0_i32_1 = arith.constant 0 : i32
    return %arg0, %c0_i32, %c0_i32_0 : i32, i32, i32
  }
}

module attributes {stable_mosaic.version = 11 : i64} {
  func.func @_fc_kernel(%arg0: i32, %arg1: memref<8x4096xf32, #tpu.memory_space<vmem>>, %arg2: memref<4096x128xf32, #tpu.memory_space<vmem>>, %arg3: memref<1x128xf32, #tpu.memory_space<vmem>>, %arg4: memref<128x128xf32, #tpu.memory_space<vmem>>, %arg5: memref<1x128xf32, #tpu.memory_space<vmem>>, %arg6: memref<8x128xf32, #tpu.memory_space<vmem>>) attributes {dimension_semantics = [#tpu.dimension_semantics<parallel>], iteration_bounds = array<i64: 1>, scalar_prefetch = 0 : i64, scratch_operands = 0 : i64, tpu.core_type = #tpu.core_type<tc>, window_params = [{transform_indices = @transform_0, window_bounds = array<i64: 8, 4096>}, {pipeline_mode = #tpu.pipeline_mode<synchronous>, transform_indices = @transform_1, window_bounds = array<i64: 4096, 128>}, {pipeline_mode = #tpu.pipeline_mode<synchronous>, transform_indices = @transform_2, window_bounds = array<i64: 1, 128>}, {pipeline_mode = #tpu.pipeline_mode<synchronous>, transform_indices = @transform_3, window_bounds = array<i64: 128, 128>}, {pipeline_mode = #tpu.pipeline_mode<synchronous>, transform_indices = @transform_4, window_bounds = array<i64: 1, 128>}, {transform_indices = @transform_5, window_bounds = array<i64: 8, 128>}]} {
    %c0 = arith.constant 0 : index
    %c0_0 = arith.constant 0 : index
    %0 = vector.load %arg1[%c0, %c0_0] : memref<8x4096xf32, #tpu.memory_space<vmem>>, vector<8x4096xf32>
    %c0_1 = arith.constant 0 : index
    %c0_2 = arith.constant 0 : index
    %1 = vector.load %arg2[%c0_1, %c0_2] : memref<4096x128xf32, #tpu.memory_space<vmem>>, vector<4096x128xf32>
    %cst = arith.constant dense<0.000000e+00> : vector<8x128xf32>
    %2 = tpu.matmul %0, %1, %cst {dimension_numbers = #tpu.dot_dimension_numbers<[1], [0], [0], [1], [0, 0, 1, 1], [], []>} : vector<8x4096xf32>, vector<4096x128xf32>, vector<8x128xf32> -> vector<8x128xf32>
    %c0_3 = arith.constant 0 : index
    %c0_4 = arith.constant 0 : index
    %3 = vector.load %arg3[%c0_3, %c0_4] : memref<1x128xf32, #tpu.memory_space<vmem>>, vector<1x128xf32>
    %4 = vector.broadcast %3 : vector<1x128xf32> to vector<8x128xf32>
    %5 = arith.addf %2, %4 : vector<8x128xf32>
    %cst_5 = arith.constant 0.000000e+00 : f32
    %6 = vector.broadcast %cst_5 : f32 to vector<8x128xf32>
    %7 = arith.maximumf %5, %6 : vector<8x128xf32>
    %c0_6 = arith.constant 0 : index
    %c0_7 = arith.constant 0 : index
    %8 = vector.load %arg4[%c0_6, %c0_7] : memref<128x128xf32, #tpu.memory_space<vmem>>, vector<128x128xf32>
    %cst_8 = arith.constant dense<0.000000e+00> : vector<8x128xf32>
    %9 = tpu.matmul %7, %8, %cst_8 {dimension_numbers = #tpu.dot_dimension_numbers<[1], [0], [0], [1], [0, 0, 1, 1], [], []>} : vector<8x128xf32>, vector<128x128xf32>, vector<8x128xf32> -> vector<8x128xf32>
    %c0_9 = arith.constant 0 : index
    %c0_10 = arith.constant 0 : index
    %10 = vector.load %arg5[%c0_9, %c0_10] : memref<1x128xf32, #tpu.memory_space<vmem>>, vector<1x128xf32>
    %11 = vector.broadcast %10 : vector<1x128xf32> to vector<8x128xf32>
    %12 = arith.addf %9, %11 : vector<8x128xf32>
    %c0_11 = arith.constant 0 : index
    %c0_12 = arith.constant 0 : index
    %13 = vector.load %arg6[%c0_11, %c0_12] : memref<8x128xf32, #tpu.memory_space<vmem>>, vector<8x128xf32>
    tpu.vector_store %arg6[%c0_11, %c0_12], %12 {strides = array<i32>} : memref<8x128xf32, #tpu.memory_space<vmem>>, vector<8x128xf32>,
    return
  }
  func.func @transform_0(%arg0: i32) -> (i32, i32) {
    %c0_i32 = arith.constant 0 : i32
    %c0_i32_0 = arith.constant 0 : i32
    return %arg0, %c0_i32 : i32, i32
  }
  func.func @transform_1(%arg0: i32) -> (i32, i32) {
    %c0_i32 = arith.constant 0 : i32
    %c0_i32_0 = arith.constant 0 : i32
    %c0_i32_1 = arith.constant 0 : i32
    return %c0_i32, %c0_i32_0 : i32, i32
  }
  func.func @transform_2(%arg0: i32) -> (i32, i32) {
    %c0_i32 = arith.constant 0 : i32
    %c0_i32_0 = arith.constant 0 : i32
    %c0_i32_1 = arith.constant 0 : i32
    return %c0_i32, %c0_i32_0 : i32, i32
  }
  func.func @transform_3(%arg0: i32) -> (i32, i32) {
    %c0_i32 = arith.constant 0 : i32
    %c0_i32_0 = arith.constant 0 : i32
    %c0_i32_1 = arith.constant 0 : i32
    return %c0_i32, %c0_i32_0 : i32, i32
  }
  func.func @transform_4(%arg0: i32) -> (i32, i32) {
    %c0_i32 = arith.constant 0 : i32
    %c0_i32_0 = arith.constant 0 : i32
    %c0_i32_1 = arith.constant 0 : i32
    return %c0_i32, %c0_i32_0 : i32, i32
  }
  func.func @transform_5(%arg0: i32) -> (i32, i32) {
    %c0_i32 = arith.constant 0 : i32
    %c0_i32_0 = arith.constant 0 : i32
    return %arg0, %c0_i32 : i32, i32
  }
}

</mosaic_0001>

<llo_original>
// kernel: simple_cnn_forward.3
$region0: #{simple_cnn_forward.3}
  #allocation0 [shape = 'u32[]', space=smem, size = 0x4, offset = 0x4, fixed_abs, tag = 'smem constant byte address 0x4 - core index']
  #allocation1 [shape = 'u32[144,128]{1,0:T(1,128)}', space=vmem, size = 0x12000, scoped, tag = 'internal scratch']
  %s0 = inlined_call_operand.vmem [shape: f32[2,256,16], index: 0, kind: input, shape index: {}]
  %s1 = inlined_call_operand.vmem [shape: f32[16,128], index: 1, kind: input, shape index: {}]
  %s2 = inlined_call_operand.vmem [shape: f32[1,128], index: 2, kind: input, shape index: {}]
  %s3 = inlined_call_operand.vmem [shape: f32[2,256,32], index: 3, kind: output, shape index: {}]
  %s4 = sld [smem:[#allocation0]]
  $region45: #{simple_cnn_forward.3} parent=0
    _
  %s6 = ssub.s32 1, %s4
  %s7 = scalar_select 0, %s6, %s4
  loop: start=0, step=1, limit=4
  $region2: #{simple_cnn_forward.3} parent=0 // loop_pre_header
    _
  $region3: #{simple_cnn_forward.3} parent=0 // loop_header
    %s9 = sphi 0, %s13
    %p10 = scmp.ge.s32.totalorder %s9, 4
    %s19 = sphi 0, %s21
    %s22 = sphi 0, %s19
    %s23 = sphi 0, %s22
    %s39 = sphi 0, %s23
    %s43 = sphi 0, %s43
    %s45 = sphi 0, %s43
    %s46 = sphi 0, %s45
    %s60 = sphi 0, %s46
    %s64 = sphi 0, %s64
    %s66 = sphi 0, %s64
    %s67 = sphi 0, %s66
    %s81 = sphi 0, %s67
    %s87 = sphi 0, %s89
    %s90 = sphi 0, %s87
    %s91 = sphi 0, %s90
    %s107 = sphi 0, %s91
  $region4: #{simple_cnn_forward.3} parent=0 // loop_header_branch
    %12 = sbr.rel (%p10) target = $region8
  $region5: #{simple_cnn_forward.3} parent=0 // loop_body
    %s14 = ssub.s32 %s9, 1
    %s15 = ssub.s32 %s9, 2
    %s16 = sadd.s32 %s9, 1
    %s17 = ssub.s32 %s9, %s16
    %p18 = scmp.eq.s32.totalorder %s17, 0
    %s20 = sadd.s32 %s19, 1
    %s21 = scalar_select %p18, %s19, %s20
    %p24 = pneg %p18
    %p25 = scmp.eq.s32.totalorder %s9, 1
    %p26 = por %p24, %p25
    %p27 = scmp.ne.s32.totalorder %s19, %s22
    %p28 = scmp.eq.s32.totalorder %s9, 0
    %p29 = por %p27, %p28
    %p30 = scmp.ne.s32.totalorder %s19, %s22
    %p31 = scmp.eq.s32.totalorder %s14, 1
    %p32 = por %p30, %p31
    %p33 = scmp.ne.s32.totalorder %s22, %s23
    %p34 = scmp.eq.s32.totalorder %s14, 0
    %p35 = por %p33, %p34
    %p36 = scmp.ne.s32.totalorder %s22, %s23
    %p37 = scmp.eq.s32.totalorder %s15, 1
    %p38 = por %p36, %p37
    %p40 = scmp.ne.s32.totalorder %s23, %s39
    %p41 = scmp.eq.s32.totalorder %s15, 0
    %p42 = por %p40, %p41
    %s44 = sadd.s32 %s43, 1
    %p47 = scmp.eq.s32.totalorder %s9, 1
    %p48 = scmp.ne.s32.totalorder %s43, %s45
    %p49 = scmp.eq.s32.totalorder %s9, 0
    %p50 = por %p48, %p49
    %p51 = scmp.ne.s32.totalorder %s43, %s45
    %p52 = scmp.eq.s32.totalorder %s14, 1
    %p53 = por %p51, %p52
    %p54 = scmp.ne.s32.totalorder %s45, %s46
    %p55 = scmp.eq.s32.totalorder %s14, 0
    %p56 = por %p54, %p55
    %p57 = scmp.ne.s32.totalorder %s45, %s46
    %p58 = scmp.eq.s32.totalorder %s15, 1
    %p59 = por %p57, %p58
    %p61 = scmp.ne.s32.totalorder %s46, %s60
    %p62 = scmp.eq.s32.totalorder %s15, 0
    %p63 = por %p61, %p62
    %s65 = sadd.s32 %s64, 1
    %p68 = scmp.eq.s32.totalorder %s9, 1
    %p69 = scmp.ne.s32.totalorder %s64, %s66
    %p70 = scmp.eq.s32.totalorder %s9, 0
    %p71 = por %p69, %p70
    %p72 = scmp.ne.s32.totalorder %s64, %s66
    %p73 = scmp.eq.s32.totalorder %s14, 1
    %p74 = por %p72, %p73
    %p75 = scmp.ne.s32.totalorder %s66, %s67
    %p76 = scmp.eq.s32.totalorder %s14, 0
    %p77 = por %p75, %p76
    %p78 = scmp.ne.s32.totalorder %s66, %s67
    %p79 = scmp.eq.s32.totalorder %s15, 1
    %p80 = por %p78, %p79
    %p82 = scmp.ne.s32.totalorder %s67, %s81
    %p83 = scmp.eq.s32.totalorder %s15, 0
    %p84 = por %p82, %p83
    %s85 = ssub.s32 %s9, %s16
    %p86 = scmp.eq.s32.totalorder %s85, 0
    %s88 = sadd.s32 %s87, 1
    %s89 = scalar_select %p86, %s87, %s88
    %p92 = pneg %p86
    %p93 = scmp.eq.s32.totalorder %s9, 1
    %p94 = por %p92, %p93
    %p95 = scmp.ne.s32.totalorder %s87, %s90
    %p96 = scmp.eq.s32.totalorder %s9, 0
    %p97 = por %p95, %p96
    %p98 = scmp.ne.s32.totalorder %s87, %s90
    %p99 = scmp.eq.s32.totalorder %s14, 1
    %p100 = por %p98, %p99
    %p101 = scmp.ne.s32.totalorder %s90, %s91
    %p102 = scmp.eq.s32.totalorder %s14, 0
    %p103 = por %p101, %p102
    %p104 = scmp.ne.s32.totalorder %s90, %s91
    %p105 = scmp.eq.s32.totalorder %s15, 1
    %p106 = por %p104, %p105
    %p108 = scmp.ne.s32.totalorder %s91, %s107
    %p109 = scmp.eq.s32.totalorder %s15, 0
    %p110 = por %p108, %p109
    %p111 = scmp.le.s32.totalorder 1, %s9
    %p112 = scmp.lt.s32.totalorder %s9, 3
    %p113 = pnand %p111, %p112
    %p114 = pneg %p113
    // Predicated region
    $region9: #{simple_cnn_forward.3} parent=5 // pred_check
      _
    $region10: #{simple_cnn_forward.3} parent=5 // pred_check_branch
      %116 = sbr.rel (%p113) target = $region12
    $region11: #{simple_cnn_forward.3} parent=5 // pred_region
      %s117 = ssub.s32 %s9, 1
      // Predicated region
      $region13: #{simple_cnn_forward.3} parent=11 // pred_check
        %p118 = pneg %p56
      $region14: #{simple_cnn_forward.3} parent=11 // pred_check_branch
        %120 = sbr.rel (%p118) target = $region16
      $region15: #{simple_cnn_forward.3} parent=11 // pred_region
        _
      $region16: #{simple_cnn_forward.3} parent=11 // pred_fallthru
        _
      // Predicated region
      $region17: #{simple_cnn_forward.3} parent=11 // pred_check
        %p121 = pneg %p77
      $region18: #{simple_cnn_forward.3} parent=11 // pred_check_branch
        %123 = sbr.rel (%p121) target = $region20
      $region19: #{simple_cnn_forward.3} parent=11 // pred_region
        _
      $region20: #{simple_cnn_forward.3} parent=11 // pred_fallthru
        _
    $region12: #{simple_cnn_forward.3} parent=5 // pred_fallthru
      _
    %p124 = scmp.lt.s32.totalorder %s9, 2
    // Predicated region
    $region21: #{simple_cnn_forward.3} parent=5 // pred_check
      %p125 = pneg %p124
    $region22: #{simple_cnn_forward.3} parent=5 // pred_check_branch
      %127 = sbr.rel (%p125) target = $region24
    $region23: #{simple_cnn_forward.3} parent=5 // pred_region
      // Predicated region
      $region25: #{simple_cnn_forward.3} parent=23 // pred_check
        %p128 = pneg %p29
      $region26: #{simple_cnn_forward.3} parent=23 // pred_check_branch
        %130 = sbr.rel (%p128) target = $region28
      $region27: #{simple_cnn_forward.3} parent=23 // pred_region
        %p131 = scmp.lt.s32.totalorder %s9, 1
        %s132 = scalar_select %p131, %s9, 1
        %s133 = smul.addr %s132, 32
        %s134 = smul.addr %s133, 8
        %s135 = scalar_lea.vmem %s0, %s134
      $region28: #{simple_cnn_forward.3} parent=23 // pred_fallthru
        _
    $region24: #{simple_cnn_forward.3} parent=5 // pred_fallthru
      _
    %p136 = scmp.le.s32.totalorder 1, %s9
    %p137 = scmp.lt.s32.totalorder %s9, 3
    %p138 = pnand %p136, %p137
    %p139 = pneg %p138
    // Predicated region
    $region29: #{simple_cnn_forward.3} parent=5 // pred_check
      _
    $region30: #{simple_cnn_forward.3} parent=5 // pred_check_branch
      %141 = sbr.rel (%p138) target = $region32
    $region31: #{simple_cnn_forward.3} parent=5 // pred_region
      %s142 = ssub.s32 %s9, 1
      %p143 = scmp.lt.s32.totalorder %s14, 1
      %s144 = scalar_select %p143, %s14, 1
      %s145 = smul.addr %s144, 32
      %s146 = smul.addr %s145, 8
      %s147 = scalar_lea.vmem %s0, %s146
      %p148 = pneg %p35
      %p149 = pneg %p32
      %p150 = pneg %p56
      %p151 = pneg %p53
      %p152 = pneg %p77
      %p153 = pneg %p74
      %p154 = pneg %p103
      %p155 = pneg %p100
      %p156 = scmp.lt.s32.totalorder %s14, 1
      %s157 = scalar_select %p156, %s14, 1
      %s158 = smul.addr %s157, 32
      %s159 = smul.addr %s158, 8
      %s160 = scalar_lea.vmem %s3, %s159
      %p161 = scmp.lt.s32.totalorder %s14, 1
      %s162 = scalar_select %p161, %s14, 1
      %s163 = smul.addr %s162, 32
      %s164 = smul.addr %s163, 8
      %s165 = scalar_lea.vmem %s0, %s164
      %p166 = scmp.lt.s32.totalorder %s14, 1
      %s167 = scalar_select %p166, %s14, 1
      %s168 = smul.addr %s167, 32
      %s169 = smul.addr %s168, 8
      %s170 = scalar_lea.vmem %s3, %s169
      %v171 = vld [vmem:[%s165] sm:$0xff]
      %v172 = vld [vmem:[%s165 + $0x8] sm:$0xff]
      %v173 = vld [vmem:[%s165 + $0x10] sm:$0xff]
      %v174 = vld [vmem:[%s165 + $0x18] sm:$0xff]
      %v175 = vld [vmem:[%s165 + $0x20] sm:$0xff]
      %v176 = vld [vmem:[%s165 + $0x28] sm:$0xff]
      %v177 = vld [vmem:[%s165 + $0x30] sm:$0xff]
      %v178 = vld [vmem:[%s165 + $0x38] sm:$0xff]
      %v179 = vld [vmem:[%s165 + $0x40] sm:$0xff]
      %v180 = vld [vmem:[%s165 + $0x48] sm:$0xff]
      %v181 = vld [vmem:[%s165 + $0x50] sm:$0xff]
      %v182 = vld [vmem:[%s165 + $0x58] sm:$0xff]
      %v183 = vld [vmem:[%s165 + $0x60] sm:$0xff]
      %v184 = vld [vmem:[%s165 + $0x68] sm:$0xff]
      %v185 = vld [vmem:[%s165 + $0x70] sm:$0xff]
      %v186 = vld [vmem:[%s165 + $0x78] sm:$0xff]
      %v187 = vld [vmem:[%s165 + $0x80] sm:$0xff]
      %v188 = vld [vmem:[%s165 + $0x88] sm:$0xff]
      %v189 = vld [vmem:[%s165 + $0x90] sm:$0xff]
      %v190 = vld [vmem:[%s165 + $0x98] sm:$0xff]
      %v191 = vld [vmem:[%s165 + $0xa0] sm:$0xff]
      %v192 = vld [vmem:[%s165 + $0xa8] sm:$0xff]
      %v193 = vld [vmem:[%s165 + $0xb0] sm:$0xff]
      %v194 = vld [vmem:[%s165 + $0xb8] sm:$0xff]
      %v195 = vld [vmem:[%s165 + $0xc0] sm:$0xff]
      %v196 = vld [vmem:[%s165 + $0xc8] sm:$0xff]
      %v197 = vld [vmem:[%s165 + $0xd0] sm:$0xff]
      %v198 = vld [vmem:[%s165 + $0xd8] sm:$0xff]
      %v199 = vld [vmem:[%s165 + $0xe0] sm:$0xff]
      %v200 = vld [vmem:[%s165 + $0xe8] sm:$0xff]
      %v201 = vld [vmem:[%s165 + $0xf0] sm:$0xff]
      %v202 = vld [vmem:[%s165 + $0xf8] sm:$0xff]
      %v203 = vld [vmem:[%s1] sm:$0xff]
      %v204 = vld [vmem:[%s1 + $0x8] sm:$0xff]
      %v205 = vld [vmem:[%s2] sm:$0x1]
      %v207 = vlaneseq
      %v208 = vshrl.u32 %v207, 7
      %v209 = vsub.s32 0, %v208
      %v210 = vrot.slane %v205, %v209
      %vm212 = vcmask 130048
      %v214 = vsel %vm212, %v171, 0
      %v217 = vsel %vm212, %v172, 0
      %v220 = vsel %vm212, %v173, 0
      %v223 = vsel %vm212, %v174, 0
      %v226 = vsel %vm212, %v175, 0
      %v229 = vsel %vm212, %v176, 0
      %v232 = vsel %vm212, %v177, 0
      %v235 = vsel %vm212, %v178, 0
      %v238 = vsel %vm212, %v179, 0
      %v241 = vsel %vm212, %v180, 0
      %v244 = vsel %vm212, %v181, 0
      %v247 = vsel %vm212, %v182, 0
      %v250 = vsel %vm212, %v183, 0
      %v253 = vsel %vm212, %v184, 0
      %v256 = vsel %vm212, %v185, 0
      %v259 = vsel %vm212, %v186, 0
      %v262 = vsel %vm212, %v187, 0
      %v265 = vsel %vm212, %v188, 0
      %v268 = vsel %vm212, %v189, 0
      %v271 = vsel %vm212, %v190, 0
      %v274 = vsel %vm212, %v191, 0
      %v277 = vsel %vm212, %v192, 0
      %v280 = vsel %vm212, %v193, 0
      %v283 = vsel %vm212, %v194, 0
      %v286 = vsel %vm212, %v195, 0
      %v289 = vsel %vm212, %v196, 0
      %v292 = vsel %vm212, %v197, 0
      %v295 = vsel %vm212, %v198, 0
      %v298 = vsel %vm212, %v199, 0
      %v301 = vsel %vm212, %v200, 0
      %v304 = vsel %vm212, %v201, 0
      %v307 = vsel %vm212, %v202, 0
      %309 = vmatprep.subr.mxu0 0.0
      %310 = vmatpush1.msra.mxu0 %v203
      %311 = vmatprep.subr.mxu0 0.0
      %312 = vmatpush1.msra.mxu0 %v204
      %313 = vmatprep.subr.mxu0 0.0
      %314 = vmatpush1.msra.mxu0 0.0
      %315 = vmatprep.subr.mxu0 0.0
      %316 = vmatpush1.msra.mxu0 0.0
      %317 = vmatprep.subr.mxu0 0.0
      %318 = vmatpush1.msra.mxu0 0.0
      %319 = vmatprep.subr.mxu0 0.0
      %320 = vmatpush1.msra.mxu0 0.0
      %321 = vmatprep.subr.mxu0 0.0
      %322 = vmatpush1.msra.mxu0 0.0
      %323 = vmatprep.subr.mxu0 0.0
      %324 = vmatpush1.msra.mxu0 0.0
      %325 = vmatprep.subr.mxu0 0.0
      %326 = vmatpush1.msra.mxu0 0.0
      %327 = vmatprep.subr.mxu0 0.0
      %328 = vmatpush1.msra.mxu0 0.0
      %329 = vmatprep.subr.mxu0 0.0
      %330 = vmatpush1.msra.mxu0 0.0
      %331 = vmatprep.subr.mxu0 0.0
      %332 = vmatpush1.msra.mxu0 0.0
      %333 = vmatprep.subr.mxu0 0.0
      %334 = vmatpush1.msra.mxu0 0.0
      %335 = vmatprep.subr.mxu0 0.0
      %336 = vmatpush1.msra.mxu0 0.0
      %337 = vmatprep.subr.mxu0 0.0
      %338 = vmatpush1.msra.mxu0 0.0
      %339 = vmatprep.subr.mxu0 0.0
      %340 = vmatpush1.msra.mxu0 0.0
      %341 = vmatprep.subr.mxu0 0.0
      %342 = vmatpush1.msra.mxu0 0.0
      %343 = vmatprep.subr.mxu0 0.0
      %344 = vmatpush1.msra.mxu0 0.0
      %345 = vmatprep.subr.mxu0 0.0
      %346 = vmatpush1.msra.mxu0 0.0
      %347 = vmatprep.subr.mxu0 0.0
      %348 = vmatpush1.msra.mxu0 0.0
      %349 = vmatprep.subr.mxu0 0.0
      %350 = vmatpush1.msra.mxu0 0.0
      %351 = vmatprep.subr.mxu0 0.0
      %352 = vmatpush1.msra.mxu0 0.0
      %353 = vmatprep.subr.mxu0 0.0
      %354 = vmatpush1.msra.mxu0 0.0
      %355 = vmatprep.subr.mxu0 0.0
      %356 = vmatpush1.msra.mxu0 0.0
      %357 = vmatprep.subr.mxu0 0.0
      %358 = vmatpush1.msra.mxu0 0.0
      %359 = vmatprep.subr.mxu0 0.0
      %360 = vmatpush1.msra.mxu0 0.0
      %361 = vmatprep.subr.mxu0 0.0
      %362 = vmatpush1.msra.mxu0 0.0
      %363 = vmatprep.subr.mxu0 0.0
      %364 = vmatpush1.msra.mxu0 0.0
      %365 = vmatprep.subr.mxu0 0.0
      %366 = vmatpush1.msra.mxu0 0.0
      %367 = vmatprep.subr.mxu0 0.0
      %368 = vmatpush1.msra.mxu0 0.0
      %369 = vmatprep.subr.mxu0 0.0
      %370 = vmatpush1.msra.mxu0 0.0
      %371 = vmatprep.subr.mxu0 0.0
      %372 = vmatpush1.msra.mxu0 0.0
      %373 = vmatprep.mubr.f32.mxu0 0.0
      %374 = vmatmul.mubr.f32.gmra.mrb[0].mxu0 %v214
      %v375 = vpop.f32.mrb[0].mxu0
      %v376 = vadd.f32 %v210, %v375
      %v377 = vpop.f32.mrb[0].mxu0
      %378 = vmatprep.mubr.f32.mxu0 0.0
      %379 = vmatmul.mubr.f32.gmra.mrb[0].mxu0 %v217
      %v380 = vpop.f32.mrb[0].mxu0
      %v381 = vadd.f32 %v210, %v380
      %v382 = vpop.f32.mrb[0].mxu0
      %383 = vmatprep.mubr.f32.mxu0 0.0
      %384 = vmatmul.mubr.f32.gmra.mrb[0].mxu0 %v220
      %v385 = vpop.f32.mrb[0].mxu0
      %v386 = vadd.f32 %v210, %v385
      %v387 = vpop.f32.mrb[0].mxu0
      %388 = vmatprep.mubr.f32.mxu0 0.0
      %389 = vmatmul.mubr.f32.gmra.mrb[0].mxu0 %v223
      %v390 = vpop.f32.mrb[0].mxu0
      %v391 = vadd.f32 %v210, %v390
      %v392 = vpop.f32.mrb[0].mxu0
      %393 = vmatprep.mubr.f32.mxu0 0.0
      %394 = vmatmul.mubr.f32.gmra.mrb[0].mxu0 %v226
      %v395 = vpop.f32.mrb[0].mxu0
      %v396 = vadd.f32 %v210, %v395
      %v397 = vpop.f32.mrb[0].mxu0
      %398 = vmatprep.mubr.f32.mxu0 0.0
      %399 = vmatmul.mubr.f32.gmra.mrb[0].mxu0 %v229
      %v400 = vpop.f32.mrb[0].mxu0
      %v401 = vadd.f32 %v210, %v400
      %v402 = vpop.f32.mrb[0].mxu0
      %403 = vmatprep.mubr.f32.mxu0 0.0
      %404 = vmatmul.mubr.f32.gmra.mrb[0].mxu0 %v232
      %v405 = vpop.f32.mrb[0].mxu0
      %v406 = vadd.f32 %v210, %v405
      %v407 = vpop.f32.mrb[0].mxu0
      %408 = vmatprep.mubr.f32.mxu0 0.0
      %409 = vmatmul.mubr.f32.gmra.mrb[0].mxu0 %v235
      %v410 = vpop.f32.mrb[0].mxu0
      %v411 = vadd.f32 %v210, %v410
      %v412 = vpop.f32.mrb[0].mxu0
      %413 = vmatprep.mubr.f32.mxu0 0.0
      %414 = vmatmul.mubr.f32.gmra.mrb[0].mxu0 %v238
      %v415 = vpop.f32.mrb[0].mxu0
      %v416 = vadd.f32 %v210, %v415
      %v417 = vpop.f32.mrb[0].mxu0
      %418 = vmatprep.mubr.f32.mxu0 0.0
      %419 = vmatmul.mubr.f32.gmra.mrb[0].mxu0 %v241
      %v420 = vpop.f32.mrb[0].mxu0
      %v421 = vadd.f32 %v210, %v420
      %v422 = vpop.f32.mrb[0].mxu0
      %423 = vmatprep.mubr.f32.mxu0 0.0
      %424 = vmatmul.mubr.f32.gmra.mrb[0].mxu0 %v244
      %v425 = vpop.f32.mrb[0].mxu0
      %v426 = vadd.f32 %v210, %v425
      %v427 = vpop.f32.mrb[0].mxu0
      %428 = vmatprep.mubr.f32.mxu0 0.0
      %429 = vmatmul.mubr.f32.gmra.mrb[0].mxu0 %v247
      %v430 = vpop.f32.mrb[0].mxu0
      %v431 = vadd.f32 %v210, %v430
      %v432 = vpop.f32.mrb[0].mxu0
      %433 = vmatprep.mubr.f32.mxu0 0.0
      %434 = vmatmul.mubr.f32.gmra.mrb[0].mxu0 %v250
      %v435 = vpop.f32.mrb[0].mxu0
      %v436 = vadd.f32 %v210, %v435
      %v437 = vpop.f32.mrb[0].mxu0
      %438 = vmatprep.mubr.f32.mxu0 0.0
      %439 = vmatmul.mubr.f32.gmra.mrb[0].mxu0 %v253
      %v440 = vpop.f32.mrb[0].mxu0
      %v441 = vadd.f32 %v210, %v440
      %v442 = vpop.f32.mrb[0].mxu0
      %443 = vmatprep.mubr.f32.mxu0 0.0
      %444 = vmatmul.mubr.f32.gmra.mrb[0].mxu0 %v256
      %v445 = vpop.f32.mrb[0].mxu0
      %v446 = vadd.f32 %v210, %v445
      %v447 = vpop.f32.mrb[0].mxu0
      %448 = vmatprep.mubr.f32.mxu0 0.0
      %449 = vmatmul.mubr.f32.gmra.mrb[0].mxu0 %v259
      %v450 = vpop.f32.mrb[0].mxu0
      %v451 = vadd.f32 %v210, %v450
      %v452 = vpop.f32.mrb[0].mxu0
      %453 = vmatprep.mubr.f32.mxu0 0.0
      %454 = vmatmul.mubr.f32.gmra.mrb[0].mxu0 %v262
      %v455 = vpop.f32.mrb[0].mxu0
      %v456 = vadd.f32 %v210, %v455
      %v457 = vpop.f32.mrb[0].mxu0
      %458 = vmatprep.mubr.f32.mxu0 0.0
      %459 = vmatmul.mubr.f32.gmra.mrb[0].mxu0 %v265
      %v460 = vpop.f32.mrb[0].mxu0
      %v461 = vadd.f32 %v210, %v460
      %v462 = vpop.f32.mrb[0].mxu0
      %463 = vmatprep.mubr.f32.mxu0 0.0
      %464 = vmatmul.mubr.f32.gmra.mrb[0].mxu0 %v268
      %v465 = vpop.f32.mrb[0].mxu0
      %v466 = vadd.f32 %v210, %v465
      %v467 = vpop.f32.mrb[0].mxu0
      %468 = vmatprep.mubr.f32.mxu0 0.0
      %469 = vmatmul.mubr.f32.gmra.mrb[0].mxu0 %v271
      %v470 = vpop.f32.mrb[0].mxu0
      %v471 = vadd.f32 %v210, %v470
      %v472 = vpop.f32.mrb[0].mxu0
      %473 = vmatprep.mubr.f32.mxu0 0.0
      %474 = vmatmul.mubr.f32.gmra.mrb[0].mxu0 %v274
      %v475 = vpop.f32.mrb[0].mxu0
      %v476 = vadd.f32 %v210, %v475
      %v477 = vpop.f32.mrb[0].mxu0
      %478 = vmatprep.mubr.f32.mxu0 0.0
      %479 = vmatmul.mubr.f32.gmra.mrb[0].mxu0 %v277
      %v480 = vpop.f32.mrb[0].mxu0
      %v481 = vadd.f32 %v210, %v480
      %v482 = vpop.f32.mrb[0].mxu0
      %483 = vmatprep.mubr.f32.mxu0 0.0
      %484 = vmatmul.mubr.f32.gmra.mrb[0].mxu0 %v280
      %v485 = vpop.f32.mrb[0].mxu0
      %v486 = vadd.f32 %v210, %v485
      %v487 = vpop.f32.mrb[0].mxu0
      %488 = vmatprep.mubr.f32.mxu0 0.0
      %489 = vmatmul.mubr.f32.gmra.mrb[0].mxu0 %v283
      %v490 = vpop.f32.mrb[0].mxu0
      %v491 = vadd.f32 %v210, %v490
      %v492 = vpop.f32.mrb[0].mxu0
      %493 = vmatprep.mubr.f32.mxu0 0.0
      %494 = vmatmul.mubr.f32.gmra.mrb[0].mxu0 %v286
      %v495 = vpop.f32.mrb[0].mxu0
      %v496 = vadd.f32 %v210, %v495
      %v497 = vpop.f32.mrb[0].mxu0
      %498 = vmatprep.mubr.f32.mxu0 0.0
      %499 = vmatmul.mubr.f32.gmra.mrb[0].mxu0 %v289
      %v500 = vpop.f32.mrb[0].mxu0
      %v501 = vadd.f32 %v210, %v500
      %v502 = vpop.f32.mrb[0].mxu0
      %503 = vmatprep.mubr.f32.mxu0 0.0
      %504 = vmatmul.mubr.f32.gmra.mrb[0].mxu0 %v292
      %v505 = vpop.f32.mrb[0].mxu0
      %v506 = vadd.f32 %v210, %v505
      %v507 = vpop.f32.mrb[0].mxu0
      %508 = vmatprep.mubr.f32.mxu0 0.0
      %509 = vmatmul.mubr.f32.gmra.mrb[0].mxu0 %v295
      %v510 = vpop.f32.mrb[0].mxu0
      %v511 = vadd.f32 %v210, %v510
      %v512 = vpop.f32.mrb[0].mxu0
      %513 = vmatprep.mubr.f32.mxu0 0.0
      %514 = vmatmul.mubr.f32.gmra.mrb[0].mxu0 %v298
      %v515 = vpop.f32.mrb[0].mxu0
      %v516 = vadd.f32 %v210, %v515
      %v517 = vpop.f32.mrb[0].mxu0
      %518 = vmatprep.mubr.f32.mxu0 0.0
      %519 = vmatmul.mubr.f32.gmra.mrb[0].mxu0 %v301
      %v520 = vpop.f32.mrb[0].mxu0
      %v521 = vadd.f32 %v210, %v520
      %v522 = vpop.f32.mrb[0].mxu0
      %523 = vmatprep.mubr.f32.mxu0 0.0
      %524 = vmatmul.mubr.f32.gmra.mrb[0].mxu0 %v304
      %v525 = vpop.f32.mrb[0].mxu0
      %v526 = vadd.f32 %v210, %v525
      %v527 = vpop.f32.mrb[0].mxu0
      %528 = vmatprep.mubr.f32.mxu0 0.0
      %529 = vmatmul.mubr.f32.gmra.mrb[0].mxu0 %v307
      %v530 = vpop.f32.mrb[0].mxu0
      %v531 = vadd.f32 %v210, %v530
      %v532 = vpop.f32.mrb[0].mxu0
      %533 = vdwg.mxu0
      %v534 = vmax.f32 %v376, 0.0
      %v535 = vmax.f32 %v381, 0.0
      %v536 = vmax.f32 %v386, 0.0
      %v537 = vmax.f32 %v391, 0.0
      %v538 = vmax.f32 %v396, 0.0
      %v539 = vmax.f32 %v401, 0.0
      %v540 = vmax.f32 %v406, 0.0
      %v541 = vmax.f32 %v411, 0.0
      %v542 = vmax.f32 %v416, 0.0
      %v543 = vmax.f32 %v421, 0.0
      %v544 = vmax.f32 %v426, 0.0
      %v545 = vmax.f32 %v431, 0.0
      %v546 = vmax.f32 %v436, 0.0
      %v547 = vmax.f32 %v441, 0.0
      %v548 = vmax.f32 %v446, 0.0
      %v549 = vmax.f32 %v451, 0.0
      %v550 = vmax.f32 %v456, 0.0
      %v551 = vmax.f32 %v461, 0.0
      %v552 = vmax.f32 %v466, 0.0
      %v553 = vmax.f32 %v471, 0.0
      %v554 = vmax.f32 %v476, 0.0
      %v555 = vmax.f32 %v481, 0.0
      %v556 = vmax.f32 %v486, 0.0
      %v557 = vmax.f32 %v491, 0.0
      %v558 = vmax.f32 %v496, 0.0
      %v559 = vmax.f32 %v501, 0.0
      %v560 = vmax.f32 %v506, 0.0
      %v561 = vmax.f32 %v511, 0.0
      %v562 = vmax.f32 %v516, 0.0
      %v563 = vmax.f32 %v521, 0.0
      %v564 = vmax.f32 %v526, 0.0
      %v565 = vmax.f32 %v531, 0.0
      %598 = vrot.lane.b32.xlu0 %v534, 96
      %v599 = vpop.permute.xlu0 %598
      %600 = vrot.lane.b32.xlu0 %v535, 96
      %v601 = vpop.permute.xlu0 %600
      %602 = vrot.lane.b32.xlu0 %v536, 96
      %v603 = vpop.permute.xlu0 %602
      %604 = vrot.lane.b32.xlu0 %v537, 96
      %v605 = vpop.permute.xlu0 %604
      %606 = vrot.lane.b32.xlu0 %v538, 96
      %v607 = vpop.permute.xlu0 %606
      %608 = vrot.lane.b32.xlu0 %v539, 96
      %v609 = vpop.permute.xlu0 %608
      %610 = vrot.lane.b32.xlu0 %v540, 96
      %v611 = vpop.permute.xlu0 %610
      %612 = vrot.lane.b32.xlu0 %v541, 96
      %v613 = vpop.permute.xlu0 %612
      %614 = vrot.lane.b32.xlu0 %v542, 96
      %v615 = vpop.permute.xlu0 %614
      %616 = vrot.lane.b32.xlu0 %v543, 96
      %v617 = vpop.permute.xlu0 %616
      %618 = vrot.lane.b32.xlu0 %v544, 96
      %v619 = vpop.permute.xlu0 %618
      %620 = vrot.lane.b32.xlu0 %v545, 96
      %v621 = vpop.permute.xlu0 %620
      %622 = vrot.lane.b32.xlu0 %v546, 96
      %v623 = vpop.permute.xlu0 %622
      %624 = vrot.lane.b32.xlu0 %v547, 96
      %v625 = vpop.permute.xlu0 %624
      %626 = vrot.lane.b32.xlu0 %v548, 96
      %v627 = vpop.permute.xlu0 %626
      %628 = vrot.lane.b32.xlu0 %v549, 96
      %v629 = vpop.permute.xlu0 %628
      %630 = vrot.lane.b32.xlu0 %v550, 96
      %v631 = vpop.permute.xlu0 %630
      %632 = vrot.lane.b32.xlu0 %v551, 96
      %v633 = vpop.permute.xlu0 %632
      %634 = vrot.lane.b32.xlu0 %v552, 96
      %v635 = vpop.permute.xlu0 %634
      %636 = vrot.lane.b32.xlu0 %v553, 96
      %v637 = vpop.permute.xlu0 %636
      %638 = vrot.lane.b32.xlu0 %v554, 96
      %v639 = vpop.permute.xlu0 %638
      %640 = vrot.lane.b32.xlu0 %v555, 96
      %v641 = vpop.permute.xlu0 %640
      %642 = vrot.lane.b32.xlu0 %v556, 96
      %v643 = vpop.permute.xlu0 %642
      %644 = vrot.lane.b32.xlu0 %v557, 96
      %v645 = vpop.permute.xlu0 %644
      %646 = vrot.lane.b32.xlu0 %v558, 96
      %v647 = vpop.permute.xlu0 %646
      %648 = vrot.lane.b32.xlu0 %v559, 96
      %v649 = vpop.permute.xlu0 %648
      %650 = vrot.lane.b32.xlu0 %v560, 96
      %v651 = vpop.permute.xlu0 %650
      %652 = vrot.lane.b32.xlu0 %v561, 96
      %v653 = vpop.permute.xlu0 %652
      %654 = vrot.lane.b32.xlu0 %v562, 96
      %v655 = vpop.permute.xlu0 %654
      %656 = vrot.lane.b32.xlu0 %v563, 96
      %v657 = vpop.permute.xlu0 %656
      %658 = vrot.lane.b32.xlu0 %v564, 96
      %v659 = vpop.permute.xlu0 %658
      %660 = vrot.lane.b32.xlu0 %v565, 96
      %v661 = vpop.permute.xlu0 %660
      %v694 = vmax.f32 %v534, %v599
      %v695 = vmax.f32 %v535, %v601
      %v696 = vmax.f32 %v536, %v603
      %v697 = vmax.f32 %v537, %v605
      %v698 = vmax.f32 %v538, %v607
      %v699 = vmax.f32 %v539, %v609
      %v700 = vmax.f32 %v540, %v611
      %v701 = vmax.f32 %v541, %v613
      %v702 = vmax.f32 %v542, %v615
      %v703 = vmax.f32 %v543, %v617
      %v704 = vmax.f32 %v544, %v619
      %v705 = vmax.f32 %v545, %v621
      %v706 = vmax.f32 %v546, %v623
      %v707 = vmax.f32 %v547, %v625
      %v708 = vmax.f32 %v548, %v627
      %v709 = vmax.f32 %v549, %v629
      %v710 = vmax.f32 %v550, %v631
      %v711 = vmax.f32 %v551, %v633
      %v712 = vmax.f32 %v552, %v635
      %v713 = vmax.f32 %v553, %v637
      %v714 = vmax.f32 %v554, %v639
      %v715 = vmax.f32 %v555, %v641
      %v716 = vmax.f32 %v556, %v643
      %v717 = vmax.f32 %v557, %v645
      %v718 = vmax.f32 %v558, %v647
      %v719 = vmax.f32 %v559, %v649
      %v720 = vmax.f32 %v560, %v651
      %v721 = vmax.f32 %v561, %v653
      %v722 = vmax.f32 %v562, %v655
      %v723 = vmax.f32 %v563, %v657
      %v724 = vmax.f32 %v564, %v659
      %v725 = vmax.f32 %v565, %v661
      %758 = vrot.lane.b32.xlu0 %v694, 64
      %v759 = vpop.permute.xlu0 %758
      %760 = vrot.lane.b32.xlu0 %v695, 64
      %v761 = vpop.permute.xlu0 %760
      %762 = vrot.lane.b32.xlu0 %v696, 64
      %v763 = vpop.permute.xlu0 %762
      %764 = vrot.lane.b32.xlu0 %v697, 64
      %v765 = vpop.permute.xlu0 %764
      %766 = vrot.lane.b32.xlu0 %v698, 64
      %v767 = vpop.permute.xlu0 %766
      %768 = vrot.lane.b32.xlu0 %v699, 64
      %v769 = vpop.permute.xlu0 %768
      %770 = vrot.lane.b32.xlu0 %v700, 64
      %v771 = vpop.permute.xlu0 %770
      %772 = vrot.lane.b32.xlu0 %v701, 64
      %v773 = vpop.permute.xlu0 %772
      %774 = vrot.lane.b32.xlu0 %v702, 64
      %v775 = vpop.permute.xlu0 %774
      %776 = vrot.lane.b32.xlu0 %v703, 64
      %v777 = vpop.permute.xlu0 %776
      %778 = vrot.lane.b32.xlu0 %v704, 64
      %v779 = vpop.permute.xlu0 %778
      %780 = vrot.lane.b32.xlu0 %v705, 64
      %v781 = vpop.permute.xlu0 %780
      %782 = vrot.lane.b32.xlu0 %v706, 64
      %v783 = vpop.permute.xlu0 %782
      %784 = vrot.lane.b32.xlu0 %v707, 64
      %v785 = vpop.permute.xlu0 %784
      %786 = vrot.lane.b32.xlu0 %v708, 64
      %v787 = vpop.permute.xlu0 %786
      %788 = vrot.lane.b32.xlu0 %v709, 64
      %v789 = vpop.permute.xlu0 %788
      %790 = vrot.lane.b32.xlu0 %v710, 64
      %v791 = vpop.permute.xlu0 %790
      %792 = vrot.lane.b32.xlu0 %v711, 64
      %v793 = vpop.permute.xlu0 %792
      %794 = vrot.lane.b32.xlu0 %v712, 64
      %v795 = vpop.permute.xlu0 %794
      %796 = vrot.lane.b32.xlu0 %v713, 64
      %v797 = vpop.permute.xlu0 %796
      %798 = vrot.lane.b32.xlu0 %v714, 64
      %v799 = vpop.permute.xlu0 %798
      %800 = vrot.lane.b32.xlu0 %v715, 64
      %v801 = vpop.permute.xlu0 %800
      %802 = vrot.lane.b32.xlu0 %v716, 64
      %v803 = vpop.permute.xlu0 %802
      %804 = vrot.lane.b32.xlu0 %v717, 64
      %v805 = vpop.permute.xlu0 %804
      %806 = vrot.lane.b32.xlu0 %v718, 64
      %v807 = vpop.permute.xlu0 %806
      %808 = vrot.lane.b32.xlu0 %v719, 64
      %v809 = vpop.permute.xlu0 %808
      %810 = vrot.lane.b32.xlu0 %v720, 64
      %v811 = vpop.permute.xlu0 %810
      %812 = vrot.lane.b32.xlu0 %v721, 64
      %v813 = vpop.permute.xlu0 %812
      %814 = vrot.lane.b32.xlu0 %v722, 64
      %v815 = vpop.permute.xlu0 %814
      %816 = vrot.lane.b32.xlu0 %v723, 64
      %v817 = vpop.permute.xlu0 %816
      %818 = vrot.lane.b32.xlu0 %v724, 64
      %v819 = vpop.permute.xlu0 %818
      %820 = vrot.lane.b32.xlu0 %v725, 64
      %v821 = vpop.permute.xlu0 %820
      %v854 = vmax.f32 %v694, %v759
      %v855 = vmax.f32 %v695, %v761
      %v856 = vmax.f32 %v696, %v763
      %v857 = vmax.f32 %v697, %v765
      %v858 = vmax.f32 %v698, %v767
      %v859 = vmax.f32 %v699, %v769
      %v860 = vmax.f32 %v700, %v771
      %v861 = vmax.f32 %v701, %v773
      %v862 = vmax.f32 %v702, %v775
      %v863 = vmax.f32 %v703, %v777
      %v864 = vmax.f32 %v704, %v779
      %v865 = vmax.f32 %v705, %v781
      %v866 = vmax.f32 %v706, %v783
      %v867 = vmax.f32 %v707, %v785
      %v868 = vmax.f32 %v708, %v787
      %v869 = vmax.f32 %v709, %v789
      %v870 = vmax.f32 %v710, %v791
      %v871 = vmax.f32 %v711, %v793
      %v872 = vmax.f32 %v712, %v795
      %v873 = vmax.f32 %v713, %v797
      %v874 = vmax.f32 %v714, %v799
      %v875 = vmax.f32 %v715, %v801
      %v876 = vmax.f32 %v716, %v803
      %v877 = vmax.f32 %v717, %v805
      %v878 = vmax.f32 %v718, %v807
      %v879 = vmax.f32 %v719, %v809
      %v880 = vmax.f32 %v720, %v811
      %v881 = vmax.f32 %v721, %v813
      %v882 = vmax.f32 %v722, %v815
      %v883 = vmax.f32 %v723, %v817
      %v884 = vmax.f32 %v724, %v819
      %v885 = vmax.f32 %v725, %v821
      %vm886 = vcmask 261120
      %887 = vst.msk [vmem:[%s170] sm:$0xff] %vm886, %v854
      %888 = vst.msk [vmem:[%s170 + $0x8] sm:$0xff] %vm886, %v855
      %889 = vst.msk [vmem:[%s170 + $0x10] sm:$0xff] %vm886, %v856
      %890 = vst.msk [vmem:[%s170 + $0x18] sm:$0xff] %vm886, %v857
      %891 = vst.msk [vmem:[%s170 + $0x20] sm:$0xff] %vm886, %v858
      %892 = vst.msk [vmem:[%s170 + $0x28] sm:$0xff] %vm886, %v859
      %893 = vst.msk [vmem:[%s170 + $0x30] sm:$0xff] %vm886, %v860
      %894 = vst.msk [vmem:[%s170 + $0x38] sm:$0xff] %vm886, %v861
      %895 = vst.msk [vmem:[%s170 + $0x40] sm:$0xff] %vm886, %v862
      %896 = vst.msk [vmem:[%s170 + $0x48] sm:$0xff] %vm886, %v863
      %897 = vst.msk [vmem:[%s170 + $0x50] sm:$0xff] %vm886, %v864
      %898 = vst.msk [vmem:[%s170 + $0x58] sm:$0xff] %vm886, %v865
      %899 = vst.msk [vmem:[%s170 + $0x60] sm:$0xff] %vm886, %v866
      %900 = vst.msk [vmem:[%s170 + $0x68] sm:$0xff] %vm886, %v867
      %901 = vst.msk [vmem:[%s170 + $0x70] sm:$0xff] %vm886, %v868
      %902 = vst.msk [vmem:[%s170 + $0x78] sm:$0xff] %vm886, %v869
      %903 = vst.msk [vmem:[%s170 + $0x80] sm:$0xff] %vm886, %v870
      %904 = vst.msk [vmem:[%s170 + $0x88] sm:$0xff] %vm886, %v871
      %905 = vst.msk [vmem:[%s170 + $0x90] sm:$0xff] %vm886, %v872
      %906 = vst.msk [vmem:[%s170 + $0x98] sm:$0xff] %vm886, %v873
      %907 = vst.msk [vmem:[%s170 + $0xa0] sm:$0xff] %vm886, %v874
      %908 = vst.msk [vmem:[%s170 + $0xa8] sm:$0xff] %vm886, %v875
      %909 = vst.msk [vmem:[%s170 + $0xb0] sm:$0xff] %vm886, %v876
      %910 = vst.msk [vmem:[%s170 + $0xb8] sm:$0xff] %vm886, %v877
      %911 = vst.msk [vmem:[%s170 + $0xc0] sm:$0xff] %vm886, %v878
      %912 = vst.msk [vmem:[%s170 + $0xc8] sm:$0xff] %vm886, %v879
      %913 = vst.msk [vmem:[%s170 + $0xd0] sm:$0xff] %vm886, %v880
      %914 = vst.msk [vmem:[%s170 + $0xd8] sm:$0xff] %vm886, %v881
      %915 = vst.msk [vmem:[%s170 + $0xe0] sm:$0xff] %vm886, %v882
      %916 = vst.msk [vmem:[%s170 + $0xe8] sm:$0xff] %vm886, %v883
      %917 = vst.msk [vmem:[%s170 + $0xf0] sm:$0xff] %vm886, %v884
      %918 = vst.msk [vmem:[%s170 + $0xf8] sm:$0xff] %vm886, %v885
      %p919 = scmp.lt.s32.totalorder %s14, 1
      %s920 = scalar_select %p919, %s14, 1
      %s921 = smul.addr %s920, 32
      %s922 = smul.addr %s921, 8
      %s923 = scalar_lea.vmem %s3, %s922
      // Predicated region
      $region33: #{simple_cnn_forward.3} parent=31 // pred_check
        %p924 = pneg %p100
      $region34: #{simple_cnn_forward.3} parent=31 // pred_check_branch
        %926 = sbr.rel (%p924) target = $region36
      $region35: #{simple_cnn_forward.3} parent=31 // pred_region
        _
      $region36: #{simple_cnn_forward.3} parent=31 // pred_fallthru
        _
    $region32: #{simple_cnn_forward.3} parent=5 // pred_fallthru
      _
    %p927 = scmp.le.s32.totalorder 2, %s9
    // Predicated region
    $region37: #{simple_cnn_forward.3} parent=5 // pred_check
      %p928 = pneg %p927
    $region38: #{simple_cnn_forward.3} parent=5 // pred_check_branch
      %930 = sbr.rel (%p928) target = $region40
    $region39: #{simple_cnn_forward.3} parent=5 // pred_region
      %s931 = ssub.s32 %s9, 2
      // Predicated region
      $region41: #{simple_cnn_forward.3} parent=39 // pred_check
        %p932 = pneg %p106
      $region42: #{simple_cnn_forward.3} parent=39 // pred_check_branch
        %934 = sbr.rel (%p932) target = $region44
      $region43: #{simple_cnn_forward.3} parent=39 // pred_region
        %p935 = scmp.lt.s32.totalorder %s15, 1
        %s936 = scalar_select %p935, %s15, 1
        %s937 = smul.addr %s936, 32
        %s938 = smul.addr %s937, 8
        %s939 = scalar_lea.vmem %s3, %s938
      $region44: #{simple_cnn_forward.3} parent=39 // pred_fallthru
        _
    $region40: #{simple_cnn_forward.3} parent=5 // pred_fallthru
      _
  $region6: #{simple_cnn_forward.3} parent=0 // loop_footer
    %s13 = sadd.s32 1, %s9
  $region7: #{simple_cnn_forward.3} parent=0 // loop_footer_branch
    %8 = sbr.rel target = $region3
  $region8: #{simple_cnn_forward.3} parent=0 // loop_exit
    _

// kernel: simple_cnn_forward.4
$region0: #{simple_cnn_forward.4}
  #allocation0 [shape = 'u32[]', space=smem, size = 0x4, offset = 0x4, fixed_abs, tag = 'smem constant byte address 0x4 - core index']
  #allocation1 [shape = 'u32[144,128]{1,0:T(1,128)}', space=vmem, size = 0x12000, scoped, tag = 'internal scratch']
  %s0 = inlined_call_operand.vmem [shape: f32[2,9,9,128], index: 0, kind: input, shape index: {}]
  %s1 = inlined_call_operand.vmem [shape: f32[4,128,256], index: 1, kind: input, shape index: {}]
  %s2 = inlined_call_operand.vmem [shape: f32[1,256], index: 2, kind: input, shape index: {}]
  %s3 = inlined_call_operand.vmem [shape: f32[2,64,64], index: 3, kind: output, shape index: {}]
  %s4 = sld [smem:[#allocation0]]
  $region45: #{simple_cnn_forward.4} parent=0
    _
  %s6 = ssub.s32 1, %s4
  %s7 = scalar_select 0, %s6, %s4
  loop: start=0, step=1, limit=4
  $region2: #{simple_cnn_forward.4} parent=0 // loop_pre_header
    _
  $region3: #{simple_cnn_forward.4} parent=0 // loop_header
    %s9 = sphi 0, %s13
    %p10 = scmp.ge.s32.totalorder %s9, 4
    %s19 = sphi 0, %s21
    %s22 = sphi 0, %s19
    %s23 = sphi 0, %s22
    %s39 = sphi 0, %s23
    %s43 = sphi 0, %s43
    %s45 = sphi 0, %s43
    %s46 = sphi 0, %s45
    %s60 = sphi 0, %s46
    %s64 = sphi 0, %s64
    %s66 = sphi 0, %s64
    %s67 = sphi 0, %s66
    %s81 = sphi 0, %s67
    %s87 = sphi 0, %s89
    %s90 = sphi 0, %s87
    %s91 = sphi 0, %s90
    %s107 = sphi 0, %s91
  $region4: #{simple_cnn_forward.4} parent=0 // loop_header_branch
    %12 = sbr.rel (%p10) target = $region8
  $region5: #{simple_cnn_forward.4} parent=0 // loop_body
    %s14 = ssub.s32 %s9, 1
    %s15 = ssub.s32 %s9, 2
    %s16 = sadd.s32 %s9, 1
    %s17 = ssub.s32 %s9, %s16
    %p18 = scmp.eq.s32.totalorder %s17, 0
    %s20 = sadd.s32 %s19, 1
    %s21 = scalar_select %p18, %s19, %s20
    %p24 = pneg %p18
    %p25 = scmp.eq.s32.totalorder %s9, 1
    %p26 = por %p24, %p25
    %p27 = scmp.ne.s32.totalorder %s19, %s22
    %p28 = scmp.eq.s32.totalorder %s9, 0
    %p29 = por %p27, %p28
    %p30 = scmp.ne.s32.totalorder %s19, %s22
    %p31 = scmp.eq.s32.totalorder %s14, 1
    %p32 = por %p30, %p31
    %p33 = scmp.ne.s32.totalorder %s22, %s23
    %p34 = scmp.eq.s32.totalorder %s14, 0
    %p35 = por %p33, %p34
    %p36 = scmp.ne.s32.totalorder %s22, %s23
    %p37 = scmp.eq.s32.totalorder %s15, 1
    %p38 = por %p36, %p37
    %p40 = scmp.ne.s32.totalorder %s23, %s39
    %p41 = scmp.eq.s32.totalorder %s15, 0
    %p42 = por %p40, %p41
    %s44 = sadd.s32 %s43, 1
    %p47 = scmp.eq.s32.totalorder %s9, 1
    %p48 = scmp.ne.s32.totalorder %s43, %s45
    %p49 = scmp.eq.s32.totalorder %s9, 0
    %p50 = por %p48, %p49
    %p51 = scmp.ne.s32.totalorder %s43, %s45
    %p52 = scmp.eq.s32.totalorder %s14, 1
    %p53 = por %p51, %p52
    %p54 = scmp.ne.s32.totalorder %s45, %s46
    %p55 = scmp.eq.s32.totalorder %s14, 0
    %p56 = por %p54, %p55
    %p57 = scmp.ne.s32.totalorder %s45, %s46
    %p58 = scmp.eq.s32.totalorder %s15, 1
    %p59 = por %p57, %p58
    %p61 = scmp.ne.s32.totalorder %s46, %s60
    %p62 = scmp.eq.s32.totalorder %s15, 0
    %p63 = por %p61, %p62
    %s65 = sadd.s32 %s64, 1
    %p68 = scmp.eq.s32.totalorder %s9, 1
    %p69 = scmp.ne.s32.totalorder %s64, %s66
    %p70 = scmp.eq.s32.totalorder %s9, 0
    %p71 = por %p69, %p70
    %p72 = scmp.ne.s32.totalorder %s64, %s66
    %p73 = scmp.eq.s32.totalorder %s14, 1
    %p74 = por %p72, %p73
    %p75 = scmp.ne.s32.totalorder %s66, %s67
    %p76 = scmp.eq.s32.totalorder %s14, 0
    %p77 = por %p75, %p76
    %p78 = scmp.ne.s32.totalorder %s66, %s67
    %p79 = scmp.eq.s32.totalorder %s15, 1
    %p80 = por %p78, %p79
    %p82 = scmp.ne.s32.totalorder %s67, %s81
    %p83 = scmp.eq.s32.totalorder %s15, 0
    %p84 = por %p82, %p83
    %s85 = ssub.s32 %s9, %s16
    %p86 = scmp.eq.s32.totalorder %s85, 0
    %s88 = sadd.s32 %s87, 1
    %s89 = scalar_select %p86, %s87, %s88
    %p92 = pneg %p86
    %p93 = scmp.eq.s32.totalorder %s9, 1
    %p94 = por %p92, %p93
    %p95 = scmp.ne.s32.totalorder %s87, %s90
    %p96 = scmp.eq.s32.totalorder %s9, 0
    %p97 = por %p95, %p96
    %p98 = scmp.ne.s32.totalorder %s87, %s90
    %p99 = scmp.eq.s32.totalorder %s14, 1
    %p100 = por %p98, %p99
    %p101 = scmp.ne.s32.totalorder %s90, %s91
    %p102 = scmp.eq.s32.totalorder %s14, 0
    %p103 = por %p101, %p102
    %p104 = scmp.ne.s32.totalorder %s90, %s91
    %p105 = scmp.eq.s32.totalorder %s15, 1
    %p106 = por %p104, %p105
    %p108 = scmp.ne.s32.totalorder %s91, %s107
    %p109 = scmp.eq.s32.totalorder %s15, 0
    %p110 = por %p108, %p109
    %p111 = scmp.le.s32.totalorder 1, %s9
    %p112 = scmp.lt.s32.totalorder %s9, 3
    %p113 = pnand %p111, %p112
    %p114 = pneg %p113
    // Predicated region
    $region9: #{simple_cnn_forward.4} parent=5 // pred_check
      _
    $region10: #{simple_cnn_forward.4} parent=5 // pred_check_branch
      %116 = sbr.rel (%p113) target = $region12
    $region11: #{simple_cnn_forward.4} parent=5 // pred_region
      %s117 = ssub.s32 %s9, 1
      // Predicated region
      $region13: #{simple_cnn_forward.4} parent=11 // pred_check
        %p118 = pneg %p56
      $region14: #{simple_cnn_forward.4} parent=11 // pred_check_branch
        %120 = sbr.rel (%p118) target = $region16
      $region15: #{simple_cnn_forward.4} parent=11 // pred_region
        _
      $region16: #{simple_cnn_forward.4} parent=11 // pred_fallthru
        _
      // Predicated region
      $region17: #{simple_cnn_forward.4} parent=11 // pred_check
        %p121 = pneg %p77
      $region18: #{simple_cnn_forward.4} parent=11 // pred_check_branch
        %123 = sbr.rel (%p121) target = $region20
      $region19: #{simple_cnn_forward.4} parent=11 // pred_region
        _
      $region20: #{simple_cnn_forward.4} parent=11 // pred_fallthru
        _
    $region12: #{simple_cnn_forward.4} parent=5 // pred_fallthru
      _
    %p124 = scmp.lt.s32.totalorder %s9, 2
    // Predicated region
    $region21: #{simple_cnn_forward.4} parent=5 // pred_check
      %p125 = pneg %p124
    $region22: #{simple_cnn_forward.4} parent=5 // pred_check_branch
      %127 = sbr.rel (%p125) target = $region24
    $region23: #{simple_cnn_forward.4} parent=5 // pred_region
      // Predicated region
      $region25: #{simple_cnn_forward.4} parent=23 // pred_check
        %p128 = pneg %p29
      $region26: #{simple_cnn_forward.4} parent=23 // pred_check_branch
        %130 = sbr.rel (%p128) target = $region28
      $region27: #{simple_cnn_forward.4} parent=23 // pred_region
        %p131 = scmp.lt.s32.totalorder %s9, 1
        %s132 = scalar_select %p131, %s9, 1
        %s133 = smul.addr %s132, 18
        %s134 = smul.addr %s133, 8
        %s135 = scalar_lea.vmem %s0, %s134
      $region28: #{simple_cnn_forward.4} parent=23 // pred_fallthru
        _
    $region24: #{simple_cnn_forward.4} parent=5 // pred_fallthru
      _
    %p136 = scmp.le.s32.totalorder 1, %s9
    %p137 = scmp.lt.s32.totalorder %s9, 3
    %p138 = pnand %p136, %p137
    %p139 = pneg %p138
    // Predicated region
    $region29: #{simple_cnn_forward.4} parent=5 // pred_check
      _
    $region30: #{simple_cnn_forward.4} parent=5 // pred_check_branch
      %141 = sbr.rel (%p138) target = $region32
    $region31: #{simple_cnn_forward.4} parent=5 // pred_region
      %s142 = ssub.s32 %s9, 1
      %p143 = scmp.lt.s32.totalorder %s14, 1
      %s144 = scalar_select %p143, %s14, 1
      %s145 = smul.addr %s144, 18
      %s146 = smul.addr %s145, 8
      %s147 = scalar_lea.vmem %s0, %s146
      %p148 = pneg %p35
      %p149 = pneg %p32
      %p150 = pneg %p56
      %p151 = pneg %p53
      %p152 = pneg %p77
      %p153 = pneg %p74
      %p154 = pneg %p103
      %p155 = pneg %p100
      %p156 = scmp.lt.s32.totalorder %s14, 1
      %s157 = scalar_select %p156, %s14, 1
      %s158 = smul.addr %s157, 8
      %s159 = smul.addr %s158, 8
      %s160 = scalar_lea.vmem %s3, %s159
      %p161 = scmp.lt.s32.totalorder %s14, 1
      %s162 = scalar_select %p161, %s14, 1
      %s163 = smul.addr %s162, 18
      %s164 = smul.addr %s163, 8
      %s165 = scalar_lea.vmem %s0, %s164
      %p166 = scmp.lt.s32.totalorder %s14, 1
      %s167 = scalar_select %p166, %s14, 1
      %s168 = smul.addr %s167, 8
      %s169 = smul.addr %s168, 8
      %s170 = scalar_lea.vmem %s3, %s169
      %v171 = vld [vmem:[%s165] sm:$0xff]
      %v172 = vld [vmem:[%s165 + $0x10] sm:$0xff]
      %v173 = vld [vmem:[%s165 + $0x20] sm:$0xff]
      %v174 = vld [vmem:[%s165 + $0x30] sm:$0xff]
      %v175 = vld [vmem:[%s165 + $0x40] sm:$0xff]
      %v176 = vld [vmem:[%s165 + $0x50] sm:$0xff]
      %v177 = vld [vmem:[%s165 + $0x60] sm:$0xff]
      %v178 = vld [vmem:[%s165 + $0x70] sm:$0xff]
      %v179 = vld [vmem:[%s1] sm:$0xff]
      %v180 = vld [vmem:[%s1 + $0x8] sm:$0xff]
      %v181 = vld [vmem:[%s1 + $0x10] sm:$0xff]
      %v182 = vld [vmem:[%s1 + $0x18] sm:$0xff]
      %v183 = vld [vmem:[%s1 + $0x20] sm:$0xff]
      %v184 = vld [vmem:[%s1 + $0x28] sm:$0xff]
      %v185 = vld [vmem:[%s1 + $0x30] sm:$0xff]
      %v186 = vld [vmem:[%s1 + $0x38] sm:$0xff]
      %v187 = vld [vmem:[%s1 + $0x40] sm:$0xff]
      %v188 = vld [vmem:[%s1 + $0x48] sm:$0xff]
      %v189 = vld [vmem:[%s1 + $0x50] sm:$0xff]
      %v190 = vld [vmem:[%s1 + $0x58] sm:$0xff]
      %v191 = vld [vmem:[%s1 + $0x60] sm:$0xff]
      %v192 = vld [vmem:[%s1 + $0x68] sm:$0xff]
      %v193 = vld [vmem:[%s1 + $0x70] sm:$0xff]
      %v194 = vld [vmem:[%s1 + $0x78] sm:$0xff]
      %v195 = vld [vmem:[%s1 + $0x80] sm:$0xff]
      %v196 = vld [vmem:[%s1 + $0x88] sm:$0xff]
      %v197 = vld [vmem:[%s1 + $0x90] sm:$0xff]
      %v198 = vld [vmem:[%s1 + $0x98] sm:$0xff]
      %v199 = vld [vmem:[%s1 + $0xa0] sm:$0xff]
      %v200 = vld [vmem:[%s1 + $0xa8] sm:$0xff]
      %v201 = vld [vmem:[%s1 + $0xb0] sm:$0xff]
      %v202 = vld [vmem:[%s1 + $0xb8] sm:$0xff]
      %v203 = vld [vmem:[%s1 + $0xc0] sm:$0xff]
      %v204 = vld [vmem:[%s1 + $0xc8] sm:$0xff]
      %v205 = vld [vmem:[%s1 + $0xd0] sm:$0xff]
      %v206 = vld [vmem:[%s1 + $0xd8] sm:$0xff]
      %v207 = vld [vmem:[%s1 + $0xe0] sm:$0xff]
      %v208 = vld [vmem:[%s1 + $0xe8] sm:$0xff]
      %v209 = vld [vmem:[%s1 + $0xf0] sm:$0xff]
      %v210 = vld [vmem:[%s1 + $0xf8] sm:$0xff]
      %v211 = vld [vmem:[%s165 + $0x1] sm:$0xff]
      %v212 = vld [vmem:[%s165 + $0x11] sm:$0xff]
      %v213 = vld [vmem:[%s165 + $0x21] sm:$0xff]
      %v214 = vld [vmem:[%s165 + $0x31] sm:$0xff]
      %v215 = vld [vmem:[%s165 + $0x41] sm:$0xff]
      %v216 = vld [vmem:[%s165 + $0x51] sm:$0xff]
      %v217 = vld [vmem:[%s165 + $0x61] sm:$0xff]
      %v218 = vld [vmem:[%s165 + $0x71] sm:$0xff]
      %s219 = scalar_lea.vmem %s1, 256
      %v220 = vld [vmem:[%s219] sm:$0xff]
      %v221 = vld [vmem:[%s219 + $0x8] sm:$0xff]
      %v222 = vld [vmem:[%s219 + $0x10] sm:$0xff]
      %v223 = vld [vmem:[%s219 + $0x18] sm:$0xff]
      %v224 = vld [vmem:[%s219 + $0x20] sm:$0xff]
      %v225 = vld [vmem:[%s219 + $0x28] sm:$0xff]
      %v226 = vld [vmem:[%s219 + $0x30] sm:$0xff]
      %v227 = vld [vmem:[%s219 + $0x38] sm:$0xff]
      %v228 = vld [vmem:[%s219 + $0x40] sm:$0xff]
      %v229 = vld [vmem:[%s219 + $0x48] sm:$0xff]
      %v230 = vld [vmem:[%s219 + $0x50] sm:$0xff]
      %v231 = vld [vmem:[%s219 + $0x58] sm:$0xff]
      %v232 = vld [vmem:[%s219 + $0x60] sm:$0xff]
      %v233 = vld [vmem:[%s219 + $0x68] sm:$0xff]
      %v234 = vld [vmem:[%s219 + $0x70] sm:$0xff]
      %v235 = vld [vmem:[%s219 + $0x78] sm:$0xff]
      %v236 = vld [vmem:[%s219 + $0x80] sm:$0xff]
      %v237 = vld [vmem:[%s219 + $0x88] sm:$0xff]
      %v238 = vld [vmem:[%s219 + $0x90] sm:$0xff]
      %v239 = vld [vmem:[%s219 + $0x98] sm:$0xff]
      %v240 = vld [vmem:[%s219 + $0xa0] sm:$0xff]
      %v241 = vld [vmem:[%s219 + $0xa8] sm:$0xff]
      %v242 = vld [vmem:[%s219 + $0xb0] sm:$0xff]
      %v243 = vld [vmem:[%s219 + $0xb8] sm:$0xff]
      %v244 = vld [vmem:[%s219 + $0xc0] sm:$0xff]
      %v245 = vld [vmem:[%s219 + $0xc8] sm:$0xff]
      %v246 = vld [vmem:[%s219 + $0xd0] sm:$0xff]
      %v247 = vld [vmem:[%s219 + $0xd8] sm:$0xff]
      %v248 = vld [vmem:[%s219 + $0xe0] sm:$0xff]
      %v249 = vld [vmem:[%s219 + $0xe8] sm:$0xff]
      %v250 = vld [vmem:[%s219 + $0xf0] sm:$0xff]
      %v251 = vld [vmem:[%s219 + $0xf8] sm:$0xff]
      %252 = vmatprep.subr.mxu0 %v221
      %253 = vmatpush1.msra.mxu0 %v220
      %254 = vmatprep.subr.mxu0 %v223
      %255 = vmatpush1.msra.mxu0 %v222
      %256 = vmatprep.subr.mxu0 %v225
      %257 = vmatpush1.msra.mxu0 %v224
      %258 = vmatprep.subr.mxu0 %v227
      %259 = vmatpush1.msra.mxu0 %v226
      %260 = vmatprep.subr.mxu0 %v229
      %261 = vmatpush1.msra.mxu0 %v228
      %262 = vmatprep.subr.mxu0 %v231
      %263 = vmatpush1.msra.mxu0 %v230
      %264 = vmatprep.subr.mxu0 %v233
      %265 = vmatpush1.msra.mxu0 %v232
      %266 = vmatprep.subr.mxu0 %v235
      %267 = vmatpush1.msra.mxu0 %v234
      %268 = vmatprep.subr.mxu0 %v237
      %269 = vmatpush1.msra.mxu0 %v236
      %270 = vmatprep.subr.mxu0 %v239
      %271 = vmatpush1.msra.mxu0 %v238
      %272 = vmatprep.subr.mxu0 %v241
      %273 = vmatpush1.msra.mxu0 %v240
      %274 = vmatprep.subr.mxu0 %v243
      %275 = vmatpush1.msra.mxu0 %v242
      %276 = vmatprep.subr.mxu0 %v245
      %277 = vmatpush1.msra.mxu0 %v244
      %278 = vmatprep.subr.mxu0 %v247
      %279 = vmatpush1.msra.mxu0 %v246
      %280 = vmatprep.subr.mxu0 %v249
      %281 = vmatpush1.msra.mxu0 %v248
      %282 = vmatprep.subr.mxu0 %v251
      %283 = vmatpush1.msra.mxu0 %v250
      %284 = vmatprep.subr.mxu0 0.0
      %285 = vmatpush1.msra.mxu0 0.0
      %286 = vmatprep.subr.mxu0 0.0
      %287 = vmatpush1.msra.mxu0 0.0
      %288 = vmatprep.subr.mxu0 0.0
      %289 = vmatpush1.msra.mxu0 0.0
      %290 = vmatprep.subr.mxu0 0.0
      %291 = vmatpush1.msra.mxu0 0.0
      %292 = vmatprep.subr.mxu0 0.0
      %293 = vmatpush1.msra.mxu0 0.0
      %294 = vmatprep.subr.mxu0 0.0
      %295 = vmatpush1.msra.mxu0 0.0
      %296 = vmatprep.subr.mxu0 0.0
      %297 = vmatpush1.msra.mxu0 0.0
      %298 = vmatprep.subr.mxu0 0.0
      %299 = vmatpush1.msra.mxu0 0.0
      %300 = vmatprep.subr.mxu0 0.0
      %301 = vmatpush1.msra.mxu0 0.0
      %302 = vmatprep.subr.mxu0 0.0
      %303 = vmatpush1.msra.mxu0 0.0
      %304 = vmatprep.subr.mxu0 0.0
      %305 = vmatpush1.msra.mxu0 0.0
      %306 = vmatprep.subr.mxu0 0.0
      %307 = vmatpush1.msra.mxu0 0.0
      %308 = vmatprep.subr.mxu0 0.0
      %309 = vmatpush1.msra.mxu0 0.0
      %310 = vmatprep.subr.mxu0 0.0
      %311 = vmatpush1.msra.mxu0 0.0
      %312 = vmatprep.subr.mxu0 0.0
      %313 = vmatpush1.msra.mxu0 0.0
      %314 = vmatprep.subr.mxu0 0.0
      %315 = vmatpush1.msra.mxu0 0.0
      %316 = vmatprep.mubr.f32.mxu0 0.0
      %317 = vmatmul.mubr.f32.gmra.mrb[0].mxu0 %v211
      %v318 = vpop.f32.mrb[0].mxu0
      %v319 = vadd.f32 0.0, %v318
      %v320 = vpop.f32.mrb[0].mxu0
      %v321 = vadd.f32 0.0, %v320
      %322 = vmatprep.mubr.f32.mxu0 0.0
      %323 = vmatmul.mubr.f32.gmra.mrb[0].mxu0 %v212
      %v324 = vpop.f32.mrb[0].mxu0
      %v325 = vadd.f32 0.0, %v324
      %v326 = vpop.f32.mrb[0].mxu0
      %v327 = vadd.f32 0.0, %v326
      %328 = vmatprep.mubr.f32.mxu0 0.0
      %329 = vmatmul.mubr.f32.gmra.mrb[0].mxu0 %v213
      %v330 = vpop.f32.mrb[0].mxu0
      %v331 = vadd.f32 0.0, %v330
      %v332 = vpop.f32.mrb[0].mxu0
      %v333 = vadd.f32 0.0, %v332
      %334 = vmatprep.mubr.f32.mxu0 0.0
      %335 = vmatmul.mubr.f32.gmra.mrb[0].mxu0 %v214
      %v336 = vpop.f32.mrb[0].mxu0
      %v337 = vadd.f32 0.0, %v336
      %v338 = vpop.f32.mrb[0].mxu0
      %v339 = vadd.f32 0.0, %v338
      %340 = vmatprep.mubr.f32.mxu0 0.0
      %341 = vmatmul.mubr.f32.gmra.mrb[0].mxu0 %v215
      %v342 = vpop.f32.mrb[0].mxu0
      %v343 = vadd.f32 0.0, %v342
      %v344 = vpop.f32.mrb[0].mxu0
      %v345 = vadd.f32 0.0, %v344
      %346 = vmatprep.mubr.f32.mxu0 0.0
      %347 = vmatmul.mubr.f32.gmra.mrb[0].mxu0 %v216
      %v348 = vpop.f32.mrb[0].mxu0
      %v349 = vadd.f32 0.0, %v348
      %v350 = vpop.f32.mrb[0].mxu0
      %v351 = vadd.f32 0.0, %v350
      %352 = vmatprep.mubr.f32.mxu0 0.0
      %353 = vmatmul.mubr.f32.gmra.mrb[0].mxu0 %v217
      %v354 = vpop.f32.mrb[0].mxu0
      %v355 = vadd.f32 0.0, %v354
      %v356 = vpop.f32.mrb[0].mxu0
      %v357 = vadd.f32 0.0, %v356
      %358 = vmatprep.mubr.f32.mxu0 0.0
      %359 = vmatmul.mubr.f32.gmra.mrb[0].mxu0 %v218
      %v360 = vpop.f32.mrb[0].mxu0
      %v361 = vadd.f32 0.0, %v360
      %v362 = vpop.f32.mrb[0].mxu0
      %v363 = vadd.f32 0.0, %v362
      %364 = vdwg.mxu0
      %365 = vmatprep.subr.mxu0 %v180
      %366 = vmatpush1.msra.mxu0 %v179
      %367 = vmatprep.subr.mxu0 %v182
      %368 = vmatpush1.msra.mxu0 %v181
      %369 = vmatprep.subr.mxu0 %v184
      %370 = vmatpush1.msra.mxu0 %v183
      %371 = vmatprep.subr.mxu0 %v186
      %372 = vmatpush1.msra.mxu0 %v185
      %373 = vmatprep.subr.mxu0 %v188
      %374 = vmatpush1.msra.mxu0 %v187
      %375 = vmatprep.subr.mxu0 %v190
      %376 = vmatpush1.msra.mxu0 %v189
      %377 = vmatprep.subr.mxu0 %v192
      %378 = vmatpush1.msra.mxu0 %v191
      %379 = vmatprep.subr.mxu0 %v194
      %380 = vmatpush1.msra.mxu0 %v193
      %381 = vmatprep.subr.mxu0 %v196
      %382 = vmatpush1.msra.mxu0 %v195
      %383 = vmatprep.subr.mxu0 %v198
      %384 = vmatpush1.msra.mxu0 %v197
      %385 = vmatprep.subr.mxu0 %v200
      %386 = vmatpush1.msra.mxu0 %v199
      %387 = vmatprep.subr.mxu0 %v202
      %388 = vmatpush1.msra.mxu0 %v201
      %389 = vmatprep.subr.mxu0 %v204
      %390 = vmatpush1.msra.mxu0 %v203
      %391 = vmatprep.subr.mxu0 %v206
      %392 = vmatpush1.msra.mxu0 %v205
      %393 = vmatprep.subr.mxu0 %v208
      %394 = vmatpush1.msra.mxu0 %v207
      %395 = vmatprep.subr.mxu0 %v210
      %396 = vmatpush1.msra.mxu0 %v209
      %397 = vmatprep.subr.mxu0 0.0
      %398 = vmatpush1.msra.mxu0 0.0
      %399 = vmatprep.subr.mxu0 0.0
      %400 = vmatpush1.msra.mxu0 0.0
      %401 = vmatprep.subr.mxu0 0.0
      %402 = vmatpush1.msra.mxu0 0.0
      %403 = vmatprep.subr.mxu0 0.0
      %404 = vmatpush1.msra.mxu0 0.0
      %405 = vmatprep.subr.mxu0 0.0
      %406 = vmatpush1.msra.mxu0 0.0
      %407 = vmatprep.subr.mxu0 0.0
      %408 = vmatpush1.msra.mxu0 0.0
      %409 = vmatprep.subr.mxu0 0.0
      %410 = vmatpush1.msra.mxu0 0.0
      %411 = vmatprep.subr.mxu0 0.0
      %412 = vmatpush1.msra.mxu0 0.0
      %413 = vmatprep.subr.mxu0 0.0
      %414 = vmatpush1.msra.mxu0 0.0
      %415 = vmatprep.subr.mxu0 0.0
      %416 = vmatpush1.msra.mxu0 0.0
      %417 = vmatprep.subr.mxu0 0.0
      %418 = vmatpush1.msra.mxu0 0.0
      %419 = vmatprep.subr.mxu0 0.0
      %420 = vmatpush1.msra.mxu0 0.0
      %421 = vmatprep.subr.mxu0 0.0
      %422 = vmatpush1.msra.mxu0 0.0
      %423 = vmatprep.subr.mxu0 0.0
      %424 = vmatpush1.msra.mxu0 0.0
      %425 = vmatprep.subr.mxu0 0.0
      %426 = vmatpush1.msra.mxu0 0.0
      %427 = vmatprep.subr.mxu0 0.0
      %428 = vmatpush1.msra.mxu0 0.0
      %429 = vmatprep.mubr.f32.mxu0 0.0
      %430 = vmatmul.mubr.f32.gmra.mrb[0].mxu0 %v171
      %v431 = vpop.f32.mrb[0].mxu0
      %v432 = vadd.f32 %v319, %v431
      %v433 = vpop.f32.mrb[0].mxu0
      %v434 = vadd.f32 %v321, %v433
      %435 = vmatprep.mubr.f32.mxu0 0.0
      %436 = vmatmul.mubr.f32.gmra.mrb[0].mxu0 %v172
      %v437 = vpop.f32.mrb[0].mxu0
      %v438 = vadd.f32 %v325, %v437
      %v439 = vpop.f32.mrb[0].mxu0
      %v440 = vadd.f32 %v327, %v439
      %441 = vmatprep.mubr.f32.mxu0 0.0
      %442 = vmatmul.mubr.f32.gmra.mrb[0].mxu0 %v173
      %v443 = vpop.f32.mrb[0].mxu0
      %v444 = vadd.f32 %v331, %v443
      %v445 = vpop.f32.mrb[0].mxu0
      %v446 = vadd.f32 %v333, %v445
      %447 = vmatprep.mubr.f32.mxu0 0.0
      %448 = vmatmul.mubr.f32.gmra.mrb[0].mxu0 %v174
      %v449 = vpop.f32.mrb[0].mxu0
      %v450 = vadd.f32 %v337, %v449
      %v451 = vpop.f32.mrb[0].mxu0
      %v452 = vadd.f32 %v339, %v451
      %453 = vmatprep.mubr.f32.mxu0 0.0
      %454 = vmatmul.mubr.f32.gmra.mrb[0].mxu0 %v175
      %v455 = vpop.f32.mrb[0].mxu0
      %v456 = vadd.f32 %v343, %v455
      %v457 = vpop.f32.mrb[0].mxu0
      %v458 = vadd.f32 %v345, %v457
      %459 = vmatprep.mubr.f32.mxu0 0.0
      %460 = vmatmul.mubr.f32.gmra.mrb[0].mxu0 %v176
      %v461 = vpop.f32.mrb[0].mxu0
      %v462 = vadd.f32 %v349, %v461
      %v463 = vpop.f32.mrb[0].mxu0
      %v464 = vadd.f32 %v351, %v463
      %465 = vmatprep.mubr.f32.mxu0 0.0
      %466 = vmatmul.mubr.f32.gmra.mrb[0].mxu0 %v177
      %v467 = vpop.f32.mrb[0].mxu0
      %v468 = vadd.f32 %v355, %v467
      %v469 = vpop.f32.mrb[0].mxu0
      %v470 = vadd.f32 %v357, %v469
      %471 = vmatprep.mubr.f32.mxu0 0.0
      %472 = vmatmul.mubr.f32.gmra.mrb[0].mxu0 %v178
      %v473 = vpop.f32.mrb[0].mxu0
      %v474 = vadd.f32 %v361, %v473
      %v475 = vpop.f32.mrb[0].mxu0
      %v476 = vadd.f32 %v363, %v475
      %477 = vdwg.mxu0
      %s478 = scalar_lea.vmem %s165, 16
      %v479 = vld [vmem:[%s478] sm:$0xff]
      %v480 = vld [vmem:[%s478 + $0x10] sm:$0xff]
      %v481 = vld [vmem:[%s478 + $0x20] sm:$0xff]
      %v482 = vld [vmem:[%s478 + $0x30] sm:$0xff]
      %v483 = vld [vmem:[%s478 + $0x40] sm:$0xff]
      %v484 = vld [vmem:[%s478 + $0x50] sm:$0xff]
      %v485 = vld [vmem:[%s478 + $0x60] sm:$0xff]
      %v486 = vld [vmem:[%s478 + $0x70] sm:$0xff]
      %s487 = scalar_lea.vmem %s1, 512
      %v488 = vld [vmem:[%s487] sm:$0xff]
      %v489 = vld [vmem:[%s487 + $0x8] sm:$0xff]
      %v490 = vld [vmem:[%s487 + $0x10] sm:$0xff]
      %v491 = vld [vmem:[%s487 + $0x18] sm:$0xff]
      %v492 = vld [vmem:[%s487 + $0x20] sm:$0xff]
      %v493 = vld [vmem:[%s487 + $0x28] sm:$0xff]
      %v494 = vld [vmem:[%s487 + $0x30] sm:$0xff]
      %v495 = vld [vmem:[%s487 + $0x38] sm:$0xff]
      %v496 = vld [vmem:[%s487 + $0x40] sm:$0xff]
      %v497 = vld [vmem:[%s487 + $0x48] sm:$0xff]
      %v498 = vld [vmem:[%s487 + $0x50] sm:$0xff]
      %v499 = vld [vmem:[%s487 + $0x58] sm:$0xff]
      %v500 = vld [vmem:[%s487 + $0x60] sm:$0xff]
      %v501 = vld [vmem:[%s487 + $0x68] sm:$0xff]
      %v502 = vld [vmem:[%s487 + $0x70] sm:$0xff]
      %v503 = vld [vmem:[%s487 + $0x78] sm:$0xff]
      %v504 = vld [vmem:[%s487 + $0x80] sm:$0xff]
      %v505 = vld [vmem:[%s487 + $0x88] sm:$0xff]
      %v506 = vld [vmem:[%s487 + $0x90] sm:$0xff]
      %v507 = vld [vmem:[%s487 + $0x98] sm:$0xff]
      %v508 = vld [vmem:[%s487 + $0xa0] sm:$0xff]
      %v509 = vld [vmem:[%s487 + $0xa8] sm:$0xff]
      %v510 = vld [vmem:[%s487 + $0xb0] sm:$0xff]
      %v511 = vld [vmem:[%s487 + $0xb8] sm:$0xff]
      %v512 = vld [vmem:[%s487 + $0xc0] sm:$0xff]
      %v513 = vld [vmem:[%s487 + $0xc8] sm:$0xff]
      %v514 = vld [vmem:[%s487 + $0xd0] sm:$0xff]
      %v515 = vld [vmem:[%s487 + $0xd8] sm:$0xff]
      %v516 = vld [vmem:[%s487 + $0xe0] sm:$0xff]
      %v517 = vld [vmem:[%s487 + $0xe8] sm:$0xff]
      %v518 = vld [vmem:[%s487 + $0xf0] sm:$0xff]
      %v519 = vld [vmem:[%s487 + $0xf8] sm:$0xff]
      %520 = vmatprep.subr.mxu0 %v489
      %521 = vmatpush1.msra.mxu0 %v488
      %522 = vmatprep.subr.mxu0 %v491
      %523 = vmatpush1.msra.mxu0 %v490
      %524 = vmatprep.subr.mxu0 %v493
      %525 = vmatpush1.msra.mxu0 %v492
      %526 = vmatprep.subr.mxu0 %v495
      %527 = vmatpush1.msra.mxu0 %v494
      %528 = vmatprep.subr.mxu0 %v497
      %529 = vmatpush1.msra.mxu0 %v496
      %530 = vmatprep.subr.mxu0 %v499
      %531 = vmatpush1.msra.mxu0 %v498
      %532 = vmatprep.subr.mxu0 %v501
      %533 = vmatpush1.msra.mxu0 %v500
      %534 = vmatprep.subr.mxu0 %v503
      %535 = vmatpush1.msra.mxu0 %v502
      %536 = vmatprep.subr.mxu0 %v505
      %537 = vmatpush1.msra.mxu0 %v504
      %538 = vmatprep.subr.mxu0 %v507
      %539 = vmatpush1.msra.mxu0 %v506
      %540 = vmatprep.subr.mxu0 %v509
      %541 = vmatpush1.msra.mxu0 %v508
      %542 = vmatprep.subr.mxu0 %v511
      %543 = vmatpush1.msra.mxu0 %v510
      %544 = vmatprep.subr.mxu0 %v513
      %545 = vmatpush1.msra.mxu0 %v512
      %546 = vmatprep.subr.mxu0 %v515
      %547 = vmatpush1.msra.mxu0 %v514
      %548 = vmatprep.subr.mxu0 %v517
      %549 = vmatpush1.msra.mxu0 %v516
      %550 = vmatprep.subr.mxu0 %v519
      %551 = vmatpush1.msra.mxu0 %v518
      %552 = vmatprep.subr.mxu0 0.0
      %553 = vmatpush1.msra.mxu0 0.0
      %554 = vmatprep.subr.mxu0 0.0
      %555 = vmatpush1.msra.mxu0 0.0
      %556 = vmatprep.subr.mxu0 0.0
      %557 = vmatpush1.msra.mxu0 0.0
      %558 = vmatprep.subr.mxu0 0.0
      %559 = vmatpush1.msra.mxu0 0.0
      %560 = vmatprep.subr.mxu0 0.0
      %561 = vmatpush1.msra.mxu0 0.0
      %562 = vmatprep.subr.mxu0 0.0
      %563 = vmatpush1.msra.mxu0 0.0
      %564 = vmatprep.subr.mxu0 0.0
      %565 = vmatpush1.msra.mxu0 0.0
      %566 = vmatprep.subr.mxu0 0.0
      %567 = vmatpush1.msra.mxu0 0.0
      %568 = vmatprep.subr.mxu0 0.0
      %569 = vmatpush1.msra.mxu0 0.0
      %570 = vmatprep.subr.mxu0 0.0
      %571 = vmatpush1.msra.mxu0 0.0
      %572 = vmatprep.subr.mxu0 0.0
      %573 = vmatpush1.msra.mxu0 0.0
      %574 = vmatprep.subr.mxu0 0.0
      %575 = vmatpush1.msra.mxu0 0.0
      %576 = vmatprep.subr.mxu0 0.0
      %577 = vmatpush1.msra.mxu0 0.0
      %578 = vmatprep.subr.mxu0 0.0
      %579 = vmatpush1.msra.mxu0 0.0
      %580 = vmatprep.subr.mxu0 0.0
      %581 = vmatpush1.msra.mxu0 0.0
      %582 = vmatprep.subr.mxu0 0.0
      %583 = vmatpush1.msra.mxu0 0.0
      %584 = vmatprep.mubr.f32.mxu0 0.0
      %585 = vmatmul.mubr.f32.gmra.mrb[0].mxu0 %v479
      %v586 = vpop.f32.mrb[0].mxu0
      %v587 = vadd.f32 0.0, %v586
      %v588 = vpop.f32.mrb[0].mxu0
      %v589 = vadd.f32 0.0, %v588
      %590 = vmatprep.mubr.f32.mxu0 0.0
      %591 = vmatmul.mubr.f32.gmra.mrb[0].mxu0 %v480
      %v592 = vpop.f32.mrb[0].mxu0
      %v593 = vadd.f32 0.0, %v592
      %v594 = vpop.f32.mrb[0].mxu0
      %v595 = vadd.f32 0.0, %v594
      %596 = vmatprep.mubr.f32.mxu0 0.0
      %597 = vmatmul.mubr.f32.gmra.mrb[0].mxu0 %v481
      %v598 = vpop.f32.mrb[0].mxu0
      %v599 = vadd.f32 0.0, %v598
      %v600 = vpop.f32.mrb[0].mxu0
      %v601 = vadd.f32 0.0, %v600
      %602 = vmatprep.mubr.f32.mxu0 0.0
      %603 = vmatmul.mubr.f32.gmra.mrb[0].mxu0 %v482
      %v604 = vpop.f32.mrb[0].mxu0
      %v605 = vadd.f32 0.0, %v604
      %v606 = vpop.f32.mrb[0].mxu0
      %v607 = vadd.f32 0.0, %v606
      %608 = vmatprep.mubr.f32.mxu0 0.0
      %609 = vmatmul.mubr.f32.gmra.mrb[0].mxu0 %v483
      %v610 = vpop.f32.mrb[0].mxu0
      %v611 = vadd.f32 0.0, %v610
      %v612 = vpop.f32.mrb[0].mxu0
      %v613 = vadd.f32 0.0, %v612
      %614 = vmatprep.mubr.f32.mxu0 0.0
      %615 = vmatmul.mubr.f32.gmra.mrb[0].mxu0 %v484
      %v616 = vpop.f32.mrb[0].mxu0
      %v617 = vadd.f32 0.0, %v616
      %v618 = vpop.f32.mrb[0].mxu0
      %v619 = vadd.f32 0.0, %v618
      %620 = vmatprep.mubr.f32.mxu0 0.0
      %621 = vmatmul.mubr.f32.gmra.mrb[0].mxu0 %v485
      %v622 = vpop.f32.mrb[0].mxu0
      %v623 = vadd.f32 0.0, %v622
      %v624 = vpop.f32.mrb[0].mxu0
      %v625 = vadd.f32 0.0, %v624
      %626 = vmatprep.mubr.f32.mxu0 0.0
      %627 = vmatmul.mubr.f32.gmra.mrb[0].mxu0 %v486
      %v628 = vpop.f32.mrb[0].mxu0
      %v629 = vadd.f32 0.0, %v628
      %v630 = vpop.f32.mrb[0].mxu0
      %v631 = vadd.f32 0.0, %v630
      %632 = vdwg.mxu0
      %v633 = vadd.f32 %v432, %v587
      %v634 = vadd.f32 %v434, %v589
      %v635 = vadd.f32 %v438, %v593
      %v636 = vadd.f32 %v440, %v595
      %v637 = vadd.f32 %v444, %v599
      %v638 = vadd.f32 %v446, %v601
      %v639 = vadd.f32 %v450, %v605
      %v640 = vadd.f32 %v452, %v607
      %v641 = vadd.f32 %v456, %v611
      %v642 = vadd.f32 %v458, %v613
      %v643 = vadd.f32 %v462, %v617
      %v644 = vadd.f32 %v464, %v619
      %v645 = vadd.f32 %v468, %v623
      %v646 = vadd.f32 %v470, %v625
      %v647 = vadd.f32 %v474, %v629
      %v648 = vadd.f32 %v476, %v631
      %v649 = vld [vmem:[%s478 + $0x1] sm:$0xff]
      %v650 = vld [vmem:[%s478 + $0x11] sm:$0xff]
      %v651 = vld [vmem:[%s478 + $0x21] sm:$0xff]
      %v652 = vld [vmem:[%s478 + $0x31] sm:$0xff]
      %v653 = vld [vmem:[%s478 + $0x41] sm:$0xff]
      %v654 = vld [vmem:[%s478 + $0x51] sm:$0xff]
      %v655 = vld [vmem:[%s478 + $0x61] sm:$0xff]
      %v656 = vld [vmem:[%s478 + $0x71] sm:$0xff]
      %s657 = scalar_lea.vmem %s1, 768
      %v658 = vld [vmem:[%s657] sm:$0xff]
      %v659 = vld [vmem:[%s657 + $0x8] sm:$0xff]
      %v660 = vld [vmem:[%s657 + $0x10] sm:$0xff]
      %v661 = vld [vmem:[%s657 + $0x18] sm:$0xff]
      %v662 = vld [vmem:[%s657 + $0x20] sm:$0xff]
      %v663 = vld [vmem:[%s657 + $0x28] sm:$0xff]
      %v664 = vld [vmem:[%s657 + $0x30] sm:$0xff]
      %v665 = vld [vmem:[%s657 + $0x38] sm:$0xff]
      %v666 = vld [vmem:[%s657 + $0x40] sm:$0xff]
      %v667 = vld [vmem:[%s657 + $0x48] sm:$0xff]
      %v668 = vld [vmem:[%s657 + $0x50] sm:$0xff]
      %v669 = vld [vmem:[%s657 + $0x58] sm:$0xff]
      %v670 = vld [vmem:[%s657 + $0x60] sm:$0xff]
      %v671 = vld [vmem:[%s657 + $0x68] sm:$0xff]
      %v672 = vld [vmem:[%s657 + $0x70] sm:$0xff]
      %v673 = vld [vmem:[%s657 + $0x78] sm:$0xff]
      %v674 = vld [vmem:[%s657 + $0x80] sm:$0xff]
      %v675 = vld [vmem:[%s657 + $0x88] sm:$0xff]
      %v676 = vld [vmem:[%s657 + $0x90] sm:$0xff]
      %v677 = vld [vmem:[%s657 + $0x98] sm:$0xff]
      %v678 = vld [vmem:[%s657 + $0xa0] sm:$0xff]
      %v679 = vld [vmem:[%s657 + $0xa8] sm:$0xff]
      %v680 = vld [vmem:[%s657 + $0xb0] sm:$0xff]
      %v681 = vld [vmem:[%s657 + $0xb8] sm:$0xff]
      %v682 = vld [vmem:[%s657 + $0xc0] sm:$0xff]
      %v683 = vld [vmem:[%s657 + $0xc8] sm:$0xff]
      %v684 = vld [vmem:[%s657 + $0xd0] sm:$0xff]
      %v685 = vld [vmem:[%s657 + $0xd8] sm:$0xff]
      %v686 = vld [vmem:[%s657 + $0xe0] sm:$0xff]
      %v687 = vld [vmem:[%s657 + $0xe8] sm:$0xff]
      %v688 = vld [vmem:[%s657 + $0xf0] sm:$0xff]
      %v689 = vld [vmem:[%s657 + $0xf8] sm:$0xff]
      %690 = vmatprep.subr.mxu0 %v659
      %691 = vmatpush1.msra.mxu0 %v658
      %692 = vmatprep.subr.mxu0 %v661
      %693 = vmatpush1.msra.mxu0 %v660
      %694 = vmatprep.subr.mxu0 %v663
      %695 = vmatpush1.msra.mxu0 %v662
      %696 = vmatprep.subr.mxu0 %v665
      %697 = vmatpush1.msra.mxu0 %v664
      %698 = vmatprep.subr.mxu0 %v667
      %699 = vmatpush1.msra.mxu0 %v666
      %700 = vmatprep.subr.mxu0 %v669
      %701 = vmatpush1.msra.mxu0 %v668
      %702 = vmatprep.subr.mxu0 %v671
      %703 = vmatpush1.msra.mxu0 %v670
      %704 = vmatprep.subr.mxu0 %v673
      %705 = vmatpush1.msra.mxu0 %v672
      %706 = vmatprep.subr.mxu0 %v675
      %707 = vmatpush1.msra.mxu0 %v674
      %708 = vmatprep.subr.mxu0 %v677
      %709 = vmatpush1.msra.mxu0 %v676
      %710 = vmatprep.subr.mxu0 %v679
      %711 = vmatpush1.msra.mxu0 %v678
      %712 = vmatprep.subr.mxu0 %v681
      %713 = vmatpush1.msra.mxu0 %v680
      %714 = vmatprep.subr.mxu0 %v683
      %715 = vmatpush1.msra.mxu0 %v682
      %716 = vmatprep.subr.mxu0 %v685
      %717 = vmatpush1.msra.mxu0 %v684
      %718 = vmatprep.subr.mxu0 %v687
      %719 = vmatpush1.msra.mxu0 %v686
      %720 = vmatprep.subr.mxu0 %v689
      %721 = vmatpush1.msra.mxu0 %v688
      %722 = vmatprep.subr.mxu0 0.0
      %723 = vmatpush1.msra.mxu0 0.0
      %724 = vmatprep.subr.mxu0 0.0
      %725 = vmatpush1.msra.mxu0 0.0
      %726 = vmatprep.subr.mxu0 0.0
      %727 = vmatpush1.msra.mxu0 0.0
      %728 = vmatprep.subr.mxu0 0.0
      %729 = vmatpush1.msra.mxu0 0.0
      %730 = vmatprep.subr.mxu0 0.0
      %731 = vmatpush1.msra.mxu0 0.0
      %732 = vmatprep.subr.mxu0 0.0
      %733 = vmatpush1.msra.mxu0 0.0
      %734 = vmatprep.subr.mxu0 0.0
      %735 = vmatpush1.msra.mxu0 0.0
      %736 = vmatprep.subr.mxu0 0.0
      %737 = vmatpush1.msra.mxu0 0.0
      %738 = vmatprep.subr.mxu0 0.0
      %739 = vmatpush1.msra.mxu0 0.0
      %740 = vmatprep.subr.mxu0 0.0
      %741 = vmatpush1.msra.mxu0 0.0
      %742 = vmatprep.subr.mxu0 0.0
      %743 = vmatpush1.msra.mxu0 0.0
      %744 = vmatprep.subr.mxu0 0.0
      %745 = vmatpush1.msra.mxu0 0.0
      %746 = vmatprep.subr.mxu0 0.0
      %747 = vmatpush1.msra.mxu0 0.0
      %748 = vmatprep.subr.mxu0 0.0
      %749 = vmatpush1.msra.mxu0 0.0
      %750 = vmatprep.subr.mxu0 0.0
      %751 = vmatpush1.msra.mxu0 0.0
      %752 = vmatprep.subr.mxu0 0.0
      %753 = vmatpush1.msra.mxu0 0.0
      %754 = vmatprep.mubr.f32.mxu0 0.0
      %755 = vmatmul.mubr.f32.gmra.mrb[0].mxu0 %v649
      %v756 = vpop.f32.mrb[0].mxu0
      %v757 = vadd.f32 0.0, %v756
      %v758 = vpop.f32.mrb[0].mxu0
      %v759 = vadd.f32 0.0, %v758
      %760 = vmatprep.mubr.f32.mxu0 0.0
      %761 = vmatmul.mubr.f32.gmra.mrb[0].mxu0 %v650
      %v762 = vpop.f32.mrb[0].mxu0
      %v763 = vadd.f32 0.0, %v762
      %v764 = vpop.f32.mrb[0].mxu0
      %v765 = vadd.f32 0.0, %v764
      %766 = vmatprep.mubr.f32.mxu0 0.0
      %767 = vmatmul.mubr.f32.gmra.mrb[0].mxu0 %v651
      %v768 = vpop.f32.mrb[0].mxu0
      %v769 = vadd.f32 0.0, %v768
      %v770 = vpop.f32.mrb[0].mxu0
      %v771 = vadd.f32 0.0, %v770
      %772 = vmatprep.mubr.f32.mxu0 0.0
      %773 = vmatmul.mubr.f32.gmra.mrb[0].mxu0 %v652
      %v774 = vpop.f32.mrb[0].mxu0
      %v775 = vadd.f32 0.0, %v774
      %v776 = vpop.f32.mrb[0].mxu0
      %v777 = vadd.f32 0.0, %v776
      %778 = vmatprep.mubr.f32.mxu0 0.0
      %779 = vmatmul.mubr.f32.gmra.mrb[0].mxu0 %v653
      %v780 = vpop.f32.mrb[0].mxu0
      %v781 = vadd.f32 0.0, %v780
      %v782 = vpop.f32.mrb[0].mxu0
      %v783 = vadd.f32 0.0, %v782
      %784 = vmatprep.mubr.f32.mxu0 0.0
      %785 = vmatmul.mubr.f32.gmra.mrb[0].mxu0 %v654
      %v786 = vpop.f32.mrb[0].mxu0
      %v787 = vadd.f32 0.0, %v786
      %v788 = vpop.f32.mrb[0].mxu0
      %v789 = vadd.f32 0.0, %v788
      %790 = vmatprep.mubr.f32.mxu0 0.0
      %791 = vmatmul.mubr.f32.gmra.mrb[0].mxu0 %v655
      %v792 = vpop.f32.mrb[0].mxu0
      %v793 = vadd.f32 0.0, %v792
      %v794 = vpop.f32.mrb[0].mxu0
      %v795 = vadd.f32 0.0, %v794
      %796 = vmatprep.mubr.f32.mxu0 0.0
      %797 = vmatmul.mubr.f32.gmra.mrb[0].mxu0 %v656
      %v798 = vpop.f32.mrb[0].mxu0
      %v799 = vadd.f32 0.0, %v798
      %v800 = vpop.f32.mrb[0].mxu0
      %v801 = vadd.f32 0.0, %v800
      %802 = vdwg.mxu0
      %v803 = vadd.f32 %v633, %v757
      %v804 = vadd.f32 %v634, %v759
      %v805 = vadd.f32 %v635, %v763
      %v806 = vadd.f32 %v636, %v765
      %v807 = vadd.f32 %v637, %v769
      %v808 = vadd.f32 %v638, %v771
      %v809 = vadd.f32 %v639, %v775
      %v810 = vadd.f32 %v640, %v777
      %v811 = vadd.f32 %v641, %v781
      %v812 = vadd.f32 %v642, %v783
      %v813 = vadd.f32 %v643, %v787
      %v814 = vadd.f32 %v644, %v789
      %v815 = vadd.f32 %v645, %v793
      %v816 = vadd.f32 %v646, %v795
      %v817 = vadd.f32 %v647, %v799
      %v818 = vadd.f32 %v648, %v801
      %v819 = vld [vmem:[%s2] sm:$0x3]
      %v821 = vlaneseq
      %v822 = vshrl.u32 %v821, 7
      %v823 = vsub.s32 0, %v822
      %v824 = vrot.slane %v819, %v823
      %v825 = vlaneseq
      %v826 = vshrl.u32 %v825, 7
      %v827 = vsub.s32 1, %v826
      %v828 = vrot.slane %v819, %v827
      %v831 = vadd.f32 %v803, %v824
      %v832 = vadd.f32 %v804, %v828
      %v833 = vadd.f32 %v805, %v824
      %v834 = vadd.f32 %v806, %v828
      %v835 = vadd.f32 %v807, %v824
      %v836 = vadd.f32 %v808, %v828
      %v837 = vadd.f32 %v809, %v824
      %v838 = vadd.f32 %v810, %v828
      %v839 = vadd.f32 %v811, %v824
      %v840 = vadd.f32 %v812, %v828
      %v841 = vadd.f32 %v813, %v824
      %v842 = vadd.f32 %v814, %v828
      %v843 = vadd.f32 %v815, %v824
      %v844 = vadd.f32 %v816, %v828
      %v845 = vadd.f32 %v817, %v824
      %v846 = vadd.f32 %v818, %v828
      %v847 = vmax.f32 %v831, 0.0
      %v848 = vmax.f32 %v832, 0.0
      %v849 = vmax.f32 %v833, 0.0
      %v850 = vmax.f32 %v834, 0.0
      %v851 = vmax.f32 %v835, 0.0
      %v852 = vmax.f32 %v836, 0.0
      %v853 = vmax.f32 %v837, 0.0
      %v854 = vmax.f32 %v838, 0.0
      %v855 = vmax.f32 %v839, 0.0
      %v856 = vmax.f32 %v840, 0.0
      %v857 = vmax.f32 %v841, 0.0
      %v858 = vmax.f32 %v842, 0.0
      %v859 = vmax.f32 %v843, 0.0
      %v860 = vmax.f32 %v844, 0.0
      %v861 = vmax.f32 %v845, 0.0
      %v862 = vmax.f32 %v846, 0.0
      %871 = vrot.lane.b32.xlu0 %v847, 64
      %v872 = vpop.permute.xlu0 %871
      %873 = vrot.lane.b32.xlu0 %v849, 64
      %v874 = vpop.permute.xlu0 %873
      %875 = vrot.lane.b32.xlu0 %v851, 64
      %v876 = vpop.permute.xlu0 %875
      %877 = vrot.lane.b32.xlu0 %v853, 64
      %v878 = vpop.permute.xlu0 %877
      %879 = vrot.lane.b32.xlu0 %v855, 64
      %v880 = vpop.permute.xlu0 %879
      %881 = vrot.lane.b32.xlu0 %v857, 64
      %v882 = vpop.permute.xlu0 %881
      %883 = vrot.lane.b32.xlu0 %v859, 64
      %v884 = vpop.permute.xlu0 %883
      %885 = vrot.lane.b32.xlu0 %v861, 64
      %v886 = vpop.permute.xlu0 %885
      %v895 = vmax.f32 %v847, %v872
      %v896 = vmax.f32 %v849, %v874
      %v897 = vmax.f32 %v851, %v876
      %v898 = vmax.f32 %v853, %v878
      %v899 = vmax.f32 %v855, %v880
      %v900 = vmax.f32 %v857, %v882
      %v901 = vmax.f32 %v859, %v884
      %v902 = vmax.f32 %v861, %v886
      %911 = vrot.lane.b32.xlu0 %v848, 64
      %v912 = vpop.permute.xlu0 %911
      %913 = vrot.lane.b32.xlu0 %v850, 64
      %v914 = vpop.permute.xlu0 %913
      %915 = vrot.lane.b32.xlu0 %v852, 64
      %v916 = vpop.permute.xlu0 %915
      %917 = vrot.lane.b32.xlu0 %v854, 64
      %v918 = vpop.permute.xlu0 %917
      %919 = vrot.lane.b32.xlu0 %v856, 64
      %v920 = vpop.permute.xlu0 %919
      %921 = vrot.lane.b32.xlu0 %v858, 64
      %v922 = vpop.permute.xlu0 %921
      %923 = vrot.lane.b32.xlu0 %v860, 64
      %v924 = vpop.permute.xlu0 %923
      %925 = vrot.lane.b32.xlu0 %v862, 64
      %v926 = vpop.permute.xlu0 %925
      %v935 = vmax.f32 %v848, %v912
      %v936 = vmax.f32 %v850, %v914
      %v937 = vmax.f32 %v852, %v916
      %v938 = vmax.f32 %v854, %v918
      %v939 = vmax.f32 %v856, %v920
      %v940 = vmax.f32 %v858, %v922
      %v941 = vmax.f32 %v860, %v924
      %v942 = vmax.f32 %v862, %v926
      %v943 = vmax.f32 %v895, %v935
      %v944 = vmax.f32 %v896, %v936
      %v945 = vmax.f32 %v897, %v937
      %v946 = vmax.f32 %v898, %v938
      %v947 = vmax.f32 %v899, %v939
      %v948 = vmax.f32 %v900, %v940
      %v949 = vmax.f32 %v901, %v941
      %v950 = vmax.f32 %v902, %v942
      %vm951 = vcmask 523264
      %952 = vst.msk [vmem:[%s170] sm:$0xff] %vm951, %v943
      %953 = vst.msk [vmem:[%s170 + $0x8] sm:$0xff] %vm951, %v944
      %954 = vst.msk [vmem:[%s170 + $0x10] sm:$0xff] %vm951, %v945
      %955 = vst.msk [vmem:[%s170 + $0x18] sm:$0xff] %vm951, %v946
      %956 = vst.msk [vmem:[%s170 + $0x20] sm:$0xff] %vm951, %v947
      %957 = vst.msk [vmem:[%s170 + $0x28] sm:$0xff] %vm951, %v948
      %958 = vst.msk [vmem:[%s170 + $0x30] sm:$0xff] %vm951, %v949
      %959 = vst.msk [vmem:[%s170 + $0x38] sm:$0xff] %vm951, %v950
      %p960 = scmp.lt.s32.totalorder %s14, 1
      %s961 = scalar_select %p960, %s14, 1
      %s962 = smul.addr %s961, 8
      %s963 = smul.addr %s962, 8
      %s964 = scalar_lea.vmem %s3, %s963
      // Predicated region
      $region33: #{simple_cnn_forward.4} parent=31 // pred_check
        %p965 = pneg %p100
      $region34: #{simple_cnn_forward.4} parent=31 // pred_check_branch
        %967 = sbr.rel (%p965) target = $region36
      $region35: #{simple_cnn_forward.4} parent=31 // pred_region
        _
      $region36: #{simple_cnn_forward.4} parent=31 // pred_fallthru
        _
    $region32: #{simple_cnn_forward.4} parent=5 // pred_fallthru
      _
    %p968 = scmp.le.s32.totalorder 2, %s9
    // Predicated region
    $region37: #{simple_cnn_forward.4} parent=5 // pred_check
      %p969 = pneg %p968
    $region38: #{simple_cnn_forward.4} parent=5 // pred_check_branch
      %971 = sbr.rel (%p969) target = $region40
    $region39: #{simple_cnn_forward.4} parent=5 // pred_region
      %s972 = ssub.s32 %s9, 2
      // Predicated region
      $region41: #{simple_cnn_forward.4} parent=39 // pred_check
        %p973 = pneg %p106
      $region42: #{simple_cnn_forward.4} parent=39 // pred_check_branch
        %975 = sbr.rel (%p973) target = $region44
      $region43: #{simple_cnn_forward.4} parent=39 // pred_region
        %p976 = scmp.lt.s32.totalorder %s15, 1
        %s977 = scalar_select %p976, %s15, 1
        %s978 = smul.addr %s977, 8
        %s979 = smul.addr %s978, 8
        %s980 = scalar_lea.vmem %s3, %s979
      $region44: #{simple_cnn_forward.4} parent=39 // pred_fallthru
        _
    $region40: #{simple_cnn_forward.4} parent=5 // pred_fallthru
      _
  $region6: #{simple_cnn_forward.4} parent=0 // loop_footer
    %s13 = sadd.s32 1, %s9
  $region7: #{simple_cnn_forward.4} parent=0 // loop_footer_branch
    %8 = sbr.rel target = $region3
  $region8: #{simple_cnn_forward.4} parent=0 // loop_exit
    _

// kernel: simple_cnn_forward.5
$region0: #{simple_cnn_forward.5}
  #allocation0 [shape = 'u32[]', space=smem, size = 0x4, offset = 0x4, fixed_abs, tag = 'smem constant byte address 0x4 - core index']
  #allocation1 [shape = 'u32[144,128]{1,0:T(1,128)}', space=vmem, size = 0x12000, scoped, tag = 'internal scratch']
  %s0 = inlined_call_operand.vmem [shape: f32[8,4096], index: 0, kind: input, shape index: {}]
  %s1 = inlined_call_operand.vmem [shape: f32[4096,128], index: 1, kind: input, shape index: {}]
  %s2 = inlined_call_operand.vmem [shape: f32[1,128], index: 2, kind: input, shape index: {}]
  %s3 = inlined_call_operand.vmem [shape: f32[128,128], index: 3, kind: input, shape index: {}]
  %s4 = inlined_call_operand.vmem [shape: f32[1,128], index: 4, kind: input, shape index: {}]
  %s5 = inlined_call_operand.vmem [shape: f32[8,128], index: 5, kind: output, shape index: {}]
  %s6 = sld [smem:[#allocation0]]
  $region30: #{simple_cnn_forward.5} parent=0
    _
  %s8 = ssub.s32 1, %s6
  %s9 = scalar_select 0, %s8, %s6
  // Predicated region
  $region2: #{simple_cnn_forward.5} parent=0 // pred_check
    _
  $region3: #{simple_cnn_forward.5} parent=0 // pred_check_branch
    %11 = sbr.rel (0) target = $region5
  $region4: #{simple_cnn_forward.5} parent=0 // pred_region
    _
  $region5: #{simple_cnn_forward.5} parent=0 // pred_fallthru
    _
  // Predicated region
  $region6: #{simple_cnn_forward.5} parent=0 // pred_check
    _
  $region7: #{simple_cnn_forward.5} parent=0 // pred_check_branch
    %13 = sbr.rel (0) target = $region9
  $region8: #{simple_cnn_forward.5} parent=0 // pred_region
    _
  $region9: #{simple_cnn_forward.5} parent=0 // pred_fallthru
    _
  // Predicated region
  $region10: #{simple_cnn_forward.5} parent=0 // pred_check
    _
  $region11: #{simple_cnn_forward.5} parent=0 // pred_check_branch
    %15 = sbr.rel (0) target = $region13
  $region12: #{simple_cnn_forward.5} parent=0 // pred_region
    _
  $region13: #{simple_cnn_forward.5} parent=0 // pred_fallthru
    _
  // Predicated region
  $region14: #{simple_cnn_forward.5} parent=0 // pred_check
    _
  $region15: #{simple_cnn_forward.5} parent=0 // pred_check_branch
    %17 = sbr.rel (0) target = $region17
  $region16: #{simple_cnn_forward.5} parent=0 // pred_region
    _
  $region17: #{simple_cnn_forward.5} parent=0 // pred_fallthru
    _
  // Predicated region
  $region18: #{simple_cnn_forward.5} parent=0 // pred_check
    _
  $region19: #{simple_cnn_forward.5} parent=0 // pred_check_branch
    %19 = sbr.rel (0) target = $region21
  $region20: #{simple_cnn_forward.5} parent=0 // pred_region
    _
  $region21: #{simple_cnn_forward.5} parent=0 // pred_fallthru
    _
  %v20 = vld [vmem:[%s0] sm:$0xff]
  %v21 = vld [vmem:[%s0 + $0x8] sm:$0xff]
  %v22 = vld [vmem:[%s0 + $0x10] sm:$0xff]
  %v23 = vld [vmem:[%s0 + $0x18] sm:$0xff]
  %v24 = vld [vmem:[%s0 + $0x20] sm:$0xff]
  %v25 = vld [vmem:[%s0 + $0x28] sm:$0xff]
  %v26 = vld [vmem:[%s0 + $0x30] sm:$0xff]
  %v27 = vld [vmem:[%s0 + $0x38] sm:$0xff]
  %v28 = vld [vmem:[%s0 + $0x40] sm:$0xff]
  %v29 = vld [vmem:[%s0 + $0x48] sm:$0xff]
  %v30 = vld [vmem:[%s0 + $0x50] sm:$0xff]
  %v31 = vld [vmem:[%s0 + $0x58] sm:$0xff]
  %v32 = vld [vmem:[%s0 + $0x60] sm:$0xff]
  %v33 = vld [vmem:[%s0 + $0x68] sm:$0xff]
  %v34 = vld [vmem:[%s0 + $0x70] sm:$0xff]
  %v35 = vld [vmem:[%s0 + $0x78] sm:$0xff]
  %v36 = vld [vmem:[%s0 + $0x80] sm:$0xff]
  %v37 = vld [vmem:[%s0 + $0x88] sm:$0xff]
  %v38 = vld [vmem:[%s0 + $0x90] sm:$0xff]
  %v39 = vld [vmem:[%s0 + $0x98] sm:$0xff]
  %v40 = vld [vmem:[%s0 + $0xa0] sm:$0xff]
  %v41 = vld [vmem:[%s0 + $0xa8] sm:$0xff]
  %v42 = vld [vmem:[%s0 + $0xb0] sm:$0xff]
  %v43 = vld [vmem:[%s0 + $0xb8] sm:$0xff]
  %v44 = vld [vmem:[%s0 + $0xc0] sm:$0xff]
  %v45 = vld [vmem:[%s0 + $0xc8] sm:$0xff]
  %v46 = vld [vmem:[%s0 + $0xd0] sm:$0xff]
  %v47 = vld [vmem:[%s0 + $0xd8] sm:$0xff]
  %v48 = vld [vmem:[%s0 + $0xe0] sm:$0xff]
  %v49 = vld [vmem:[%s0 + $0xe8] sm:$0xff]
  %v50 = vld [vmem:[%s0 + $0xf0] sm:$0xff]
  %v51 = vld [vmem:[%s0 + $0xf8] sm:$0xff]
  %v52 = vld [vmem:[%s1] sm:$0xff]
  %v53 = vld [vmem:[%s1 + $0x8] sm:$0xff]
  %v54 = vld [vmem:[%s1 + $0x10] sm:$0xff]
  %v55 = vld [vmem:[%s1 + $0x18] sm:$0xff]
  %v56 = vld [vmem:[%s1 + $0x20] sm:$0xff]
  %v57 = vld [vmem:[%s1 + $0x28] sm:$0xff]
  %v58 = vld [vmem:[%s1 + $0x30] sm:$0xff]
  %v59 = vld [vmem:[%s1 + $0x38] sm:$0xff]
  %v60 = vld [vmem:[%s1 + $0x40] sm:$0xff]
  %v61 = vld [vmem:[%s1 + $0x48] sm:$0xff]
  %v62 = vld [vmem:[%s1 + $0x50] sm:$0xff]
  %v63 = vld [vmem:[%s1 + $0x58] sm:$0xff]
  %v64 = vld [vmem:[%s1 + $0x60] sm:$0xff]
  %v65 = vld [vmem:[%s1 + $0x68] sm:$0xff]
  %v66 = vld [vmem:[%s1 + $0x70] sm:$0xff]
  %v67 = vld [vmem:[%s1 + $0x78] sm:$0xff]
  %v68 = vld [vmem:[%s1 + $0x80] sm:$0xff]
  %v69 = vld [vmem:[%s1 + $0x88] sm:$0xff]
  %v70 = vld [vmem:[%s1 + $0x90] sm:$0xff]
  %v71 = vld [vmem:[%s1 + $0x98] sm:$0xff]
  %v72 = vld [vmem:[%s1 + $0xa0] sm:$0xff]
  %v73 = vld [vmem:[%s1 + $0xa8] sm:$0xff]
  %v74 = vld [vmem:[%s1 + $0xb0] sm:$0xff]
  %v75 = vld [vmem:[%s1 + $0xb8] sm:$0xff]
  %v76 = vld [vmem:[%s1 + $0xc0] sm:$0xff]
  %v77 = vld [vmem:[%s1 + $0xc8] sm:$0xff]
  %v78 = vld [vmem:[%s1 + $0xd0] sm:$0xff]
  %v79 = vld [vmem:[%s1 + $0xd8] sm:$0xff]
  %v80 = vld [vmem:[%s1 + $0xe0] sm:$0xff]
  %v81 = vld [vmem:[%s1 + $0xe8] sm:$0xff]
  %v82 = vld [vmem:[%s1 + $0xf0] sm:$0xff]
  %v83 = vld [vmem:[%s1 + $0xf8] sm:$0xff]
  %v84 = vld [vmem:[%s1 + $0x100] sm:$0xff]
  %v85 = vld [vmem:[%s1 + $0x108] sm:$0xff]
  %v86 = vld [vmem:[%s1 + $0x110] sm:$0xff]
  %v87 = vld [vmem:[%s1 + $0x118] sm:$0xff]
  %v88 = vld [vmem:[%s1 + $0x120] sm:$0xff]
  %v89 = vld [vmem:[%s1 + $0x128] sm:$0xff]
  %v90 = vld [vmem:[%s1 + $0x130] sm:$0xff]
  %v91 = vld [vmem:[%s1 + $0x138] sm:$0xff]
  %v92 = vld [vmem:[%s1 + $0x140] sm:$0xff]
  %v93 = vld [vmem:[%s1 + $0x148] sm:$0xff]
  %v94 = vld [vmem:[%s1 + $0x150] sm:$0xff]
  %v95 = vld [vmem:[%s1 + $0x158] sm:$0xff]
  %v96 = vld [vmem:[%s1 + $0x160] sm:$0xff]
  %v97 = vld [vmem:[%s1 + $0x168] sm:$0xff]
  %v98 = vld [vmem:[%s1 + $0x170] sm:$0xff]
  %v99 = vld [vmem:[%s1 + $0x178] sm:$0xff]
  %v100 = vld [vmem:[%s1 + $0x180] sm:$0xff]
  %v101 = vld [vmem:[%s1 + $0x188] sm:$0xff]
  %v102 = vld [vmem:[%s1 + $0x190] sm:$0xff]
  %v103 = vld [vmem:[%s1 + $0x198] sm:$0xff]
  %v104 = vld [vmem:[%s1 + $0x1a0] sm:$0xff]
  %v105 = vld [vmem:[%s1 + $0x1a8] sm:$0xff]
  %v106 = vld [vmem:[%s1 + $0x1b0] sm:$0xff]
  %v107 = vld [vmem:[%s1 + $0x1b8] sm:$0xff]
  %v108 = vld [vmem:[%s1 + $0x1c0] sm:$0xff]
  %v109 = vld [vmem:[%s1 + $0x1c8] sm:$0xff]
  %v110 = vld [vmem:[%s1 + $0x1d0] sm:$0xff]
  %v111 = vld [vmem:[%s1 + $0x1d8] sm:$0xff]
  %v112 = vld [vmem:[%s1 + $0x1e0] sm:$0xff]
  %v113 = vld [vmem:[%s1 + $0x1e8] sm:$0xff]
  %v114 = vld [vmem:[%s1 + $0x1f0] sm:$0xff]
  %v115 = vld [vmem:[%s1 + $0x1f8] sm:$0xff]
  %v116 = vld [vmem:[%s1 + $0x200] sm:$0xff]
  %v117 = vld [vmem:[%s1 + $0x208] sm:$0xff]
  %v118 = vld [vmem:[%s1 + $0x210] sm:$0xff]
  %v119 = vld [vmem:[%s1 + $0x218] sm:$0xff]
  %v120 = vld [vmem:[%s1 + $0x220] sm:$0xff]
  %v121 = vld [vmem:[%s1 + $0x228] sm:$0xff]
  %v122 = vld [vmem:[%s1 + $0x230] sm:$0xff]
  %v123 = vld [vmem:[%s1 + $0x238] sm:$0xff]
  %v124 = vld [vmem:[%s1 + $0x240] sm:$0xff]
  %v125 = vld [vmem:[%s1 + $0x248] sm:$0xff]
  %v126 = vld [vmem:[%s1 + $0x250] sm:$0xff]
  %v127 = vld [vmem:[%s1 + $0x258] sm:$0xff]
  %v128 = vld [vmem:[%s1 + $0x260] sm:$0xff]
  %v129 = vld [vmem:[%s1 + $0x268] sm:$0xff]
  %v130 = vld [vmem:[%s1 + $0x270] sm:$0xff]
  %v131 = vld [vmem:[%s1 + $0x278] sm:$0xff]
  %v132 = vld [vmem:[%s1 + $0x280] sm:$0xff]
  %v133 = vld [vmem:[%s1 + $0x288] sm:$0xff]
  %v134 = vld [vmem:[%s1 + $0x290] sm:$0xff]
  %v135 = vld [vmem:[%s1 + $0x298] sm:$0xff]
  %v136 = vld [vmem:[%s1 + $0x2a0] sm:$0xff]
  %v137 = vld [vmem:[%s1 + $0x2a8] sm:$0xff]
  %v138 = vld [vmem:[%s1 + $0x2b0] sm:$0xff]
  %v139 = vld [vmem:[%s1 + $0x2b8] sm:$0xff]
  %v140 = vld [vmem:[%s1 + $0x2c0] sm:$0xff]
  %v141 = vld [vmem:[%s1 + $0x2c8] sm:$0xff]
  %v142 = vld [vmem:[%s1 + $0x2d0] sm:$0xff]
  %v143 = vld [vmem:[%s1 + $0x2d8] sm:$0xff]
  %v144 = vld [vmem:[%s1 + $0x2e0] sm:$0xff]
  %v145 = vld [vmem:[%s1 + $0x2e8] sm:$0xff]
  %v146 = vld [vmem:[%s1 + $0x2f0] sm:$0xff]
  %v147 = vld [vmem:[%s1 + $0x2f8] sm:$0xff]
  %v148 = vld [vmem:[%s1 + $0x300] sm:$0xff]
  %v149 = vld [vmem:[%s1 + $0x308] sm:$0xff]
  %v150 = vld [vmem:[%s1 + $0x310] sm:$0xff]
  %v151 = vld [vmem:[%s1 + $0x318] sm:$0xff]
  %v152 = vld [vmem:[%s1 + $0x320] sm:$0xff]
  %v153 = vld [vmem:[%s1 + $0x328] sm:$0xff]
  %v154 = vld [vmem:[%s1 + $0x330] sm:$0xff]
  %v155 = vld [vmem:[%s1 + $0x338] sm:$0xff]
  %v156 = vld [vmem:[%s1 + $0x340] sm:$0xff]
  %v157 = vld [vmem:[%s1 + $0x348] sm:$0xff]
  %v158 = vld [vmem:[%s1 + $0x350] sm:$0xff]
  %v159 = vld [vmem:[%s1 + $0x358] sm:$0xff]
  %v160 = vld [vmem:[%s1 + $0x360] sm:$0xff]
  %v161 = vld [vmem:[%s1 + $0x368] sm:$0xff]
  %v162 = vld [vmem:[%s1 + $0x370] sm:$0xff]
  %v163 = vld [vmem:[%s1 + $0x378] sm:$0xff]
  %v164 = vld [vmem:[%s1 + $0x380] sm:$0xff]
  %v165 = vld [vmem:[%s1 + $0x388] sm:$0xff]
  %v166 = vld [vmem:[%s1 + $0x390] sm:$0xff]
  %v167 = vld [vmem:[%s1 + $0x398] sm:$0xff]
  %v168 = vld [vmem:[%s1 + $0x3a0] sm:$0xff]
  %v169 = vld [vmem:[%s1 + $0x3a8] sm:$0xff]
  %v170 = vld [vmem:[%s1 + $0x3b0] sm:$0xff]
  %v171 = vld [vmem:[%s1 + $0x3b8] sm:$0xff]
  %v172 = vld [vmem:[%s1 + $0x3c0] sm:$0xff]
  %v173 = vld [vmem:[%s1 + $0x3c8] sm:$0xff]
  %v174 = vld [vmem:[%s1 + $0x3d0] sm:$0xff]
  %v175 = vld [vmem:[%s1 + $0x3d8] sm:$0xff]
  %v176 = vld [vmem:[%s1 + $0x3e0] sm:$0xff]
  %v177 = vld [vmem:[%s1 + $0x3e8] sm:$0xff]
  %v178 = vld [vmem:[%s1 + $0x3f0] sm:$0xff]
  %v179 = vld [vmem:[%s1 + $0x3f8] sm:$0xff]
  %v180 = vld [vmem:[%s1 + $0x400] sm:$0xff]
  %v181 = vld [vmem:[%s1 + $0x408] sm:$0xff]
  %v182 = vld [vmem:[%s1 + $0x410] sm:$0xff]
  %v183 = vld [vmem:[%s1 + $0x418] sm:$0xff]
  %v184 = vld [vmem:[%s1 + $0x420] sm:$0xff]
  %v185 = vld [vmem:[%s1 + $0x428] sm:$0xff]
  %v186 = vld [vmem:[%s1 + $0x430] sm:$0xff]
  %v187 = vld [vmem:[%s1 + $0x438] sm:$0xff]
  %v188 = vld [vmem:[%s1 + $0x440] sm:$0xff]
  %v189 = vld [vmem:[%s1 + $0x448] sm:$0xff]
  %v190 = vld [vmem:[%s1 + $0x450] sm:$0xff]
  %v191 = vld [vmem:[%s1 + $0x458] sm:$0xff]
  %v192 = vld [vmem:[%s1 + $0x460] sm:$0xff]
  %v193 = vld [vmem:[%s1 + $0x468] sm:$0xff]
  %v194 = vld [vmem:[%s1 + $0x470] sm:$0xff]
  %v195 = vld [vmem:[%s1 + $0x478] sm:$0xff]
  %v196 = vld [vmem:[%s1 + $0x480] sm:$0xff]
  %v197 = vld [vmem:[%s1 + $0x488] sm:$0xff]
  %v198 = vld [vmem:[%s1 + $0x490] sm:$0xff]
  %v199 = vld [vmem:[%s1 + $0x498] sm:$0xff]
  %v200 = vld [vmem:[%s1 + $0x4a0] sm:$0xff]
  %v201 = vld [vmem:[%s1 + $0x4a8] sm:$0xff]
  %v202 = vld [vmem:[%s1 + $0x4b0] sm:$0xff]
  %v203 = vld [vmem:[%s1 + $0x4b8] sm:$0xff]
  %v204 = vld [vmem:[%s1 + $0x4c0] sm:$0xff]
  %v205 = vld [vmem:[%s1 + $0x4c8] sm:$0xff]
  %v206 = vld [vmem:[%s1 + $0x4d0] sm:$0xff]
  %v207 = vld [vmem:[%s1 + $0x4d8] sm:$0xff]
  %v208 = vld [vmem:[%s1 + $0x4e0] sm:$0xff]
  %v209 = vld [vmem:[%s1 + $0x4e8] sm:$0xff]
  %v210 = vld [vmem:[%s1 + $0x4f0] sm:$0xff]
  %v211 = vld [vmem:[%s1 + $0x4f8] sm:$0xff]
  %v212 = vld [vmem:[%s1 + $0x500] sm:$0xff]
  %v213 = vld [vmem:[%s1 + $0x508] sm:$0xff]
  %v214 = vld [vmem:[%s1 + $0x510] sm:$0xff]
  %v215 = vld [vmem:[%s1 + $0x518] sm:$0xff]
  %v216 = vld [vmem:[%s1 + $0x520] sm:$0xff]
  %v217 = vld [vmem:[%s1 + $0x528] sm:$0xff]
  %v218 = vld [vmem:[%s1 + $0x530] sm:$0xff]
  %v219 = vld [vmem:[%s1 + $0x538] sm:$0xff]
  %v220 = vld [vmem:[%s1 + $0x540] sm:$0xff]
  %v221 = vld [vmem:[%s1 + $0x548] sm:$0xff]
  %v222 = vld [vmem:[%s1 + $0x550] sm:$0xff]
  %v223 = vld [vmem:[%s1 + $0x558] sm:$0xff]
  %v224 = vld [vmem:[%s1 + $0x560] sm:$0xff]
  %v225 = vld [vmem:[%s1 + $0x568] sm:$0xff]
  %v226 = vld [vmem:[%s1 + $0x570] sm:$0xff]
  %v227 = vld [vmem:[%s1 + $0x578] sm:$0xff]
  %v228 = vld [vmem:[%s1 + $0x580] sm:$0xff]
  %v229 = vld [vmem:[%s1 + $0x588] sm:$0xff]
  %v230 = vld [vmem:[%s1 + $0x590] sm:$0xff]
  %v231 = vld [vmem:[%s1 + $0x598] sm:$0xff]
  %v232 = vld [vmem:[%s1 + $0x5a0] sm:$0xff]
  %v233 = vld [vmem:[%s1 + $0x5a8] sm:$0xff]
  %v234 = vld [vmem:[%s1 + $0x5b0] sm:$0xff]
  %v235 = vld [vmem:[%s1 + $0x5b8] sm:$0xff]
  %v236 = vld [vmem:[%s1 + $0x5c0] sm:$0xff]
  %v237 = vld [vmem:[%s1 + $0x5c8] sm:$0xff]
  %v238 = vld [vmem:[%s1 + $0x5d0] sm:$0xff]
  %v239 = vld [vmem:[%s1 + $0x5d8] sm:$0xff]
  %v240 = vld [vmem:[%s1 + $0x5e0] sm:$0xff]
  %v241 = vld [vmem:[%s1 + $0x5e8] sm:$0xff]
  %v242 = vld [vmem:[%s1 + $0x5f0] sm:$0xff]
  %v243 = vld [vmem:[%s1 + $0x5f8] sm:$0xff]
  %v244 = vld [vmem:[%s1 + $0x600] sm:$0xff]
  %v245 = vld [vmem:[%s1 + $0x608] sm:$0xff]
  %v246 = vld [vmem:[%s1 + $0x610] sm:$0xff]
  %v247 = vld [vmem:[%s1 + $0x618] sm:$0xff]
  %v248 = vld [vmem:[%s1 + $0x620] sm:$0xff]
  %v249 = vld [vmem:[%s1 + $0x628] sm:$0xff]
  %v250 = vld [vmem:[%s1 + $0x630] sm:$0xff]
  %v251 = vld [vmem:[%s1 + $0x638] sm:$0xff]
  %v252 = vld [vmem:[%s1 + $0x640] sm:$0xff]
  %v253 = vld [vmem:[%s1 + $0x648] sm:$0xff]
  %v254 = vld [vmem:[%s1 + $0x650] sm:$0xff]
  %v255 = vld [vmem:[%s1 + $0x658] sm:$0xff]
  %v256 = vld [vmem:[%s1 + $0x660] sm:$0xff]
  %v257 = vld [vmem:[%s1 + $0x668] sm:$0xff]
  %v258 = vld [vmem:[%s1 + $0x670] sm:$0xff]
  %v259 = vld [vmem:[%s1 + $0x678] sm:$0xff]
  %v260 = vld [vmem:[%s1 + $0x680] sm:$0xff]
  %v261 = vld [vmem:[%s1 + $0x688] sm:$0xff]
  %v262 = vld [vmem:[%s1 + $0x690] sm:$0xff]
  %v263 = vld [vmem:[%s1 + $0x698] sm:$0xff]
  %v264 = vld [vmem:[%s1 + $0x6a0] sm:$0xff]
  %v265 = vld [vmem:[%s1 + $0x6a8] sm:$0xff]
  %v266 = vld [vmem:[%s1 + $0x6b0] sm:$0xff]
  %v267 = vld [vmem:[%s1 + $0x6b8] sm:$0xff]
  %v268 = vld [vmem:[%s1 + $0x6c0] sm:$0xff]
  %v269 = vld [vmem:[%s1 + $0x6c8] sm:$0xff]
  %v270 = vld [vmem:[%s1 + $0x6d0] sm:$0xff]
  %v271 = vld [vmem:[%s1 + $0x6d8] sm:$0xff]
  %v272 = vld [vmem:[%s1 + $0x6e0] sm:$0xff]
  %v273 = vld [vmem:[%s1 + $0x6e8] sm:$0xff]
  %v274 = vld [vmem:[%s1 + $0x6f0] sm:$0xff]
  %v275 = vld [vmem:[%s1 + $0x6f8] sm:$0xff]
  %v276 = vld [vmem:[%s1 + $0x700] sm:$0xff]
  %v277 = vld [vmem:[%s1 + $0x708] sm:$0xff]
  %v278 = vld [vmem:[%s1 + $0x710] sm:$0xff]
  %v279 = vld [vmem:[%s1 + $0x718] sm:$0xff]
  %v280 = vld [vmem:[%s1 + $0x720] sm:$0xff]
  %v281 = vld [vmem:[%s1 + $0x728] sm:$0xff]
  %v282 = vld [vmem:[%s1 + $0x730] sm:$0xff]
  %v283 = vld [vmem:[%s1 + $0x738] sm:$0xff]
  %v284 = vld [vmem:[%s1 + $0x740] sm:$0xff]
  %v285 = vld [vmem:[%s1 + $0x748] sm:$0xff]
  %v286 = vld [vmem:[%s1 + $0x750] sm:$0xff]
  %v287 = vld [vmem:[%s1 + $0x758] sm:$0xff]
  %v288 = vld [vmem:[%s1 + $0x760] sm:$0xff]
  %v289 = vld [vmem:[%s1 + $0x768] sm:$0xff]
  %v290 = vld [vmem:[%s1 + $0x770] sm:$0xff]
  %v291 = vld [vmem:[%s1 + $0x778] sm:$0xff]
  %v292 = vld [vmem:[%s1 + $0x780] sm:$0xff]
  %v293 = vld [vmem:[%s1 + $0x788] sm:$0xff]
  %v294 = vld [vmem:[%s1 + $0x790] sm:$0xff]
  %v295 = vld [vmem:[%s1 + $0x798] sm:$0xff]
  %v296 = vld [vmem:[%s1 + $0x7a0] sm:$0xff]
  %v297 = vld [vmem:[%s1 + $0x7a8] sm:$0xff]
  %v298 = vld [vmem:[%s1 + $0x7b0] sm:$0xff]
  %v299 = vld [vmem:[%s1 + $0x7b8] sm:$0xff]
  %v300 = vld [vmem:[%s1 + $0x7c0] sm:$0xff]
  %v301 = vld [vmem:[%s1 + $0x7c8] sm:$0xff]
  %v302 = vld [vmem:[%s1 + $0x7d0] sm:$0xff]
  %v303 = vld [vmem:[%s1 + $0x7d8] sm:$0xff]
  %v304 = vld [vmem:[%s1 + $0x7e0] sm:$0xff]
  %v305 = vld [vmem:[%s1 + $0x7e8] sm:$0xff]
  %v306 = vld [vmem:[%s1 + $0x7f0] sm:$0xff]
  %v307 = vld [vmem:[%s1 + $0x7f8] sm:$0xff]
  %v308 = vld [vmem:[%s1 + $0x800] sm:$0xff]
  %v309 = vld [vmem:[%s1 + $0x808] sm:$0xff]
  %v310 = vld [vmem:[%s1 + $0x810] sm:$0xff]
  %v311 = vld [vmem:[%s1 + $0x818] sm:$0xff]
  %v312 = vld [vmem:[%s1 + $0x820] sm:$0xff]
  %v313 = vld [vmem:[%s1 + $0x828] sm:$0xff]
  %v314 = vld [vmem:[%s1 + $0x830] sm:$0xff]
  %v315 = vld [vmem:[%s1 + $0x838] sm:$0xff]
  %v316 = vld [vmem:[%s1 + $0x840] sm:$0xff]
  %v317 = vld [vmem:[%s1 + $0x848] sm:$0xff]
  %v318 = vld [vmem:[%s1 + $0x850] sm:$0xff]
  %v319 = vld [vmem:[%s1 + $0x858] sm:$0xff]
  %v320 = vld [vmem:[%s1 + $0x860] sm:$0xff]
  %v321 = vld [vmem:[%s1 + $0x868] sm:$0xff]
  %v322 = vld [vmem:[%s1 + $0x870] sm:$0xff]
  %v323 = vld [vmem:[%s1 + $0x878] sm:$0xff]
  %v324 = vld [vmem:[%s1 + $0x880] sm:$0xff]
  %v325 = vld [vmem:[%s1 + $0x888] sm:$0xff]
  %v326 = vld [vmem:[%s1 + $0x890] sm:$0xff]
  %v327 = vld [vmem:[%s1 + $0x898] sm:$0xff]
  %v328 = vld [vmem:[%s1 + $0x8a0] sm:$0xff]
  %v329 = vld [vmem:[%s1 + $0x8a8] sm:$0xff]
  %v330 = vld [vmem:[%s1 + $0x8b0] sm:$0xff]
  %v331 = vld [vmem:[%s1 + $0x8b8] sm:$0xff]
  %v332 = vld [vmem:[%s1 + $0x8c0] sm:$0xff]
  %v333 = vld [vmem:[%s1 + $0x8c8] sm:$0xff]
  %v334 = vld [vmem:[%s1 + $0x8d0] sm:$0xff]
  %v335 = vld [vmem:[%s1 + $0x8d8] sm:$0xff]
  %v336 = vld [vmem:[%s1 + $0x8e0] sm:$0xff]
  %v337 = vld [vmem:[%s1 + $0x8e8] sm:$0xff]
  %v338 = vld [vmem:[%s1 + $0x8f0] sm:$0xff]
  %v339 = vld [vmem:[%s1 + $0x8f8] sm:$0xff]
  %v340 = vld [vmem:[%s1 + $0x900] sm:$0xff]
  %v341 = vld [vmem:[%s1 + $0x908] sm:$0xff]
  %v342 = vld [vmem:[%s1 + $0x910] sm:$0xff]
  %v343 = vld [vmem:[%s1 + $0x918] sm:$0xff]
  %v344 = vld [vmem:[%s1 + $0x920] sm:$0xff]
  %v345 = vld [vmem:[%s1 + $0x928] sm:$0xff]
  %v346 = vld [vmem:[%s1 + $0x930] sm:$0xff]
  %v347 = vld [vmem:[%s1 + $0x938] sm:$0xff]
  %v348 = vld [vmem:[%s1 + $0x940] sm:$0xff]
  %v349 = vld [vmem:[%s1 + $0x948] sm:$0xff]
  %v350 = vld [vmem:[%s1 + $0x950] sm:$0xff]
  %v351 = vld [vmem:[%s1 + $0x958] sm:$0xff]
  %v352 = vld [vmem:[%s1 + $0x960] sm:$0xff]
  %v353 = vld [vmem:[%s1 + $0x968] sm:$0xff]
  %v354 = vld [vmem:[%s1 + $0x970] sm:$0xff]
  %v355 = vld [vmem:[%s1 + $0x978] sm:$0xff]
  %v356 = vld [vmem:[%s1 + $0x980] sm:$0xff]
  %v357 = vld [vmem:[%s1 + $0x988] sm:$0xff]
  %v358 = vld [vmem:[%s1 + $0x990] sm:$0xff]
  %v359 = vld [vmem:[%s1 + $0x998] sm:$0xff]
  %v360 = vld [vmem:[%s1 + $0x9a0] sm:$0xff]
  %v361 = vld [vmem:[%s1 + $0x9a8] sm:$0xff]
  %v362 = vld [vmem:[%s1 + $0x9b0] sm:$0xff]
  %v363 = vld [vmem:[%s1 + $0x9b8] sm:$0xff]
  %v364 = vld [vmem:[%s1 + $0x9c0] sm:$0xff]
  %v365 = vld [vmem:[%s1 + $0x9c8] sm:$0xff]
  %v366 = vld [vmem:[%s1 + $0x9d0] sm:$0xff]
  %v367 = vld [vmem:[%s1 + $0x9d8] sm:$0xff]
  %v368 = vld [vmem:[%s1 + $0x9e0] sm:$0xff]
  %v369 = vld [vmem:[%s1 + $0x9e8] sm:$0xff]
  %v370 = vld [vmem:[%s1 + $0x9f0] sm:$0xff]
  %v371 = vld [vmem:[%s1 + $0x9f8] sm:$0xff]
  %v372 = vld [vmem:[%s1 + $0xa00] sm:$0xff]
  %v373 = vld [vmem:[%s1 + $0xa08] sm:$0xff]
  %v374 = vld [vmem:[%s1 + $0xa10] sm:$0xff]
  %v375 = vld [vmem:[%s1 + $0xa18] sm:$0xff]
  %v376 = vld [vmem:[%s1 + $0xa20] sm:$0xff]
  %v377 = vld [vmem:[%s1 + $0xa28] sm:$0xff]
  %v378 = vld [vmem:[%s1 + $0xa30] sm:$0xff]
  %v379 = vld [vmem:[%s1 + $0xa38] sm:$0xff]
  %v380 = vld [vmem:[%s1 + $0xa40] sm:$0xff]
  %v381 = vld [vmem:[%s1 + $0xa48] sm:$0xff]
  %v382 = vld [vmem:[%s1 + $0xa50] sm:$0xff]
  %v383 = vld [vmem:[%s1 + $0xa58] sm:$0xff]
  %v384 = vld [vmem:[%s1 + $0xa60] sm:$0xff]
  %v385 = vld [vmem:[%s1 + $0xa68] sm:$0xff]
  %v386 = vld [vmem:[%s1 + $0xa70] sm:$0xff]
  %v387 = vld [vmem:[%s1 + $0xa78] sm:$0xff]
  %v388 = vld [vmem:[%s1 + $0xa80] sm:$0xff]
  %v389 = vld [vmem:[%s1 + $0xa88] sm:$0xff]
  %v390 = vld [vmem:[%s1 + $0xa90] sm:$0xff]
  %v391 = vld [vmem:[%s1 + $0xa98] sm:$0xff]
  %v392 = vld [vmem:[%s1 + $0xaa0] sm:$0xff]
  %v393 = vld [vmem:[%s1 + $0xaa8] sm:$0xff]
  %v394 = vld [vmem:[%s1 + $0xab0] sm:$0xff]
  %v395 = vld [vmem:[%s1 + $0xab8] sm:$0xff]
  %v396 = vld [vmem:[%s1 + $0xac0] sm:$0xff]
  %v397 = vld [vmem:[%s1 + $0xac8] sm:$0xff]
  %v398 = vld [vmem:[%s1 + $0xad0] sm:$0xff]
  %v399 = vld [vmem:[%s1 + $0xad8] sm:$0xff]
  %v400 = vld [vmem:[%s1 + $0xae0] sm:$0xff]
  %v401 = vld [vmem:[%s1 + $0xae8] sm:$0xff]
  %v402 = vld [vmem:[%s1 + $0xaf0] sm:$0xff]
  %v403 = vld [vmem:[%s1 + $0xaf8] sm:$0xff]
  %v404 = vld [vmem:[%s1 + $0xb00] sm:$0xff]
  %v405 = vld [vmem:[%s1 + $0xb08] sm:$0xff]
  %v406 = vld [vmem:[%s1 + $0xb10] sm:$0xff]
  %v407 = vld [vmem:[%s1 + $0xb18] sm:$0xff]
  %v408 = vld [vmem:[%s1 + $0xb20] sm:$0xff]
  %v409 = vld [vmem:[%s1 + $0xb28] sm:$0xff]
  %v410 = vld [vmem:[%s1 + $0xb30] sm:$0xff]
  %v411 = vld [vmem:[%s1 + $0xb38] sm:$0xff]
  %v412 = vld [vmem:[%s1 + $0xb40] sm:$0xff]
  %v413 = vld [vmem:[%s1 + $0xb48] sm:$0xff]
  %v414 = vld [vmem:[%s1 + $0xb50] sm:$0xff]
  %v415 = vld [vmem:[%s1 + $0xb58] sm:$0xff]
  %v416 = vld [vmem:[%s1 + $0xb60] sm:$0xff]
  %v417 = vld [vmem:[%s1 + $0xb68] sm:$0xff]
  %v418 = vld [vmem:[%s1 + $0xb70] sm:$0xff]
  %v419 = vld [vmem:[%s1 + $0xb78] sm:$0xff]
  %v420 = vld [vmem:[%s1 + $0xb80] sm:$0xff]
  %v421 = vld [vmem:[%s1 + $0xb88] sm:$0xff]
  %v422 = vld [vmem:[%s1 + $0xb90] sm:$0xff]
  %v423 = vld [vmem:[%s1 + $0xb98] sm:$0xff]
  %v424 = vld [vmem:[%s1 + $0xba0] sm:$0xff]
  %v425 = vld [vmem:[%s1 + $0xba8] sm:$0xff]
  %v426 = vld [vmem:[%s1 + $0xbb0] sm:$0xff]
  %v427 = vld [vmem:[%s1 + $0xbb8] sm:$0xff]
  %v428 = vld [vmem:[%s1 + $0xbc0] sm:$0xff]
  %v429 = vld [vmem:[%s1 + $0xbc8] sm:$0xff]
  %v430 = vld [vmem:[%s1 + $0xbd0] sm:$0xff]
  %v431 = vld [vmem:[%s1 + $0xbd8] sm:$0xff]
  %v432 = vld [vmem:[%s1 + $0xbe0] sm:$0xff]
  %v433 = vld [vmem:[%s1 + $0xbe8] sm:$0xff]
  %v434 = vld [vmem:[%s1 + $0xbf0] sm:$0xff]
  %v435 = vld [vmem:[%s1 + $0xbf8] sm:$0xff]
  %v436 = vld [vmem:[%s1 + $0xc00] sm:$0xff]
  %v437 = vld [vmem:[%s1 + $0xc08] sm:$0xff]
  %v438 = vld [vmem:[%s1 + $0xc10] sm:$0xff]
  %v439 = vld [vmem:[%s1 + $0xc18] sm:$0xff]
  %v440 = vld [vmem:[%s1 + $0xc20] sm:$0xff]
  %v441 = vld [vmem:[%s1 + $0xc28] sm:$0xff]
  %v442 = vld [vmem:[%s1 + $0xc30] sm:$0xff]
  %v443 = vld [vmem:[%s1 + $0xc38] sm:$0xff]
  %v444 = vld [vmem:[%s1 + $0xc40] sm:$0xff]
  %v445 = vld [vmem:[%s1 + $0xc48] sm:$0xff]
  %v446 = vld [vmem:[%s1 + $0xc50] sm:$0xff]
  %v447 = vld [vmem:[%s1 + $0xc58] sm:$0xff]
  %v448 = vld [vmem:[%s1 + $0xc60] sm:$0xff]
  %v449 = vld [vmem:[%s1 + $0xc68] sm:$0xff]
  %v450 = vld [vmem:[%s1 + $0xc70] sm:$0xff]
  %v451 = vld [vmem:[%s1 + $0xc78] sm:$0xff]
  %v452 = vld [vmem:[%s1 + $0xc80] sm:$0xff]
  %v453 = vld [vmem:[%s1 + $0xc88] sm:$0xff]
  %v454 = vld [vmem:[%s1 + $0xc90] sm:$0xff]
  %v455 = vld [vmem:[%s1 + $0xc98] sm:$0xff]
  %v456 = vld [vmem:[%s1 + $0xca0] sm:$0xff]
  %v457 = vld [vmem:[%s1 + $0xca8] sm:$0xff]
  %v458 = vld [vmem:[%s1 + $0xcb0] sm:$0xff]
  %v459 = vld [vmem:[%s1 + $0xcb8] sm:$0xff]
  %v460 = vld [vmem:[%s1 + $0xcc0] sm:$0xff]
  %v461 = vld [vmem:[%s1 + $0xcc8] sm:$0xff]
  %v462 = vld [vmem:[%s1 + $0xcd0] sm:$0xff]
  %v463 = vld [vmem:[%s1 + $0xcd8] sm:$0xff]
  %v464 = vld [vmem:[%s1 + $0xce0] sm:$0xff]
  %v465 = vld [vmem:[%s1 + $0xce8] sm:$0xff]
  %v466 = vld [vmem:[%s1 + $0xcf0] sm:$0xff]
  %v467 = vld [vmem:[%s1 + $0xcf8] sm:$0xff]
  %v468 = vld [vmem:[%s1 + $0xd00] sm:$0xff]
  %v469 = vld [vmem:[%s1 + $0xd08] sm:$0xff]
  %v470 = vld [vmem:[%s1 + $0xd10] sm:$0xff]
  %v471 = vld [vmem:[%s1 + $0xd18] sm:$0xff]
  %v472 = vld [vmem:[%s1 + $0xd20] sm:$0xff]
  %v473 = vld [vmem:[%s1 + $0xd28] sm:$0xff]
  %v474 = vld [vmem:[%s1 + $0xd30] sm:$0xff]
  %v475 = vld [vmem:[%s1 + $0xd38] sm:$0xff]
  %v476 = vld [vmem:[%s1 + $0xd40] sm:$0xff]
  %v477 = vld [vmem:[%s1 + $0xd48] sm:$0xff]
  %v478 = vld [vmem:[%s1 + $0xd50] sm:$0xff]
  %v479 = vld [vmem:[%s1 + $0xd58] sm:$0xff]
  %v480 = vld [vmem:[%s1 + $0xd60] sm:$0xff]
  %v481 = vld [vmem:[%s1 + $0xd68] sm:$0xff]
  %v482 = vld [vmem:[%s1 + $0xd70] sm:$0xff]
  %v483 = vld [vmem:[%s1 + $0xd78] sm:$0xff]
  %v484 = vld [vmem:[%s1 + $0xd80] sm:$0xff]
  %v485 = vld [vmem:[%s1 + $0xd88] sm:$0xff]
  %v486 = vld [vmem:[%s1 + $0xd90] sm:$0xff]
  %v487 = vld [vmem:[%s1 + $0xd98] sm:$0xff]
  %v488 = vld [vmem:[%s1 + $0xda0] sm:$0xff]
  %v489 = vld [vmem:[%s1 + $0xda8] sm:$0xff]
  %v490 = vld [vmem:[%s1 + $0xdb0] sm:$0xff]
  %v491 = vld [vmem:[%s1 + $0xdb8] sm:$0xff]
  %v492 = vld [vmem:[%s1 + $0xdc0] sm:$0xff]
  %v493 = vld [vmem:[%s1 + $0xdc8] sm:$0xff]
  %v494 = vld [vmem:[%s1 + $0xdd0] sm:$0xff]
  %v495 = vld [vmem:[%s1 + $0xdd8] sm:$0xff]
  %v496 = vld [vmem:[%s1 + $0xde0] sm:$0xff]
  %v497 = vld [vmem:[%s1 + $0xde8] sm:$0xff]
  %v498 = vld [vmem:[%s1 + $0xdf0] sm:$0xff]
  %v499 = vld [vmem:[%s1 + $0xdf8] sm:$0xff]
  %v500 = vld [vmem:[%s1 + $0xe00] sm:$0xff]
  %v501 = vld [vmem:[%s1 + $0xe08] sm:$0xff]
  %v502 = vld [vmem:[%s1 + $0xe10] sm:$0xff]
  %v503 = vld [vmem:[%s1 + $0xe18] sm:$0xff]
  %v504 = vld [vmem:[%s1 + $0xe20] sm:$0xff]
  %v505 = vld [vmem:[%s1 + $0xe28] sm:$0xff]
  %v506 = vld [vmem:[%s1 + $0xe30] sm:$0xff]
  %v507 = vld [vmem:[%s1 + $0xe38] sm:$0xff]
  %v508 = vld [vmem:[%s1 + $0xe40] sm:$0xff]
  %v509 = vld [vmem:[%s1 + $0xe48] sm:$0xff]
  %v510 = vld [vmem:[%s1 + $0xe50] sm:$0xff]
  %v511 = vld [vmem:[%s1 + $0xe58] sm:$0xff]
  %v512 = vld [vmem:[%s1 + $0xe60] sm:$0xff]
  %v513 = vld [vmem:[%s1 + $0xe68] sm:$0xff]
  %v514 = vld [vmem:[%s1 + $0xe70] sm:$0xff]
  %v515 = vld [vmem:[%s1 + $0xe78] sm:$0xff]
  %v516 = vld [vmem:[%s1 + $0xe80] sm:$0xff]
  %v517 = vld [vmem:[%s1 + $0xe88] sm:$0xff]
  %v518 = vld [vmem:[%s1 + $0xe90] sm:$0xff]
  %v519 = vld [vmem:[%s1 + $0xe98] sm:$0xff]
  %v520 = vld [vmem:[%s1 + $0xea0] sm:$0xff]
  %v521 = vld [vmem:[%s1 + $0xea8] sm:$0xff]
  %v522 = vld [vmem:[%s1 + $0xeb0] sm:$0xff]
  %v523 = vld [vmem:[%s1 + $0xeb8] sm:$0xff]
  %v524 = vld [vmem:[%s1 + $0xec0] sm:$0xff]
  %v525 = vld [vmem:[%s1 + $0xec8] sm:$0xff]
  %v526 = vld [vmem:[%s1 + $0xed0] sm:$0xff]
  %v527 = vld [vmem:[%s1 + $0xed8] sm:$0xff]
  %v528 = vld [vmem:[%s1 + $0xee0] sm:$0xff]
  %v529 = vld [vmem:[%s1 + $0xee8] sm:$0xff]
  %v530 = vld [vmem:[%s1 + $0xef0] sm:$0xff]
  %v531 = vld [vmem:[%s1 + $0xef8] sm:$0xff]
  %v532 = vld [vmem:[%s1 + $0xf00] sm:$0xff]
  %v533 = vld [vmem:[%s1 + $0xf08] sm:$0xff]
  %v534 = vld [vmem:[%s1 + $0xf10] sm:$0xff]
  %v535 = vld [vmem:[%s1 + $0xf18] sm:$0xff]
  %v536 = vld [vmem:[%s1 + $0xf20] sm:$0xff]
  %v537 = vld [vmem:[%s1 + $0xf28] sm:$0xff]
  %v538 = vld [vmem:[%s1 + $0xf30] sm:$0xff]
  %v539 = vld [vmem:[%s1 + $0xf38] sm:$0xff]
  %v540 = vld [vmem:[%s1 + $0xf40] sm:$0xff]
  %v541 = vld [vmem:[%s1 + $0xf48] sm:$0xff]
  %v542 = vld [vmem:[%s1 + $0xf50] sm:$0xff]
  %v543 = vld [vmem:[%s1 + $0xf58] sm:$0xff]
  %v544 = vld [vmem:[%s1 + $0xf60] sm:$0xff]
  %v545 = vld [vmem:[%s1 + $0xf68] sm:$0xff]
  %v546 = vld [vmem:[%s1 + $0xf70] sm:$0xff]
  %v547 = vld [vmem:[%s1 + $0xf78] sm:$0xff]
  %v548 = vld [vmem:[%s1 + $0xf80] sm:$0xff]
  %v549 = vld [vmem:[%s1 + $0xf88] sm:$0xff]
  %v550 = vld [vmem:[%s1 + $0xf90] sm:$0xff]
  %v551 = vld [vmem:[%s1 + $0xf98] sm:$0xff]
  %v552 = vld [vmem:[%s1 + $0xfa0] sm:$0xff]
  %v553 = vld [vmem:[%s1 + $0xfa8] sm:$0xff]
  %v554 = vld [vmem:[%s1 + $0xfb0] sm:$0xff]
  %v555 = vld [vmem:[%s1 + $0xfb8] sm:$0xff]
  %v556 = vld [vmem:[%s1 + $0xfc0] sm:$0xff]
  %v557 = vld [vmem:[%s1 + $0xfc8] sm:$0xff]
  %v558 = vld [vmem:[%s1 + $0xfd0] sm:$0xff]
  %v559 = vld [vmem:[%s1 + $0xfd8] sm:$0xff]
  %v560 = vld [vmem:[%s1 + $0xfe0] sm:$0xff]
  %v561 = vld [vmem:[%s1 + $0xfe8] sm:$0xff]
  %v562 = vld [vmem:[%s1 + $0xff0] sm:$0xff]
  %v563 = vld [vmem:[%s1 + $0xff8] sm:$0xff]
  %v564 = vld [vmem:[%s2] sm:$0x1]
  %v566 = vlaneseq
  %v567 = vshrl.u32 %v566, 7
  %v568 = vsub.s32 0, %v567
  %v569 = vrot.slane %v564, %v568
  %571 = vmatprep.subr.mxu0 0.0
  %572 = vmatpush1.msra.mxu0 %v52
  %573 = vmatprep.subr.mxu0 0.0
  %574 = vmatpush1.msra.mxu0 %v53
  %575 = vmatprep.subr.mxu0 0.0
  %576 = vmatpush1.msra.mxu0 %v54
  %577 = vmatprep.subr.mxu0 0.0
  %578 = vmatpush1.msra.mxu0 %v55
  %579 = vmatprep.subr.mxu0 0.0
  %580 = vmatpush1.msra.mxu0 %v56
  %581 = vmatprep.subr.mxu0 0.0
  %582 = vmatpush1.msra.mxu0 %v57
  %583 = vmatprep.subr.mxu0 0.0
  %584 = vmatpush1.msra.mxu0 %v58
  %585 = vmatprep.subr.mxu0 0.0
  %586 = vmatpush1.msra.mxu0 %v59
  %587 = vmatprep.subr.mxu0 0.0
  %588 = vmatpush1.msra.mxu0 %v60
  %589 = vmatprep.subr.mxu0 0.0
  %590 = vmatpush1.msra.mxu0 %v61
  %591 = vmatprep.subr.mxu0 0.0
  %592 = vmatpush1.msra.mxu0 %v62
  %593 = vmatprep.subr.mxu0 0.0
  %594 = vmatpush1.msra.mxu0 %v63
  %595 = vmatprep.subr.mxu0 0.0
  %596 = vmatpush1.msra.mxu0 %v64
  %597 = vmatprep.subr.mxu0 0.0
  %598 = vmatpush1.msra.mxu0 %v65
  %599 = vmatprep.subr.mxu0 0.0
  %600 = vmatpush1.msra.mxu0 %v66
  %601 = vmatprep.subr.mxu0 0.0
  %602 = vmatpush1.msra.mxu0 %v67
  %603 = vmatprep.subr.mxu0 0.0
  %604 = vmatpush1.msra.mxu0 %v68
  %605 = vmatprep.subr.mxu0 0.0
  %606 = vmatpush1.msra.mxu0 %v69
  %607 = vmatprep.subr.mxu0 0.0
  %608 = vmatpush1.msra.mxu0 %v70
  %609 = vmatprep.subr.mxu0 0.0
  %610 = vmatpush1.msra.mxu0 %v71
  %611 = vmatprep.subr.mxu0 0.0
  %612 = vmatpush1.msra.mxu0 %v72
  %613 = vmatprep.subr.mxu0 0.0
  %614 = vmatpush1.msra.mxu0 %v73
  %615 = vmatprep.subr.mxu0 0.0
  %616 = vmatpush1.msra.mxu0 %v74
  %617 = vmatprep.subr.mxu0 0.0
  %618 = vmatpush1.msra.mxu0 %v75
  %619 = vmatprep.subr.mxu0 0.0
  %620 = vmatpush1.msra.mxu0 %v76
  %621 = vmatprep.subr.mxu0 0.0
  %622 = vmatpush1.msra.mxu0 %v77
  %623 = vmatprep.subr.mxu0 0.0
  %624 = vmatpush1.msra.mxu0 %v78
  %625 = vmatprep.subr.mxu0 0.0
  %626 = vmatpush1.msra.mxu0 %v79
  %627 = vmatprep.subr.mxu0 0.0
  %628 = vmatpush1.msra.mxu0 %v80
  %629 = vmatprep.subr.mxu0 0.0
  %630 = vmatpush1.msra.mxu0 %v81
  %631 = vmatprep.subr.mxu0 0.0
  %632 = vmatpush1.msra.mxu0 %v82
  %633 = vmatprep.subr.mxu0 0.0
  %634 = vmatpush1.msra.mxu0 %v83
  %635 = vmatprep.mubr.f32.mxu0 %v21
  %636 = vmatmul.mubr.f32.gmra.mrb[0].mxu0 %v20
  %v637 = vpop.f32.mrb[0].mxu0
  %v638 = vadd.f32 %v569, %v637
  %v639 = vpop.f32.mrb[0].mxu0
  %640 = vdwg.mxu0
  %641 = vmatprep.subr.mxu0 0.0
  %642 = vmatpush1.msra.mxu0 %v84
  %643 = vmatprep.subr.mxu0 0.0
  %644 = vmatpush1.msra.mxu0 %v85
  %645 = vmatprep.subr.mxu0 0.0
  %646 = vmatpush1.msra.mxu0 %v86
  %647 = vmatprep.subr.mxu0 0.0
  %648 = vmatpush1.msra.mxu0 %v87
  %649 = vmatprep.subr.mxu0 0.0
  %650 = vmatpush1.msra.mxu0 %v88
  %651 = vmatprep.subr.mxu0 0.0
  %652 = vmatpush1.msra.mxu0 %v89
  %653 = vmatprep.subr.mxu0 0.0
  %654 = vmatpush1.msra.mxu0 %v90
  %655 = vmatprep.subr.mxu0 0.0
  %656 = vmatpush1.msra.mxu0 %v91
  %657 = vmatprep.subr.mxu0 0.0
  %658 = vmatpush1.msra.mxu0 %v92
  %659 = vmatprep.subr.mxu0 0.0
  %660 = vmatpush1.msra.mxu0 %v93
  %661 = vmatprep.subr.mxu0 0.0
  %662 = vmatpush1.msra.mxu0 %v94
  %663 = vmatprep.subr.mxu0 0.0
  %664 = vmatpush1.msra.mxu0 %v95
  %665 = vmatprep.subr.mxu0 0.0
  %666 = vmatpush1.msra.mxu0 %v96
  %667 = vmatprep.subr.mxu0 0.0
  %668 = vmatpush1.msra.mxu0 %v97
  %669 = vmatprep.subr.mxu0 0.0
  %670 = vmatpush1.msra.mxu0 %v98
  %671 = vmatprep.subr.mxu0 0.0
  %672 = vmatpush1.msra.mxu0 %v99
  %673 = vmatprep.subr.mxu0 0.0
  %674 = vmatpush1.msra.mxu0 %v100
  %675 = vmatprep.subr.mxu0 0.0
  %676 = vmatpush1.msra.mxu0 %v101
  %677 = vmatprep.subr.mxu0 0.0
  %678 = vmatpush1.msra.mxu0 %v102
  %679 = vmatprep.subr.mxu0 0.0
  %680 = vmatpush1.msra.mxu0 %v103
  %681 = vmatprep.subr.mxu0 0.0
  %682 = vmatpush1.msra.mxu0 %v104
  %683 = vmatprep.subr.mxu0 0.0
  %684 = vmatpush1.msra.mxu0 %v105
  %685 = vmatprep.subr.mxu0 0.0
  %686 = vmatpush1.msra.mxu0 %v106
  %687 = vmatprep.subr.mxu0 0.0
  %688 = vmatpush1.msra.mxu0 %v107
  %689 = vmatprep.subr.mxu0 0.0
  %690 = vmatpush1.msra.mxu0 %v108
  %691 = vmatprep.subr.mxu0 0.0
  %692 = vmatpush1.msra.mxu0 %v109
  %693 = vmatprep.subr.mxu0 0.0
  %694 = vmatpush1.msra.mxu0 %v110
  %695 = vmatprep.subr.mxu0 0.0
  %696 = vmatpush1.msra.mxu0 %v111
  %697 = vmatprep.subr.mxu0 0.0
  %698 = vmatpush1.msra.mxu0 %v112
  %699 = vmatprep.subr.mxu0 0.0
  %700 = vmatpush1.msra.mxu0 %v113
  %701 = vmatprep.subr.mxu0 0.0
  %702 = vmatpush1.msra.mxu0 %v114
  %703 = vmatprep.subr.mxu0 0.0
  %704 = vmatpush1.msra.mxu0 %v115
  %705 = vmatprep.mubr.f32.mxu0 %v23
  %706 = vmatmul.mubr.f32.gmra.mrb[0].mxu0 %v22
  %v707 = vpop.f32.mrb[0].mxu0
  %v708 = vadd.f32 %v638, %v707
  %v709 = vpop.f32.mrb[0].mxu0
  %710 = vdwg.mxu0
  %711 = vmatprep.subr.mxu0 0.0
  %712 = vmatpush1.msra.mxu0 %v116
  %713 = vmatprep.subr.mxu0 0.0
  %714 = vmatpush1.msra.mxu0 %v117
  %715 = vmatprep.subr.mxu0 0.0
  %716 = vmatpush1.msra.mxu0 %v118
  %717 = vmatprep.subr.mxu0 0.0
  %718 = vmatpush1.msra.mxu0 %v119
  %719 = vmatprep.subr.mxu0 0.0
  %720 = vmatpush1.msra.mxu0 %v120
  %721 = vmatprep.subr.mxu0 0.0
  %722 = vmatpush1.msra.mxu0 %v121
  %723 = vmatprep.subr.mxu0 0.0
  %724 = vmatpush1.msra.mxu0 %v122
  %725 = vmatprep.subr.mxu0 0.0
  %726 = vmatpush1.msra.mxu0 %v123
  %727 = vmatprep.subr.mxu0 0.0
  %728 = vmatpush1.msra.mxu0 %v124
  %729 = vmatprep.subr.mxu0 0.0
  %730 = vmatpush1.msra.mxu0 %v125
  %731 = vmatprep.subr.mxu0 0.0
  %732 = vmatpush1.msra.mxu0 %v126
  %733 = vmatprep.subr.mxu0 0.0
  %734 = vmatpush1.msra.mxu0 %v127
  %735 = vmatprep.subr.mxu0 0.0
  %736 = vmatpush1.msra.mxu0 %v128
  %737 = vmatprep.subr.mxu0 0.0
  %738 = vmatpush1.msra.mxu0 %v129
  %739 = vmatprep.subr.mxu0 0.0
  %740 = vmatpush1.msra.mxu0 %v130
  %741 = vmatprep.subr.mxu0 0.0
  %742 = vmatpush1.msra.mxu0 %v131
  %743 = vmatprep.subr.mxu0 0.0
  %744 = vmatpush1.msra.mxu0 %v132
  %745 = vmatprep.subr.mxu0 0.0
  %746 = vmatpush1.msra.mxu0 %v133
  %747 = vmatprep.subr.mxu0 0.0
  %748 = vmatpush1.msra.mxu0 %v134
  %749 = vmatprep.subr.mxu0 0.0
  %750 = vmatpush1.msra.mxu0 %v135
  %751 = vmatprep.subr.mxu0 0.0
  %752 = vmatpush1.msra.mxu0 %v136
  %753 = vmatprep.subr.mxu0 0.0
  %754 = vmatpush1.msra.mxu0 %v137
  %755 = vmatprep.subr.mxu0 0.0
  %756 = vmatpush1.msra.mxu0 %v138
  %757 = vmatprep.subr.mxu0 0.0
  %758 = vmatpush1.msra.mxu0 %v139
  %759 = vmatprep.subr.mxu0 0.0
  %760 = vmatpush1.msra.mxu0 %v140
  %761 = vmatprep.subr.mxu0 0.0
  %762 = vmatpush1.msra.mxu0 %v141
  %763 = vmatprep.subr.mxu0 0.0
  %764 = vmatpush1.msra.mxu0 %v142
  %765 = vmatprep.subr.mxu0 0.0
  %766 = vmatpush1.msra.mxu0 %v143
  %767 = vmatprep.subr.mxu0 0.0
  %768 = vmatpush1.msra.mxu0 %v144
  %769 = vmatprep.subr.mxu0 0.0
  %770 = vmatpush1.msra.mxu0 %v145
  %771 = vmatprep.subr.mxu0 0.0
  %772 = vmatpush1.msra.mxu0 %v146
  %773 = vmatprep.subr.mxu0 0.0
  %774 = vmatpush1.msra.mxu0 %v147
  %775 = vmatprep.mubr.f32.mxu0 %v25
  %776 = vmatmul.mubr.f32.gmra.mrb[0].mxu0 %v24
  %v777 = vpop.f32.mrb[0].mxu0
  %v778 = vadd.f32 %v708, %v777
  %v779 = vpop.f32.mrb[0].mxu0
  %780 = vdwg.mxu0
  %781 = vmatprep.subr.mxu0 0.0
  %782 = vmatpush1.msra.mxu0 %v148
  %783 = vmatprep.subr.mxu0 0.0
  %784 = vmatpush1.msra.mxu0 %v149
  %785 = vmatprep.subr.mxu0 0.0
  %786 = vmatpush1.msra.mxu0 %v150
  %787 = vmatprep.subr.mxu0 0.0
  %788 = vmatpush1.msra.mxu0 %v151
  %789 = vmatprep.subr.mxu0 0.0
  %790 = vmatpush1.msra.mxu0 %v152
  %791 = vmatprep.subr.mxu0 0.0
  %792 = vmatpush1.msra.mxu0 %v153
  %793 = vmatprep.subr.mxu0 0.0
  %794 = vmatpush1.msra.mxu0 %v154
  %795 = vmatprep.subr.mxu0 0.0
  %796 = vmatpush1.msra.mxu0 %v155
  %797 = vmatprep.subr.mxu0 0.0
  %798 = vmatpush1.msra.mxu0 %v156
  %799 = vmatprep.subr.mxu0 0.0
  %800 = vmatpush1.msra.mxu0 %v157
  %801 = vmatprep.subr.mxu0 0.0
  %802 = vmatpush1.msra.mxu0 %v158
  %803 = vmatprep.subr.mxu0 0.0
  %804 = vmatpush1.msra.mxu0 %v159
  %805 = vmatprep.subr.mxu0 0.0
  %806 = vmatpush1.msra.mxu0 %v160
  %807 = vmatprep.subr.mxu0 0.0
  %808 = vmatpush1.msra.mxu0 %v161
  %809 = vmatprep.subr.mxu0 0.0
  %810 = vmatpush1.msra.mxu0 %v162
  %811 = vmatprep.subr.mxu0 0.0
  %812 = vmatpush1.msra.mxu0 %v163
  %813 = vmatprep.subr.mxu0 0.0
  %814 = vmatpush1.msra.mxu0 %v164
  %815 = vmatprep.subr.mxu0 0.0
  %816 = vmatpush1.msra.mxu0 %v165
  %817 = vmatprep.subr.mxu0 0.0
  %818 = vmatpush1.msra.mxu0 %v166
  %819 = vmatprep.subr.mxu0 0.0
  %820 = vmatpush1.msra.mxu0 %v167
  %821 = vmatprep.subr.mxu0 0.0
  %822 = vmatpush1.msra.mxu0 %v168
  %823 = vmatprep.subr.mxu0 0.0
  %824 = vmatpush1.msra.mxu0 %v169
  %825 = vmatprep.subr.mxu0 0.0
  %826 = vmatpush1.msra.mxu0 %v170
  %827 = vmatprep.subr.mxu0 0.0
  %828 = vmatpush1.msra.mxu0 %v171
  %829 = vmatprep.subr.mxu0 0.0
  %830 = vmatpush1.msra.mxu0 %v172
  %831 = vmatprep.subr.mxu0 0.0
  %832 = vmatpush1.msra.mxu0 %v173
  %833 = vmatprep.subr.mxu0 0.0
  %834 = vmatpush1.msra.mxu0 %v174
  %835 = vmatprep.subr.mxu0 0.0
  %836 = vmatpush1.msra.mxu0 %v175
  %837 = vmatprep.subr.mxu0 0.0
  %838 = vmatpush1.msra.mxu0 %v176
  %839 = vmatprep.subr.mxu0 0.0
  %840 = vmatpush1.msra.mxu0 %v177
  %841 = vmatprep.subr.mxu0 0.0
  %842 = vmatpush1.msra.mxu0 %v178
  %843 = vmatprep.subr.mxu0 0.0
  %844 = vmatpush1.msra.mxu0 %v179
  %845 = vmatprep.mubr.f32.mxu0 %v27
  %846 = vmatmul.mubr.f32.gmra.mrb[0].mxu0 %v26
  %v847 = vpop.f32.mrb[0].mxu0
  %v848 = vadd.f32 %v778, %v847
  %v849 = vpop.f32.mrb[0].mxu0
  %850 = vdwg.mxu0
  %851 = vmatprep.subr.mxu0 0.0
  %852 = vmatpush1.msra.mxu0 %v180
  %853 = vmatprep.subr.mxu0 0.0
  %854 = vmatpush1.msra.mxu0 %v181
  %855 = vmatprep.subr.mxu0 0.0
  %856 = vmatpush1.msra.mxu0 %v182
  %857 = vmatprep.subr.mxu0 0.0
  %858 = vmatpush1.msra.mxu0 %v183
  %859 = vmatprep.subr.mxu0 0.0
  %860 = vmatpush1.msra.mxu0 %v184
  %861 = vmatprep.subr.mxu0 0.0
  %862 = vmatpush1.msra.mxu0 %v185
  %863 = vmatprep.subr.mxu0 0.0
  %864 = vmatpush1.msra.mxu0 %v186
  %865 = vmatprep.subr.mxu0 0.0
  %866 = vmatpush1.msra.mxu0 %v187
  %867 = vmatprep.subr.mxu0 0.0
  %868 = vmatpush1.msra.mxu0 %v188
  %869 = vmatprep.subr.mxu0 0.0
  %870 = vmatpush1.msra.mxu0 %v189
  %871 = vmatprep.subr.mxu0 0.0
  %872 = vmatpush1.msra.mxu0 %v190
  %873 = vmatprep.subr.mxu0 0.0
  %874 = vmatpush1.msra.mxu0 %v191
  %875 = vmatprep.subr.mxu0 0.0
  %876 = vmatpush1.msra.mxu0 %v192
  %877 = vmatprep.subr.mxu0 0.0
  %878 = vmatpush1.msra.mxu0 %v193
  %879 = vmatprep.subr.mxu0 0.0
  %880 = vmatpush1.msra.mxu0 %v194
  %881 = vmatprep.subr.mxu0 0.0
  %882 = vmatpush1.msra.mxu0 %v195
  %883 = vmatprep.subr.mxu0 0.0
  %884 = vmatpush1.msra.mxu0 %v196
  %885 = vmatprep.subr.mxu0 0.0
  %886 = vmatpush1.msra.mxu0 %v197
  %887 = vmatprep.subr.mxu0 0.0
  %888 = vmatpush1.msra.mxu0 %v198
  %889 = vmatprep.subr.mxu0 0.0
  %890 = vmatpush1.msra.mxu0 %v199
  %891 = vmatprep.subr.mxu0 0.0
  %892 = vmatpush1.msra.mxu0 %v200
  %893 = vmatprep.subr.mxu0 0.0
  %894 = vmatpush1.msra.mxu0 %v201
  %895 = vmatprep.subr.mxu0 0.0
  %896 = vmatpush1.msra.mxu0 %v202
  %897 = vmatprep.subr.mxu0 0.0
  %898 = vmatpush1.msra.mxu0 %v203
  %899 = vmatprep.subr.mxu0 0.0
  %900 = vmatpush1.msra.mxu0 %v204
  %901 = vmatprep.subr.mxu0 0.0
  %902 = vmatpush1.msra.mxu0 %v205
  %903 = vmatprep.subr.mxu0 0.0
  %904 = vmatpush1.msra.mxu0 %v206
  %905 = vmatprep.subr.mxu0 0.0
  %906 = vmatpush1.msra.mxu0 %v207
  %907 = vmatprep.subr.mxu0 0.0
  %908 = vmatpush1.msra.mxu0 %v208
  %909 = vmatprep.subr.mxu0 0.0
  %910 = vmatpush1.msra.mxu0 %v209
  %911 = vmatprep.subr.mxu0 0.0
  %912 = vmatpush1.msra.mxu0 %v210
  %913 = vmatprep.subr.mxu0 0.0
  %914 = vmatpush1.msra.mxu0 %v211
  %915 = vmatprep.mubr.f32.mxu0 %v29
  %916 = vmatmul.mubr.f32.gmra.mrb[0].mxu0 %v28
  %v917 = vpop.f32.mrb[0].mxu0
  %v918 = vadd.f32 %v848, %v917
  %v919 = vpop.f32.mrb[0].mxu0
  %920 = vdwg.mxu0
  %921 = vmatprep.subr.mxu0 0.0
  %922 = vmatpush1.msra.mxu0 %v212
  %923 = vmatprep.subr.mxu0 0.0
  %924 = vmatpush1.msra.mxu0 %v213
  %925 = vmatprep.subr.mxu0 0.0
  %926 = vmatpush1.msra.mxu0 %v214
  %927 = vmatprep.subr.mxu0 0.0
  %928 = vmatpush1.msra.mxu0 %v215
  %929 = vmatprep.subr.mxu0 0.0
  %930 = vmatpush1.msra.mxu0 %v216
  %931 = vmatprep.subr.mxu0 0.0
  %932 = vmatpush1.msra.mxu0 %v217
  %933 = vmatprep.subr.mxu0 0.0
  %934 = vmatpush1.msra.mxu0 %v218
  %935 = vmatprep.subr.mxu0 0.0
  %936 = vmatpush1.msra.mxu0 %v219
  %937 = vmatprep.subr.mxu0 0.0
  %938 = vmatpush1.msra.mxu0 %v220
  %939 = vmatprep.subr.mxu0 0.0
  %940 = vmatpush1.msra.mxu0 %v221
  %941 = vmatprep.subr.mxu0 0.0
  %942 = vmatpush1.msra.mxu0 %v222
  %943 = vmatprep.subr.mxu0 0.0
  %944 = vmatpush1.msra.mxu0 %v223
  %945 = vmatprep.subr.mxu0 0.0
  %946 = vmatpush1.msra.mxu0 %v224
  %947 = vmatprep.subr.mxu0 0.0
  %948 = vmatpush1.msra.mxu0 %v225
  %949 = vmatprep.subr.mxu0 0.0
  %950 = vmatpush1.msra.mxu0 %v226
  %951 = vmatprep.subr.mxu0 0.0
  %952 = vmatpush1.msra.mxu0 %v227
  %953 = vmatprep.subr.mxu0 0.0
  %954 = vmatpush1.msra.mxu0 %v228
  %955 = vmatprep.subr.mxu0 0.0
  %956 = vmatpush1.msra.mxu0 %v229
  %957 = vmatprep.subr.mxu0 0.0
  %958 = vmatpush1.msra.mxu0 %v230
  %959 = vmatprep.subr.mxu0 0.0
  %960 = vmatpush1.msra.mxu0 %v231
  %961 = vmatprep.subr.mxu0 0.0
  %962 = vmatpush1.msra.mxu0 %v232
  %963 = vmatprep.subr.mxu0 0.0
  %964 = vmatpush1.msra.mxu0 %v233
  %965 = vmatprep.subr.mxu0 0.0
  %966 = vmatpush1.msra.mxu0 %v234
  %967 = vmatprep.subr.mxu0 0.0
  %968 = vmatpush1.msra.mxu0 %v235
  %969 = vmatprep.subr.mxu0 0.0
  %970 = vmatpush1.msra.mxu0 %v236
  %971 = vmatprep.subr.mxu0 0.0
  %972 = vmatpush1.msra.mxu0 %v237
  %973 = vmatprep.subr.mxu0 0.0
  %974 = vmatpush1.msra.mxu0 %v238
  %975 = vmatprep.subr.mxu0 0.0
  %976 = vmatpush1.msra.mxu0 %v239
  %977 = vmatprep.subr.mxu0 0.0
  %978 = vmatpush1.msra.mxu0 %v240
  %979 = vmatprep.subr.mxu0 0.0
  %980 = vmatpush1.msra.mxu0 %v241
  %981 = vmatprep.subr.mxu0 0.0
  %982 = vmatpush1.msra.mxu0 %v242
  %983 = vmatprep.subr.mxu0 0.0
  %984 = vmatpush1.msra.mxu0 %v243
  %985 = vmatprep.mubr.f32.mxu0 %v31
  %986 = vmatmul.mubr.f32.gmra.mrb[0].mxu0 %v30
  %v987 = vpop.f32.mrb[0].mxu0
  %v988 = vadd.f32 %v918, %v987
  %v989 = vpop.f32.mrb[0].mxu0
  %990 = vdwg.mxu0
  %991 = vmatprep.subr.mxu0 0.0
  %992 = vmatpush1.msra.mxu0 %v244
  %993 = vmatprep.subr.mxu0 0.0
  %994 = vmatpush1.msra.mxu0 %v245
  %995 = vmatprep.subr.mxu0 0.0
  %996 = vmatpush1.msra.mxu0 %v246
  %997 = vmatprep.subr.mxu0 0.0
  %998 = vmatpush1.msra.mxu0 %v247
  %999 = vmatprep.subr.mxu0 0.0
  %1000 = vmatpush1.msra.mxu0 %v248
  %1001 = vmatprep.subr.mxu0 0.0
  %1002 = vmatpush1.msra.mxu0 %v249
  %1003 = vmatprep.subr.mxu0 0.0
  %1004 = vmatpush1.msra.mxu0 %v250
  %1005 = vmatprep.subr.mxu0 0.0
  %1006 = vmatpush1.msra.mxu0 %v251
  %1007 = vmatprep.subr.mxu0 0.0
  %1008 = vmatpush1.msra.mxu0 %v252
  %1009 = vmatprep.subr.mxu0 0.0
  %1010 = vmatpush1.msra.mxu0 %v253
  %1011 = vmatprep.subr.mxu0 0.0
  %1012 = vmatpush1.msra.mxu0 %v254
  %1013 = vmatprep.subr.mxu0 0.0
  %1014 = vmatpush1.msra.mxu0 %v255
  %1015 = vmatprep.subr.mxu0 0.0
  %1016 = vmatpush1.msra.mxu0 %v256
  %1017 = vmatprep.subr.mxu0 0.0
  %1018 = vmatpush1.msra.mxu0 %v257
  %1019 = vmatprep.subr.mxu0 0.0
  %1020 = vmatpush1.msra.mxu0 %v258
  %1021 = vmatprep.subr.mxu0 0.0
  %1022 = vmatpush1.msra.mxu0 %v259
  %1023 = vmatprep.subr.mxu0 0.0
  %1024 = vmatpush1.msra.mxu0 %v260
  %1025 = vmatprep.subr.mxu0 0.0
  %1026 = vmatpush1.msra.mxu0 %v261
  %1027 = vmatprep.subr.mxu0 0.0
  %1028 = vmatpush1.msra.mxu0 %v262
  %1029 = vmatprep.subr.mxu0 0.0
  %1030 = vmatpush1.msra.mxu0 %v263
  %1031 = vmatprep.subr.mxu0 0.0
  %1032 = vmatpush1.msra.mxu0 %v264
  %1033 = vmatprep.subr.mxu0 0.0
  %1034 = vmatpush1.msra.mxu0 %v265
  %1035 = vmatprep.subr.mxu0 0.0
  %1036 = vmatpush1.msra.mxu0 %v266
  %1037 = vmatprep.subr.mxu0 0.0
  %1038 = vmatpush1.msra.mxu0 %v267
  %1039 = vmatprep.subr.mxu0 0.0
  %1040 = vmatpush1.msra.mxu0 %v268
  %1041 = vmatprep.subr.mxu0 0.0
  %1042 = vmatpush1.msra.mxu0 %v269
  %1043 = vmatprep.subr.mxu0 0.0
  %1044 = vmatpush1.msra.mxu0 %v270
  %1045 = vmatprep.subr.mxu0 0.0
  %1046 = vmatpush1.msra.mxu0 %v271
  %1047 = vmatprep.subr.mxu0 0.0
  %1048 = vmatpush1.msra.mxu0 %v272
  %1049 = vmatprep.subr.mxu0 0.0
  %1050 = vmatpush1.msra.mxu0 %v273
  %1051 = vmatprep.subr.mxu0 0.0
  %1052 = vmatpush1.msra.mxu0 %v274
  %1053 = vmatprep.subr.mxu0 0.0
  %1054 = vmatpush1.msra.mxu0 %v275
  %1055 = vmatprep.mubr.f32.mxu0 %v33
  %1056 = vmatmul.mubr.f32.gmra.mrb[0].mxu0 %v32
  %v1057 = vpop.f32.mrb[0].mxu0
  %v1058 = vadd.f32 %v988, %v1057
  %v1059 = vpop.f32.mrb[0].mxu0
  %1060 = vdwg.mxu0
  %1061 = vmatprep.subr.mxu0 0.0
  %1062 = vmatpush1.msra.mxu0 %v276
  %1063 = vmatprep.subr.mxu0 0.0
  %1064 = vmatpush1.msra.mxu0 %v277
  %1065 = vmatprep.subr.mxu0 0.0
  %1066 = vmatpush1.msra.mxu0 %v278
  %1067 = vmatprep.subr.mxu0 0.0
  %1068 = vmatpush1.msra.mxu0 %v279
  %1069 = vmatprep.subr.mxu0 0.0
  %1070 = vmatpush1.msra.mxu0 %v280
  %1071 = vmatprep.subr.mxu0 0.0
  %1072 = vmatpush1.msra.mxu0 %v281
  %1073 = vmatprep.subr.mxu0 0.0
  %1074 = vmatpush1.msra.mxu0 %v282
  %1075 = vmatprep.subr.mxu0 0.0
  %1076 = vmatpush1.msra.mxu0 %v283
  %1077 = vmatprep.subr.mxu0 0.0
  %1078 = vmatpush1.msra.mxu0 %v284
  %1079 = vmatprep.subr.mxu0 0.0
  %1080 = vmatpush1.msra.mxu0 %v285
  %1081 = vmatprep.subr.mxu0 0.0
  %1082 = vmatpush1.msra.mxu0 %v286
  %1083 = vmatprep.subr.mxu0 0.0
  %1084 = vmatpush1.msra.mxu0 %v287
  %1085 = vmatprep.subr.mxu0 0.0
  %1086 = vmatpush1.msra.mxu0 %v288
  %1087 = vmatprep.subr.mxu0 0.0
  %1088 = vmatpush1.msra.mxu0 %v289
  %1089 = vmatprep.subr.mxu0 0.0
  %1090 = vmatpush1.msra.mxu0 %v290
  %1091 = vmatprep.subr.mxu0 0.0
  %1092 = vmatpush1.msra.mxu0 %v291
  %1093 = vmatprep.subr.mxu0 0.0
  %1094 = vmatpush1.msra.mxu0 %v292
  %1095 = vmatprep.subr.mxu0 0.0
  %1096 = vmatpush1.msra.mxu0 %v293
  %1097 = vmatprep.subr.mxu0 0.0
  %1098 = vmatpush1.msra.mxu0 %v294
  %1099 = vmatprep.subr.mxu0 0.0
  %1100 = vmatpush1.msra.mxu0 %v295
  %1101 = vmatprep.subr.mxu0 0.0
  %1102 = vmatpush1.msra.mxu0 %v296
  %1103 = vmatprep.subr.mxu0 0.0
  %1104 = vmatpush1.msra.mxu0 %v297
  %1105 = vmatprep.subr.mxu0 0.0
  %1106 = vmatpush1.msra.mxu0 %v298
  %1107 = vmatprep.subr.mxu0 0.0
  %1108 = vmatpush1.msra.mxu0 %v299
  %1109 = vmatprep.subr.mxu0 0.0
  %1110 = vmatpush1.msra.mxu0 %v300
  %1111 = vmatprep.subr.mxu0 0.0
  %1112 = vmatpush1.msra.mxu0 %v301
  %1113 = vmatprep.subr.mxu0 0.0
  %1114 = vmatpush1.msra.mxu0 %v302
  %1115 = vmatprep.subr.mxu0 0.0
  %1116 = vmatpush1.msra.mxu0 %v303
  %1117 = vmatprep.subr.mxu0 0.0
  %1118 = vmatpush1.msra.mxu0 %v304
  %1119 = vmatprep.subr.mxu0 0.0
  %1120 = vmatpush1.msra.mxu0 %v305
  %1121 = vmatprep.subr.mxu0 0.0
  %1122 = vmatpush1.msra.mxu0 %v306
  %1123 = vmatprep.subr.mxu0 0.0
  %1124 = vmatpush1.msra.mxu0 %v307
  %1125 = vmatprep.mubr.f32.mxu0 %v35
  %1126 = vmatmul.mubr.f32.gmra.mrb[0].mxu0 %v34
  %v1127 = vpop.f32.mrb[0].mxu0
  %v1128 = vadd.f32 %v1058, %v1127
  %v1129 = vpop.f32.mrb[0].mxu0
  %1130 = vdwg.mxu0
  %1131 = vmatprep.subr.mxu0 0.0
  %1132 = vmatpush1.msra.mxu0 %v308
  %1133 = vmatprep.subr.mxu0 0.0
  %1134 = vmatpush1.msra.mxu0 %v309
  %1135 = vmatprep.subr.mxu0 0.0
  %1136 = vmatpush1.msra.mxu0 %v310
  %1137 = vmatprep.subr.mxu0 0.0
  %1138 = vmatpush1.msra.mxu0 %v311
  %1139 = vmatprep.subr.mxu0 0.0
  %1140 = vmatpush1.msra.mxu0 %v312
  %1141 = vmatprep.subr.mxu0 0.0
  %1142 = vmatpush1.msra.mxu0 %v313
  %1143 = vmatprep.subr.mxu0 0.0
  %1144 = vmatpush1.msra.mxu0 %v314
  %1145 = vmatprep.subr.mxu0 0.0
  %1146 = vmatpush1.msra.mxu0 %v315
  %1147 = vmatprep.subr.mxu0 0.0
  %1148 = vmatpush1.msra.mxu0 %v316
  %1149 = vmatprep.subr.mxu0 0.0
  %1150 = vmatpush1.msra.mxu0 %v317
  %1151 = vmatprep.subr.mxu0 0.0
  %1152 = vmatpush1.msra.mxu0 %v318
  %1153 = vmatprep.subr.mxu0 0.0
  %1154 = vmatpush1.msra.mxu0 %v319
  %1155 = vmatprep.subr.mxu0 0.0
  %1156 = vmatpush1.msra.mxu0 %v320
  %1157 = vmatprep.subr.mxu0 0.0
  %1158 = vmatpush1.msra.mxu0 %v321
  %1159 = vmatprep.subr.mxu0 0.0
  %1160 = vmatpush1.msra.mxu0 %v322
  %1161 = vmatprep.subr.mxu0 0.0
  %1162 = vmatpush1.msra.mxu0 %v323
  %1163 = vmatprep.subr.mxu0 0.0
  %1164 = vmatpush1.msra.mxu0 %v324
  %1165 = vmatprep.subr.mxu0 0.0
  %1166 = vmatpush1.msra.mxu0 %v325
  %1167 = vmatprep.subr.mxu0 0.0
  %1168 = vmatpush1.msra.mxu0 %v326
  %1169 = vmatprep.subr.mxu0 0.0
  %1170 = vmatpush1.msra.mxu0 %v327
  %1171 = vmatprep.subr.mxu0 0.0
  %1172 = vmatpush1.msra.mxu0 %v328
  %1173 = vmatprep.subr.mxu0 0.0
  %1174 = vmatpush1.msra.mxu0 %v329
  %1175 = vmatprep.subr.mxu0 0.0
  %1176 = vmatpush1.msra.mxu0 %v330
  %1177 = vmatprep.subr.mxu0 0.0
  %1178 = vmatpush1.msra.mxu0 %v331
  %1179 = vmatprep.subr.mxu0 0.0
  %1180 = vmatpush1.msra.mxu0 %v332
  %1181 = vmatprep.subr.mxu0 0.0
  %1182 = vmatpush1.msra.mxu0 %v333
  %1183 = vmatprep.subr.mxu0 0.0
  %1184 = vmatpush1.msra.mxu0 %v334
  %1185 = vmatprep.subr.mxu0 0.0
  %1186 = vmatpush1.msra.mxu0 %v335
  %1187 = vmatprep.subr.mxu0 0.0
  %1188 = vmatpush1.msra.mxu0 %v336
  %1189 = vmatprep.subr.mxu0 0.0
  %1190 = vmatpush1.msra.mxu0 %v337
  %1191 = vmatprep.subr.mxu0 0.0
  %1192 = vmatpush1.msra.mxu0 %v338
  %1193 = vmatprep.subr.mxu0 0.0
  %1194 = vmatpush1.msra.mxu0 %v339
  %1195 = vmatprep.mubr.f32.mxu0 %v37
  %1196 = vmatmul.mubr.f32.gmra.mrb[0].mxu0 %v36
  %v1197 = vpop.f32.mrb[0].mxu0
  %v1198 = vadd.f32 %v1128, %v1197
  %v1199 = vpop.f32.mrb[0].mxu0
  %1200 = vdwg.mxu0
  %1201 = vmatprep.subr.mxu0 0.0
  %1202 = vmatpush1.msra.mxu0 %v340
  %1203 = vmatprep.subr.mxu0 0.0
  %1204 = vmatpush1.msra.mxu0 %v341
  %1205 = vmatprep.subr.mxu0 0.0
  %1206 = vmatpush1.msra.mxu0 %v342
  %1207 = vmatprep.subr.mxu0 0.0
  %1208 = vmatpush1.msra.mxu0 %v343
  %1209 = vmatprep.subr.mxu0 0.0
  %1210 = vmatpush1.msra.mxu0 %v344
  %1211 = vmatprep.subr.mxu0 0.0
  %1212 = vmatpush1.msra.mxu0 %v345
  %1213 = vmatprep.subr.mxu0 0.0
  %1214 = vmatpush1.msra.mxu0 %v346
  %1215 = vmatprep.subr.mxu0 0.0
  %1216 = vmatpush1.msra.mxu0 %v347
  %1217 = vmatprep.subr.mxu0 0.0
  %1218 = vmatpush1.msra.mxu0 %v348
  %1219 = vmatprep.subr.mxu0 0.0
  %1220 = vmatpush1.msra.mxu0 %v349
  %1221 = vmatprep.subr.mxu0 0.0
  %1222 = vmatpush1.msra.mxu0 %v350
  %1223 = vmatprep.subr.mxu0 0.0
  %1224 = vmatpush1.msra.mxu0 %v351
  %1225 = vmatprep.subr.mxu0 0.0
  %1226 = vmatpush1.msra.mxu0 %v352
  %1227 = vmatprep.subr.mxu0 0.0
  %1228 = vmatpush1.msra.mxu0 %v353
  %1229 = vmatprep.subr.mxu0 0.0
  %1230 = vmatpush1.msra.mxu0 %v354
  %1231 = vmatprep.subr.mxu0 0.0
  %1232 = vmatpush1.msra.mxu0 %v355
  %1233 = vmatprep.subr.mxu0 0.0
  %1234 = vmatpush1.msra.mxu0 %v356
  %1235 = vmatprep.subr.mxu0 0.0
  %1236 = vmatpush1.msra.mxu0 %v357
  %1237 = vmatprep.subr.mxu0 0.0
  %1238 = vmatpush1.msra.mxu0 %v358
  %1239 = vmatprep.subr.mxu0 0.0
  %1240 = vmatpush1.msra.mxu0 %v359
  %1241 = vmatprep.subr.mxu0 0.0
  %1242 = vmatpush1.msra.mxu0 %v360
  %1243 = vmatprep.subr.mxu0 0.0
  %1244 = vmatpush1.msra.mxu0 %v361
  %1245 = vmatprep.subr.mxu0 0.0
  %1246 = vmatpush1.msra.mxu0 %v362
  %1247 = vmatprep.subr.mxu0 0.0
  %1248 = vmatpush1.msra.mxu0 %v363
  %1249 = vmatprep.subr.mxu0 0.0
  %1250 = vmatpush1.msra.mxu0 %v364
  %1251 = vmatprep.subr.mxu0 0.0
  %1252 = vmatpush1.msra.mxu0 %v365
  %1253 = vmatprep.subr.mxu0 0.0
  %1254 = vmatpush1.msra.mxu0 %v366
  %1255 = vmatprep.subr.mxu0 0.0
  %1256 = vmatpush1.msra.mxu0 %v367
  %1257 = vmatprep.subr.mxu0 0.0
  %1258 = vmatpush1.msra.mxu0 %v368
  %1259 = vmatprep.subr.mxu0 0.0
  %1260 = vmatpush1.msra.mxu0 %v369
  %1261 = vmatprep.subr.mxu0 0.0
  %1262 = vmatpush1.msra.mxu0 %v370
  %1263 = vmatprep.subr.mxu0 0.0
  %1264 = vmatpush1.msra.mxu0 %v371
  %1265 = vmatprep.mubr.f32.mxu0 %v39
  %1266 = vmatmul.mubr.f32.gmra.mrb[0].mxu0 %v38
  %v1267 = vpop.f32.mrb[0].mxu0
  %v1268 = vadd.f32 %v1198, %v1267
  %v1269 = vpop.f32.mrb[0].mxu0
  %1270 = vdwg.mxu0
  %1271 = vmatprep.subr.mxu0 0.0
  %1272 = vmatpush1.msra.mxu0 %v372
  %1273 = vmatprep.subr.mxu0 0.0
  %1274 = vmatpush1.msra.mxu0 %v373
  %1275 = vmatprep.subr.mxu0 0.0
  %1276 = vmatpush1.msra.mxu0 %v374
  %1277 = vmatprep.subr.mxu0 0.0
  %1278 = vmatpush1.msra.mxu0 %v375
  %1279 = vmatprep.subr.mxu0 0.0
  %1280 = vmatpush1.msra.mxu0 %v376
  %1281 = vmatprep.subr.mxu0 0.0
  %1282 = vmatpush1.msra.mxu0 %v377
  %1283 = vmatprep.subr.mxu0 0.0
  %1284 = vmatpush1.msra.mxu0 %v378
  %1285 = vmatprep.subr.mxu0 0.0
  %1286 = vmatpush1.msra.mxu0 %v379
  %1287 = vmatprep.subr.mxu0 0.0
  %1288 = vmatpush1.msra.mxu0 %v380
  %1289 = vmatprep.subr.mxu0 0.0
  %1290 = vmatpush1.msra.mxu0 %v381
  %1291 = vmatprep.subr.mxu0 0.0
  %1292 = vmatpush1.msra.mxu0 %v382
  %1293 = vmatprep.subr.mxu0 0.0
  %1294 = vmatpush1.msra.mxu0 %v383
  %1295 = vmatprep.subr.mxu0 0.0
  %1296 = vmatpush1.msra.mxu0 %v384
  %1297 = vmatprep.subr.mxu0 0.0
  %1298 = vmatpush1.msra.mxu0 %v385
  %1299 = vmatprep.subr.mxu0 0.0
  %1300 = vmatpush1.msra.mxu0 %v386
  %1301 = vmatprep.subr.mxu0 0.0
  %1302 = vmatpush1.msra.mxu0 %v387
  %1303 = vmatprep.subr.mxu0 0.0
  %1304 = vmatpush1.msra.mxu0 %v388
  %1305 = vmatprep.subr.mxu0 0.0
  %1306 = vmatpush1.msra.mxu0 %v389
  %1307 = vmatprep.subr.mxu0 0.0
  %1308 = vmatpush1.msra.mxu0 %v390
  %1309 = vmatprep.subr.mxu0 0.0
  %1310 = vmatpush1.msra.mxu0 %v391
  %1311 = vmatprep.subr.mxu0 0.0
  %1312 = vmatpush1.msra.mxu0 %v392
  %1313 = vmatprep.subr.mxu0 0.0
  %1314 = vmatpush1.msra.mxu0 %v393
  %1315 = vmatprep.subr.mxu0 0.0
  %1316 = vmatpush1.msra.mxu0 %v394
  %1317 = vmatprep.subr.mxu0 0.0
  %1318 = vmatpush1.msra.mxu0 %v395
  %1319 = vmatprep.subr.mxu0 0.0
  %1320 = vmatpush1.msra.mxu0 %v396
  %1321 = vmatprep.subr.mxu0 0.0
  %1322 = vmatpush1.msra.mxu0 %v397
  %1323 = vmatprep.subr.mxu0 0.0
  %1324 = vmatpush1.msra.mxu0 %v398
  %1325 = vmatprep.subr.mxu0 0.0
  %1326 = vmatpush1.msra.mxu0 %v399
  %1327 = vmatprep.subr.mxu0 0.0
  %1328 = vmatpush1.msra.mxu0 %v400
  %1329 = vmatprep.subr.mxu0 0.0
  %1330 = vmatpush1.msra.mxu0 %v401
  %1331 = vmatprep.subr.mxu0 0.0
  %1332 = vmatpush1.msra.mxu0 %v402
  %1333 = vmatprep.subr.mxu0 0.0
  %1334 = vmatpush1.msra.mxu0 %v403
  %1335 = vmatprep.mubr.f32.mxu0 %v41
  %1336 = vmatmul.mubr.f32.gmra.mrb[0].mxu0 %v40
  %v1337 = vpop.f32.mrb[0].mxu0
  %v1338 = vadd.f32 %v1268, %v1337
  %v1339 = vpop.f32.mrb[0].mxu0
  %1340 = vdwg.mxu0
  %1341 = vmatprep.subr.mxu0 0.0
  %1342 = vmatpush1.msra.mxu0 %v404
  %1343 = vmatprep.subr.mxu0 0.0
  %1344 = vmatpush1.msra.mxu0 %v405
  %1345 = vmatprep.subr.mxu0 0.0
  %1346 = vmatpush1.msra.mxu0 %v406
  %1347 = vmatprep.subr.mxu0 0.0
  %1348 = vmatpush1.msra.mxu0 %v407
  %1349 = vmatprep.subr.mxu0 0.0
  %1350 = vmatpush1.msra.mxu0 %v408
  %1351 = vmatprep.subr.mxu0 0.0
  %1352 = vmatpush1.msra.mxu0 %v409
  %1353 = vmatprep.subr.mxu0 0.0
  %1354 = vmatpush1.msra.mxu0 %v410
  %1355 = vmatprep.subr.mxu0 0.0
  %1356 = vmatpush1.msra.mxu0 %v411
  %1357 = vmatprep.subr.mxu0 0.0
  %1358 = vmatpush1.msra.mxu0 %v412
  %1359 = vmatprep.subr.mxu0 0.0
  %1360 = vmatpush1.msra.mxu0 %v413
  %1361 = vmatprep.subr.mxu0 0.0
  %1362 = vmatpush1.msra.mxu0 %v414
  %1363 = vmatprep.subr.mxu0 0.0
  %1364 = vmatpush1.msra.mxu0 %v415
  %1365 = vmatprep.subr.mxu0 0.0
  %1366 = vmatpush1.msra.mxu0 %v416
  %1367 = vmatprep.subr.mxu0 0.0
  %1368 = vmatpush1.msra.mxu0 %v417
  %1369 = vmatprep.subr.mxu0 0.0
  %1370 = vmatpush1.msra.mxu0 %v418
  %1371 = vmatprep.subr.mxu0 0.0
  %1372 = vmatpush1.msra.mxu0 %v419
  %1373 = vmatprep.subr.mxu0 0.0
  %1374 = vmatpush1.msra.mxu0 %v420
  %1375 = vmatprep.subr.mxu0 0.0
  %1376 = vmatpush1.msra.mxu0 %v421
  %1377 = vmatprep.subr.mxu0 0.0
  %1378 = vmatpush1.msra.mxu0 %v422
  %1379 = vmatprep.subr.mxu0 0.0
  %1380 = vmatpush1.msra.mxu0 %v423
  %1381 = vmatprep.subr.mxu0 0.0
  %1382 = vmatpush1.msra.mxu0 %v424
  %1383 = vmatprep.subr.mxu0 0.0
  %1384 = vmatpush1.msra.mxu0 %v425
  %1385 = vmatprep.subr.mxu0 0.0
  %1386 = vmatpush1.msra.mxu0 %v426
  %1387 = vmatprep.subr.mxu0 0.0
  %1388 = vmatpush1.msra.mxu0 %v427
  %1389 = vmatprep.subr.mxu0 0.0
  %1390 = vmatpush1.msra.mxu0 %v428
  %1391 = vmatprep.subr.mxu0 0.0
  %1392 = vmatpush1.msra.mxu0 %v429
  %1393 = vmatprep.subr.mxu0 0.0
  %1394 = vmatpush1.msra.mxu0 %v430
  %1395 = vmatprep.subr.mxu0 0.0
  %1396 = vmatpush1.msra.mxu0 %v431
  %1397 = vmatprep.subr.mxu0 0.0
  %1398 = vmatpush1.msra.mxu0 %v432
  %1399 = vmatprep.subr.mxu0 0.0
  %1400 = vmatpush1.msra.mxu0 %v433
  %1401 = vmatprep.subr.mxu0 0.0
  %1402 = vmatpush1.msra.mxu0 %v434
  %1403 = vmatprep.subr.mxu0 0.0
  %1404 = vmatpush1.msra.mxu0 %v435
  %1405 = vmatprep.mubr.f32.mxu0 %v43
  %1406 = vmatmul.mubr.f32.gmra.mrb[0].mxu0 %v42
  %v1407 = vpop.f32.mrb[0].mxu0
  %v1408 = vadd.f32 %v1338, %v1407
  %v1409 = vpop.f32.mrb[0].mxu0
  %1410 = vdwg.mxu0
  %1411 = vmatprep.subr.mxu0 0.0
  %1412 = vmatpush1.msra.mxu0 %v436
  %1413 = vmatprep.subr.mxu0 0.0
  %1414 = vmatpush1.msra.mxu0 %v437
  %1415 = vmatprep.subr.mxu0 0.0
  %1416 = vmatpush1.msra.mxu0 %v438
  %1417 = vmatprep.subr.mxu0 0.0
  %1418 = vmatpush1.msra.mxu0 %v439
  %1419 = vmatprep.subr.mxu0 0.0
  %1420 = vmatpush1.msra.mxu0 %v440
  %1421 = vmatprep.subr.mxu0 0.0
  %1422 = vmatpush1.msra.mxu0 %v441
  %1423 = vmatprep.subr.mxu0 0.0
  %1424 = vmatpush1.msra.mxu0 %v442
  %1425 = vmatprep.subr.mxu0 0.0
  %1426 = vmatpush1.msra.mxu0 %v443
  %1427 = vmatprep.subr.mxu0 0.0
  %1428 = vmatpush1.msra.mxu0 %v444
  %1429 = vmatprep.subr.mxu0 0.0
  %1430 = vmatpush1.msra.mxu0 %v445
  %1431 = vmatprep.subr.mxu0 0.0
  %1432 = vmatpush1.msra.mxu0 %v446
  %1433 = vmatprep.subr.mxu0 0.0
  %1434 = vmatpush1.msra.mxu0 %v447
  %1435 = vmatprep.subr.mxu0 0.0
  %1436 = vmatpush1.msra.mxu0 %v448
  %1437 = vmatprep.subr.mxu0 0.0
  %1438 = vmatpush1.msra.mxu0 %v449
  %1439 = vmatprep.subr.mxu0 0.0
  %1440 = vmatpush1.msra.mxu0 %v450
  %1441 = vmatprep.subr.mxu0 0.0
  %1442 = vmatpush1.msra.mxu0 %v451
  %1443 = vmatprep.subr.mxu0 0.0
  %1444 = vmatpush1.msra.mxu0 %v452
  %1445 = vmatprep.subr.mxu0 0.0
  %1446 = vmatpush1.msra.mxu0 %v453
  %1447 = vmatprep.subr.mxu0 0.0
  %1448 = vmatpush1.msra.mxu0 %v454
  %1449 = vmatprep.subr.mxu0 0.0
  %1450 = vmatpush1.msra.mxu0 %v455
  %1451 = vmatprep.subr.mxu0 0.0
  %1452 = vmatpush1.msra.mxu0 %v456
  %1453 = vmatprep.subr.mxu0 0.0
  %1454 = vmatpush1.msra.mxu0 %v457
  %1455 = vmatprep.subr.mxu0 0.0
  %1456 = vmatpush1.msra.mxu0 %v458
  %1457 = vmatprep.subr.mxu0 0.0
  %1458 = vmatpush1.msra.mxu0 %v459
  %1459 = vmatprep.subr.mxu0 0.0
  %1460 = vmatpush1.msra.mxu0 %v460
  %1461 = vmatprep.subr.mxu0 0.0
  %1462 = vmatpush1.msra.mxu0 %v461
  %1463 = vmatprep.subr.mxu0 0.0
  %1464 = vmatpush1.msra.mxu0 %v462
  %1465 = vmatprep.subr.mxu0 0.0
  %1466 = vmatpush1.msra.mxu0 %v463
  %1467 = vmatprep.subr.mxu0 0.0
  %1468 = vmatpush1.msra.mxu0 %v464
  %1469 = vmatprep.subr.mxu0 0.0
  %1470 = vmatpush1.msra.mxu0 %v465
  %1471 = vmatprep.subr.mxu0 0.0
  %1472 = vmatpush1.msra.mxu0 %v466
  %1473 = vmatprep.subr.mxu0 0.0
  %1474 = vmatpush1.msra.mxu0 %v467
  %1475 = vmatprep.mubr.f32.mxu0 %v45
  %1476 = vmatmul.mubr.f32.gmra.mrb[0].mxu0 %v44
  %v1477 = vpop.f32.mrb[0].mxu0
  %v1478 = vadd.f32 %v1408, %v1477
  %v1479 = vpop.f32.mrb[0].mxu0
  %1480 = vdwg.mxu0
  %1481 = vmatprep.subr.mxu0 0.0
  %1482 = vmatpush1.msra.mxu0 %v468
  %1483 = vmatprep.subr.mxu0 0.0
  %1484 = vmatpush1.msra.mxu0 %v469
  %1485 = vmatprep.subr.mxu0 0.0
  %1486 = vmatpush1.msra.mxu0 %v470
  %1487 = vmatprep.subr.mxu0 0.0
  %1488 = vmatpush1.msra.mxu0 %v471
  %1489 = vmatprep.subr.mxu0 0.0
  %1490 = vmatpush1.msra.mxu0 %v472
  %1491 = vmatprep.subr.mxu0 0.0
  %1492 = vmatpush1.msra.mxu0 %v473
  %1493 = vmatprep.subr.mxu0 0.0
  %1494 = vmatpush1.msra.mxu0 %v474
  %1495 = vmatprep.subr.mxu0 0.0
  %1496 = vmatpush1.msra.mxu0 %v475
  %1497 = vmatprep.subr.mxu0 0.0
  %1498 = vmatpush1.msra.mxu0 %v476
  %1499 = vmatprep.subr.mxu0 0.0
  %1500 = vmatpush1.msra.mxu0 %v477
  %1501 = vmatprep.subr.mxu0 0.0
  %1502 = vmatpush1.msra.mxu0 %v478
  %1503 = vmatprep.subr.mxu0 0.0
  %1504 = vmatpush1.msra.mxu0 %v479
  %1505 = vmatprep.subr.mxu0 0.0
  %1506 = vmatpush1.msra.mxu0 %v480
  %1507 = vmatprep.subr.mxu0 0.0
  %1508 = vmatpush1.msra.mxu0 %v481
  %1509 = vmatprep.subr.mxu0 0.0
  %1510 = vmatpush1.msra.mxu0 %v482
  %1511 = vmatprep.subr.mxu0 0.0
  %1512 = vmatpush1.msra.mxu0 %v483
  %1513 = vmatprep.subr.mxu0 0.0
  %1514 = vmatpush1.msra.mxu0 %v484
  %1515 = vmatprep.subr.mxu0 0.0
  %1516 = vmatpush1.msra.mxu0 %v485
  %1517 = vmatprep.subr.mxu0 0.0
  %1518 = vmatpush1.msra.mxu0 %v486
  %1519 = vmatprep.subr.mxu0 0.0
  %1520 = vmatpush1.msra.mxu0 %v487
  %1521 = vmatprep.subr.mxu0 0.0
  %1522 = vmatpush1.msra.mxu0 %v488
  %1523 = vmatprep.subr.mxu0 0.0
  %1524 = vmatpush1.msra.mxu0 %v489
  %1525 = vmatprep.subr.mxu0 0.0
  %1526 = vmatpush1.msra.mxu0 %v490
  %1527 = vmatprep.subr.mxu0 0.0
  %1528 = vmatpush1.msra.mxu0 %v491
  %1529 = vmatprep.subr.mxu0 0.0
  %1530 = vmatpush1.msra.mxu0 %v492
  %1531 = vmatprep.subr.mxu0 0.0
  %1532 = vmatpush1.msra.mxu0 %v493
  %1533 = vmatprep.subr.mxu0 0.0
  %1534 = vmatpush1.msra.mxu0 %v494
  %1535 = vmatprep.subr.mxu0 0.0
  %1536 = vmatpush1.msra.mxu0 %v495
  %1537 = vmatprep.subr.mxu0 0.0
  %1538 = vmatpush1.msra.mxu0 %v496
  %1539 = vmatprep.subr.mxu0 0.0
  %1540 = vmatpush1.msra.mxu0 %v497
  %1541 = vmatprep.subr.mxu0 0.0
  %1542 = vmatpush1.msra.mxu0 %v498
  %1543 = vmatprep.subr.mxu0 0.0
  %1544 = vmatpush1.msra.mxu0 %v499
  %1545 = vmatprep.mubr.f32.mxu0 %v47
  %1546 = vmatmul.mubr.f32.gmra.mrb[0].mxu0 %v46
  %v1547 = vpop.f32.mrb[0].mxu0
  %v1548 = vadd.f32 %v1478, %v1547
  %v1549 = vpop.f32.mrb[0].mxu0
  %1550 = vdwg.mxu0
  %1551 = vmatprep.subr.mxu0 0.0
  %1552 = vmatpush1.msra.mxu0 %v500
  %1553 = vmatprep.subr.mxu0 0.0
  %1554 = vmatpush1.msra.mxu0 %v501
  %1555 = vmatprep.subr.mxu0 0.0
  %1556 = vmatpush1.msra.mxu0 %v502
  %1557 = vmatprep.subr.mxu0 0.0
  %1558 = vmatpush1.msra.mxu0 %v503
  %1559 = vmatprep.subr.mxu0 0.0
  %1560 = vmatpush1.msra.mxu0 %v504
  %1561 = vmatprep.subr.mxu0 0.0
  %1562 = vmatpush1.msra.mxu0 %v505
  %1563 = vmatprep.subr.mxu0 0.0
  %1564 = vmatpush1.msra.mxu0 %v506
  %1565 = vmatprep.subr.mxu0 0.0
  %1566 = vmatpush1.msra.mxu0 %v507
  %1567 = vmatprep.subr.mxu0 0.0
  %1568 = vmatpush1.msra.mxu0 %v508
  %1569 = vmatprep.subr.mxu0 0.0
  %1570 = vmatpush1.msra.mxu0 %v509
  %1571 = vmatprep.subr.mxu0 0.0
  %1572 = vmatpush1.msra.mxu0 %v510
  %1573 = vmatprep.subr.mxu0 0.0
  %1574 = vmatpush1.msra.mxu0 %v511
  %1575 = vmatprep.subr.mxu0 0.0
  %1576 = vmatpush1.msra.mxu0 %v512
  %1577 = vmatprep.subr.mxu0 0.0
  %1578 = vmatpush1.msra.mxu0 %v513
  %1579 = vmatprep.subr.mxu0 0.0
  %1580 = vmatpush1.msra.mxu0 %v514
  %1581 = vmatprep.subr.mxu0 0.0
  %1582 = vmatpush1.msra.mxu0 %v515
  %1583 = vmatprep.subr.mxu0 0.0
  %1584 = vmatpush1.msra.mxu0 %v516
  %1585 = vmatprep.subr.mxu0 0.0
  %1586 = vmatpush1.msra.mxu0 %v517
  %1587 = vmatprep.subr.mxu0 0.0
  %1588 = vmatpush1.msra.mxu0 %v518
  %1589 = vmatprep.subr.mxu0 0.0
  %1590 = vmatpush1.msra.mxu0 %v519
  %1591 = vmatprep.subr.mxu0 0.0
  %1592 = vmatpush1.msra.mxu0 %v520
  %1593 = vmatprep.subr.mxu0 0.0
  %1594 = vmatpush1.msra.mxu0 %v521
  %1595 = vmatprep.subr.mxu0 0.0
  %1596 = vmatpush1.msra.mxu0 %v522
  %1597 = vmatprep.subr.mxu0 0.0
  %1598 = vmatpush1.msra.mxu0 %v523
  %1599 = vmatprep.subr.mxu0 0.0
  %1600 = vmatpush1.msra.mxu0 %v524
  %1601 = vmatprep.subr.mxu0 0.0
  %1602 = vmatpush1.msra.mxu0 %v525
  %1603 = vmatprep.subr.mxu0 0.0
  %1604 = vmatpush1.msra.mxu0 %v526
  %1605 = vmatprep.subr.mxu0 0.0
  %1606 = vmatpush1.msra.mxu0 %v527
  %1607 = vmatprep.subr.mxu0 0.0
  %1608 = vmatpush1.msra.mxu0 %v528
  %1609 = vmatprep.subr.mxu0 0.0
  %1610 = vmatpush1.msra.mxu0 %v529
  %1611 = vmatprep.subr.mxu0 0.0
  %1612 = vmatpush1.msra.mxu0 %v530
  %1613 = vmatprep.subr.mxu0 0.0
  %1614 = vmatpush1.msra.mxu0 %v531
  %1615 = vmatprep.mubr.f32.mxu0 %v49
  %1616 = vmatmul.mubr.f32.gmra.mrb[0].mxu0 %v48
  %v1617 = vpop.f32.mrb[0].mxu0
  %v1618 = vadd.f32 %v1548, %v1617
  %v1619 = vpop.f32.mrb[0].mxu0
  %1620 = vdwg.mxu0
  %1621 = vmatprep.subr.mxu0 0.0
  %1622 = vmatpush1.msra.mxu0 %v532
  %1623 = vmatprep.subr.mxu0 0.0
  %1624 = vmatpush1.msra.mxu0 %v533
  %1625 = vmatprep.subr.mxu0 0.0
  %1626 = vmatpush1.msra.mxu0 %v534
  %1627 = vmatprep.subr.mxu0 0.0
  %1628 = vmatpush1.msra.mxu0 %v535
  %1629 = vmatprep.subr.mxu0 0.0
  %1630 = vmatpush1.msra.mxu0 %v536
  %1631 = vmatprep.subr.mxu0 0.0
  %1632 = vmatpush1.msra.mxu0 %v537
  %1633 = vmatprep.subr.mxu0 0.0
  %1634 = vmatpush1.msra.mxu0 %v538
  %1635 = vmatprep.subr.mxu0 0.0
  %1636 = vmatpush1.msra.mxu0 %v539
  %1637 = vmatprep.subr.mxu0 0.0
  %1638 = vmatpush1.msra.mxu0 %v540
  %1639 = vmatprep.subr.mxu0 0.0
  %1640 = vmatpush1.msra.mxu0 %v541
  %1641 = vmatprep.subr.mxu0 0.0
  %1642 = vmatpush1.msra.mxu0 %v542
  %1643 = vmatprep.subr.mxu0 0.0
  %1644 = vmatpush1.msra.mxu0 %v543
  %1645 = vmatprep.subr.mxu0 0.0
  %1646 = vmatpush1.msra.mxu0 %v544
  %1647 = vmatprep.subr.mxu0 0.0
  %1648 = vmatpush1.msra.mxu0 %v545
  %1649 = vmatprep.subr.mxu0 0.0
  %1650 = vmatpush1.msra.mxu0 %v546
  %1651 = vmatprep.subr.mxu0 0.0
  %1652 = vmatpush1.msra.mxu0 %v547
  %1653 = vmatprep.subr.mxu0 0.0
  %1654 = vmatpush1.msra.mxu0 %v548
  %1655 = vmatprep.subr.mxu0 0.0
  %1656 = vmatpush1.msra.mxu0 %v549
  %1657 = vmatprep.subr.mxu0 0.0
  %1658 = vmatpush1.msra.mxu0 %v550
  %1659 = vmatprep.subr.mxu0 0.0
  %1660 = vmatpush1.msra.mxu0 %v551
  %1661 = vmatprep.subr.mxu0 0.0
  %1662 = vmatpush1.msra.mxu0 %v552
  %1663 = vmatprep.subr.mxu0 0.0
  %1664 = vmatpush1.msra.mxu0 %v553
  %1665 = vmatprep.subr.mxu0 0.0
  %1666 = vmatpush1.msra.mxu0 %v554
  %1667 = vmatprep.subr.mxu0 0.0
  %1668 = vmatpush1.msra.mxu0 %v555
  %1669 = vmatprep.subr.mxu0 0.0
  %1670 = vmatpush1.msra.mxu0 %v556
  %1671 = vmatprep.subr.mxu0 0.0
  %1672 = vmatpush1.msra.mxu0 %v557
  %1673 = vmatprep.subr.mxu0 0.0
  %1674 = vmatpush1.msra.mxu0 %v558
  %1675 = vmatprep.subr.mxu0 0.0
  %1676 = vmatpush1.msra.mxu0 %v559
  %1677 = vmatprep.subr.mxu0 0.0
  %1678 = vmatpush1.msra.mxu0 %v560
  %1679 = vmatprep.subr.mxu0 0.0
  %1680 = vmatpush1.msra.mxu0 %v561
  %1681 = vmatprep.subr.mxu0 0.0
  %1682 = vmatpush1.msra.mxu0 %v562
  %1683 = vmatprep.subr.mxu0 0.0
  %1684 = vmatpush1.msra.mxu0 %v563
  %1685 = vmatprep.mubr.f32.mxu0 %v51
  %1686 = vmatmul.mubr.f32.gmra.mrb[0].mxu0 %v50
  %v1687 = vpop.f32.mrb[0].mxu0
  %v1688 = vadd.f32 %v1618, %v1687
  %v1689 = vpop.f32.mrb[0].mxu0
  %1690 = vdwg.mxu0
  %v1691 = vmax.f32 %v1688, 0.0
  %v1692 = vld [vmem:[%s3] sm:$0xff]
  %v1693 = vld [vmem:[%s3 + $0x8] sm:$0xff]
  %v1694 = vld [vmem:[%s3 + $0x10] sm:$0xff]
  %v1695 = vld [vmem:[%s3 + $0x18] sm:$0xff]
  %v1696 = vld [vmem:[%s3 + $0x20] sm:$0xff]
  %v1697 = vld [vmem:[%s3 + $0x28] sm:$0xff]
  %v1698 = vld [vmem:[%s3 + $0x30] sm:$0xff]
  %v1699 = vld [vmem:[%s3 + $0x38] sm:$0xff]
  %v1700 = vld [vmem:[%s3 + $0x40] sm:$0xff]
  %v1701 = vld [vmem:[%s3 + $0x48] sm:$0xff]
  %v1702 = vld [vmem:[%s3 + $0x50] sm:$0xff]
  %v1703 = vld [vmem:[%s3 + $0x58] sm:$0xff]
  %v1704 = vld [vmem:[%s3 + $0x60] sm:$0xff]
  %v1705 = vld [vmem:[%s3 + $0x68] sm:$0xff]
  %v1706 = vld [vmem:[%s3 + $0x70] sm:$0xff]
  %v1707 = vld [vmem:[%s3 + $0x78] sm:$0xff]
  %v1708 = vld [vmem:[%s4] sm:$0x1]
  %v1710 = vlaneseq
  %v1711 = vshrl.u32 %v1710, 7
  %v1712 = vsub.s32 0, %v1711
  %v1713 = vrot.slane %v1708, %v1712
  %1715 = vmatprep.subr.mxu0 0.0
  %1716 = vmatpush1.msra.mxu0 %v1692
  %1717 = vmatprep.subr.mxu0 0.0
  %1718 = vmatpush1.msra.mxu0 %v1693
  %1719 = vmatprep.subr.mxu0 0.0
  %1720 = vmatpush1.msra.mxu0 %v1694
  %1721 = vmatprep.subr.mxu0 0.0
  %1722 = vmatpush1.msra.mxu0 %v1695
  %1723 = vmatprep.subr.mxu0 0.0
  %1724 = vmatpush1.msra.mxu0 %v1696
  %1725 = vmatprep.subr.mxu0 0.0
  %1726 = vmatpush1.msra.mxu0 %v1697
  %1727 = vmatprep.subr.mxu0 0.0
  %1728 = vmatpush1.msra.mxu0 %v1698
  %1729 = vmatprep.subr.mxu0 0.0
  %1730 = vmatpush1.msra.mxu0 %v1699
  %1731 = vmatprep.subr.mxu0 0.0
  %1732 = vmatpush1.msra.mxu0 %v1700
  %1733 = vmatprep.subr.mxu0 0.0
  %1734 = vmatpush1.msra.mxu0 %v1701
  %1735 = vmatprep.subr.mxu0 0.0
  %1736 = vmatpush1.msra.mxu0 %v1702
  %1737 = vmatprep.subr.mxu0 0.0
  %1738 = vmatpush1.msra.mxu0 %v1703
  %1739 = vmatprep.subr.mxu0 0.0
  %1740 = vmatpush1.msra.mxu0 %v1704
  %1741 = vmatprep.subr.mxu0 0.0
  %1742 = vmatpush1.msra.mxu0 %v1705
  %1743 = vmatprep.subr.mxu0 0.0
  %1744 = vmatpush1.msra.mxu0 %v1706
  %1745 = vmatprep.subr.mxu0 0.0
  %1746 = vmatpush1.msra.mxu0 %v1707
  %1747 = vmatprep.subr.mxu0 0.0
  %1748 = vmatpush1.msra.mxu0 0.0
  %1749 = vmatprep.subr.mxu0 0.0
  %1750 = vmatpush1.msra.mxu0 0.0
  %1751 = vmatprep.subr.mxu0 0.0
  %1752 = vmatpush1.msra.mxu0 0.0
  %1753 = vmatprep.subr.mxu0 0.0
  %1754 = vmatpush1.msra.mxu0 0.0
  %1755 = vmatprep.subr.mxu0 0.0
  %1756 = vmatpush1.msra.mxu0 0.0
  %1757 = vmatprep.subr.mxu0 0.0
  %1758 = vmatpush1.msra.mxu0 0.0
  %1759 = vmatprep.subr.mxu0 0.0
  %1760 = vmatpush1.msra.mxu0 0.0
  %1761 = vmatprep.subr.mxu0 0.0
  %1762 = vmatpush1.msra.mxu0 0.0
  %1763 = vmatprep.subr.mxu0 0.0
  %1764 = vmatpush1.msra.mxu0 0.0
  %1765 = vmatprep.subr.mxu0 0.0
  %1766 = vmatpush1.msra.mxu0 0.0
  %1767 = vmatprep.subr.mxu0 0.0
  %1768 = vmatpush1.msra.mxu0 0.0
  %1769 = vmatprep.subr.mxu0 0.0
  %1770 = vmatpush1.msra.mxu0 0.0
  %1771 = vmatprep.subr.mxu0 0.0
  %1772 = vmatpush1.msra.mxu0 0.0
  %1773 = vmatprep.subr.mxu0 0.0
  %1774 = vmatpush1.msra.mxu0 0.0
  %1775 = vmatprep.subr.mxu0 0.0
  %1776 = vmatpush1.msra.mxu0 0.0
  %1777 = vmatprep.subr.mxu0 0.0
  %1778 = vmatpush1.msra.mxu0 0.0
  %1779 = vmatprep.mubr.f32.mxu0 0.0
  %1780 = vmatmul.mubr.f32.gmra.mrb[0].mxu0 %v1691
  %v1781 = vpop.f32.mrb[0].mxu0
  %v1782 = vadd.f32 %v1713, %v1781
  %v1783 = vpop.f32.mrb[0].mxu0
  %1784 = vdwg.mxu0
  %1785 = vst [vmem:[%s5] sm:$0xff] %v1782
  // Predicated region
  $region22: #{simple_cnn_forward.5} parent=0 // pred_check
    _
  $region23: #{simple_cnn_forward.5} parent=0 // pred_check_branch
    %1787 = sbr.rel (0) target = $region25
  $region24: #{simple_cnn_forward.5} parent=0 // pred_region
    _
  $region25: #{simple_cnn_forward.5} parent=0 // pred_fallthru
    _
  // Predicated region
  $region26: #{simple_cnn_forward.5} parent=0 // pred_check
    _
  $region27: #{simple_cnn_forward.5} parent=0 // pred_check_branch
    %1789 = sbr.rel (0) target = $region29
  $region28: #{simple_cnn_forward.5} parent=0 // pred_region
    _
  $region29: #{simple_cnn_forward.5} parent=0 // pred_fallthru
    _

</llo_original>
